<compile_context>
chip_gen: v7x
topology: tpu7x:2x2x1
jax: 0.10.0
libtpu: 0.0.40
codegen_flags: <defaults>
</compile_context>

<pallas_src>
import functools

import jax
import jax.numpy as jnp
from jax.experimental import pallas as pl
from jax.experimental.pallas import tpu as pltpu


def _up_conv_kernel(xm_ref, xh_ref, w_ref, b_ref, o_ref, *, th, w_in, cin, cout):
    # xm_ref: (th,  W+2, Cin)      main rows of the zero-padded original-res input (bf16)
    # xh_ref: (2,   W+2, Cin)      2-row bottom halo (bf16)
    # w_ref : (2, 2, 4*Cin, Cout)  folded (upsample+conv+BN) weights per output parity (bf16)
    # b_ref : (Cout, 1)            folded bias (f32)
    # o_ref : (Cout, 2*th * 2*W)   flat NCHW output slab, spatial on lanes (f32)
    xt = jnp.concatenate([xm_ref[...], xh_ref[...]], axis=0)      # (th+2, W+2, Cin)

    rows = []
    for py in range(2):
        cols = []
        for px in range(2):
            # im2col for this output parity: 2x2 taps on the original-res tile.
            taps = [xt[py + ty:py + ty + th, px + tx:px + tx + w_in, :]
                    for ty in range(2) for tx in range(2)]
            p = jnp.concatenate(taps, axis=-1)                    # (th, W, 4*Cin) bf16
            p = p.reshape(th * w_in, 4 * cin)
            s = jnp.dot(p, w_ref[py, px],
                        preferred_element_type=jnp.float32)       # (th*W, Cout) f32
            cols.append(s.reshape(th, w_in, cout))
        # interleave the two column parities along W (lane dim Cout untouched)
        t = jnp.concatenate([cols[0][:, :, None, :], cols[1][:, :, None, :]], axis=2)
        rows.append(t.reshape(th, 2 * w_in, cout))
    # interleave the two row parities along H
    u = jnp.concatenate([rows[0][:, None, :, :], rows[1][:, None, :, :]], axis=1)
    u = u.reshape(2 * th, 2 * w_in, cout)

    # channel-major, lane-dense store: (2*th*2*W, Cout) -> (Cout, 2*th*2*W)
    y = u.reshape(2 * th * 2 * w_in, cout).T
    y = jnp.maximum(y + b_ref[...], 0.0)                          # bias(+BN) + ReLU, f32
    o_ref[...] = y.astype(o_ref.dtype)


@functools.partial(jax.jit, static_argnames=("eps", "tile_h", "compute_dtype"))
def up_conv_forward(x_nchw, weight, bias, gamma, beta, run_mean, run_var,
                    eps=1e-5, tile_h=None, compute_dtype=jnp.bfloat16):
    """x_nchw: (N, Cin, H, W) f32. Returns (N, Cout, 2H, 2W) f32 (PyTorch layout)."""
    N, Cin, H, W = x_nchw.shape
    Cout = weight.shape[0]
    H2, W2 = 2 * H, 2 * W
    K = 4 * Cin

    if tile_h is None:
        tile_h = H
        for th in range(2, H + 1, 2):
            if H % th == 0 and ((4 * th * W) % 128 == 0 or th == H):
                if 4 * th * W * Cout * 4 <= 4 * 1024 * 1024:      # ~4 MiB f32 out slab
                    tile_h = th
    # TODO(synk): odd H / odd tile_h would need 1-row halo BlockSpecs.
    assert H % 2 == 0 and tile_h % 2 == 0 and H % tile_h == 0, (H, tile_h)
    assert (4 * tile_h * W) % 128 == 0 or tile_h == H, (tile_h, W)

    # ---- fold BatchNorm (eval) + conv bias into the conv weights -----------
    # TODO(synk): PyTorch BatchNorm2d in train mode uses batch statistics;
    # this kernel implements the eval-mode (running-stats) forward.
    scale = gamma * jax.lax.rsqrt(run_var + eps)                  # (Cout,)
    w_f = weight * scale[:, None, None, None]                     # (Cout,Cin,3,3)
    b_f = bias * scale + (beta - run_mean * scale)                # (Cout,)

    # ---- fold the nearest-x2 upsample into 4 parity-specific 2x2 kernels ---
    # A[p, k, t]: sums 3x3-kernel row/col k into effective 2x2 row/col t for
    # output parity p (derived from u[y] = v[y // 2] with zero padding).
    A = jnp.array([[[1., 0.], [0., 1.], [0., 1.]],
                   [[1., 0.], [1., 0.], [0., 1.]]], dtype=w_f.dtype)
    weff = jnp.einsum("oikl,pkt,qlu->pqtuio", w_f, A, A)          # (2,2,2,2,Cin,Cout)
    w2d = weff.reshape(2, 2, K, Cout).astype(compute_dtype)
    b2 = b_f.reshape(Cout, 1).astype(jnp.float32)

    # ---- input: NCHW -> NHWC (small tensor), zero-pad spatially by 1 --------
    x = jnp.transpose(x_nchw, (0, 2, 3, 1))                       # (N, H, W, Cin)
    extra = (-(H + 2)) % tile_h        # round rows to a tile multiple (zeros, never read)
    xp = jnp.pad(x, ((0, 0), (1, 1 + extra), (1, 1), (0, 0))).astype(compute_dtype)

    n_tiles = H // tile_h
    out_cols = 2 * tile_h * W2
    kernel = functools.partial(_up_conv_kernel, th=tile_h, w_in=W, cin=Cin, cout=Cout)

    out_flat = pl.pallas_call(
        kernel,
        out_shape=jax.ShapeDtypeStruct((N, Cout, H2 * W2), jnp.float32),
        grid_spec=pltpu.PrefetchScalarGridSpec(
            num_scalar_prefetch=0,
            grid=(N, n_tiles),
            in_specs=[
                # main rows of this tile (padded rows i*th .. i*th+th-1)
                pl.BlockSpec((None, tile_h, W + 2, Cin), lambda b, i: (b, i, 0, 0)),
                # 2-row bottom halo (padded rows (i+1)*th .. (i+1)*th+1)
                pl.BlockSpec((None, 2, W + 2, Cin),
                             lambda b, i: (b, (i + 1) * (tile_h // 2), 0, 0)),
                pl.BlockSpec((2, 2, K, Cout), lambda b, i: (0, 0, 0, 0)),
                pl.BlockSpec((Cout, 1), lambda b, i: (0, 0)),
            ],
            out_specs=pl.BlockSpec((None, Cout, out_cols), lambda b, i: (b, 0, i)),
        ),
        compiler_params=pltpu.CompilerParams(
            dimension_semantics=("parallel", "parallel"),
            vmem_limit_bytes=32 * 1024 * 1024),
    )(xp, xp, w2d, b2)

    # free row-major bitcast: (N, Cout, 4HW) -> (N, Cout, 2H, 2W)
    return out_flat.reshape(N, Cout, H2, W2)


def _reference_up_conv(x, weight, bias, gamma, beta, mean, var, eps=1e-5):
    """Pure-JAX f32 reference matching the PyTorch module (eval-mode BN)."""
    xu = jnp.repeat(jnp.repeat(x, 2, axis=2), 2, axis=3)          # nearest x2
    y = jax.lax.conv_general_dilated(
        xu, weight, window_strides=(1, 1), padding=((1, 1), (1, 1)),
        dimension_numbers=("NCHW", "OIHW", "NCHW"))
    y = y + bias[None, :, None, None]
    scale = gamma * jax.lax.rsqrt(var + eps)
    shift = beta - mean * scale
    y = y * scale[None, :, None, None] + shift[None, :, None, None]
    return jnp.maximum(y, 0.0)


if __name__ == "__main__":
    # up_conv(ch_in=4, ch_out=8), x: (2, 4, 16, 16)
    N, Cin, Cout, H, W = 2, 4, 8, 16, 16
    key = jax.random.PRNGKey(0)
    kx, kw, kb = jax.random.split(key, 3)

    x = jax.random.normal(kx, (N, Cin, H, W), dtype=jnp.float32)
    weight = 0.1 * jax.random.normal(kw, (Cout, Cin, 3, 3), dtype=jnp.float32)
    bias = 0.05 * jax.random.normal(kb, (Cout,), dtype=jnp.float32)
    gamma = 1.0 + 0.1 * jnp.arange(Cout, dtype=jnp.float32)
    beta = 0.01 * jnp.arange(Cout, dtype=jnp.float32)
    run_mean = 0.02 * jnp.arange(Cout, dtype=jnp.float32)
    run_var = 1.0 + 0.05 * jnp.arange(Cout, dtype=jnp.float32)

    out = up_conv_forward(x, weight, bias, gamma, beta, run_mean, run_var, tile_h=8)
    out = jax.block_until_ready(out)
    assert out.shape == (N, Cout, 2 * H, 2 * W), out.shape

    ref = _reference_up_conv(x, weight, bias, gamma, beta, run_mean, run_var)
    err = float(jnp.max(jnp.abs(out - ref) / (jnp.abs(ref) + 1.0)))
    assert err < 5e-2, f"mismatch vs reference: {err}"
    print("KERNEL_OK")
</pallas_src>

<mosaic_0001>
module attributes {stable_mosaic.version = 11 : i64} {
  func.func @_up_conv_kernel(%arg0: i32, %arg1: i32, %arg2: memref<1x8x18x4xbf16, #tpu.memory_space<vmem>>, %arg3: memref<1x2x18x4xbf16, #tpu.memory_space<vmem>>, %arg4: memref<2x2x16x8xbf16, #tpu.memory_space<vmem>>, %arg5: memref<8x1xf32, #tpu.memory_space<vmem>>, %arg6: memref<1x8x512xf32, #tpu.memory_space<vmem>>) attributes {dimension_semantics = [#tpu.dimension_semantics<parallel>, #tpu.dimension_semantics<parallel>], iteration_bounds = array<i64: 2, 2>, scalar_prefetch = 0 : i64, scratch_operands = 0 : i64, tpu.core_type = #tpu.core_type<tc>, window_params = [{transform_indices = @transform_0, window_bounds = array<i64: 1, 8, 18, 4>}, {transform_indices = @transform_1, window_bounds = array<i64: 1, 2, 18, 4>}, {pipeline_mode = #tpu.pipeline_mode<synchronous>, transform_indices = @transform_2, window_bounds = array<i64: 2, 2, 16, 8>}, {pipeline_mode = #tpu.pipeline_mode<synchronous>, transform_indices = @transform_3, window_bounds = array<i64: 8, 1>}, {transform_indices = @transform_4, window_bounds = array<i64: 1, 8, 512>}]} {
    %c0 = arith.constant 0 : index
    %c0_0 = arith.constant 0 : index
    %c0_1 = arith.constant 0 : index
    %c0_2 = arith.constant 0 : index
    %0 = vector.load %arg2[%c0, %c0_0, %c0_1, %c0_2] : memref<1x8x18x4xbf16, #tpu.memory_space<vmem>>, vector<1x8x18x4xbf16>
    %1 = vector.shape_cast %0 : vector<1x8x18x4xbf16> to vector<8x18x4xbf16>
    %c0_3 = arith.constant 0 : index
    %c0_4 = arith.constant 0 : index
    %c0_5 = arith.constant 0 : index
    %c0_6 = arith.constant 0 : index
    %2 = vector.load %arg3[%c0_3, %c0_4, %c0_5, %c0_6] : memref<1x2x18x4xbf16, #tpu.memory_space<vmem>>, vector<1x2x18x4xbf16>
    %3 = vector.shape_cast %2 : vector<1x2x18x4xbf16> to vector<2x18x4xbf16>
    %4 = tpu.concatenate %1, %3 in 0 : vector<8x18x4xbf16>, vector<2x18x4xbf16> -> vector<10x18x4xbf16>
    %5 = vector.extract_strided_slice %4 {offsets = [0, 0, 0], sizes = [8, 16, 4], strides = [1, 1, 1]} : vector<10x18x4xbf16> to vector<8x16x4xbf16>
    %6 = vector.extract_strided_slice %4 {offsets = [0, 1, 0], sizes = [8, 16, 4], strides = [1, 1, 1]} : vector<10x18x4xbf16> to vector<8x16x4xbf16>
    %7 = vector.extract_strided_slice %4 {offsets = [1, 0, 0], sizes = [8, 16, 4], strides = [1, 1, 1]} : vector<10x18x4xbf16> to vector<8x16x4xbf16>
    %8 = vector.extract_strided_slice %4 {offsets = [1, 1, 0], sizes = [8, 16, 4], strides = [1, 1, 1]} : vector<10x18x4xbf16> to vector<8x16x4xbf16>
    %9 = tpu.concatenate %5, %6, %7, %8 in 2 : vector<8x16x4xbf16>, vector<8x16x4xbf16>, vector<8x16x4xbf16>, vector<8x16x4xbf16> -> vector<8x16x16xbf16>
    %10 = vector.shape_cast %9 : vector<8x16x16xbf16> to vector<128x16xbf16>
    %c0_7 = arith.constant 0 : index
    %c0_8 = arith.constant 0 : index
    %c0_9 = arith.constant 0 : index
    %c0_10 = arith.constant 0 : index
    %11 = vector.load %arg4[%c0_7, %c0_8, %c0_9, %c0_10] : memref<2x2x16x8xbf16, #tpu.memory_space<vmem>>, vector<1x1x16x8xbf16>
    %12 = vector.shape_cast %11 : vector<1x1x16x8xbf16> to vector<16x8xbf16>
    %cst = arith.constant dense<0.000000e+00> : vector<128x8xf32>
    %13 = tpu.matmul %10, %12, %cst {dimension_numbers = #tpu.dot_dimension_numbers<[1], [0], [0], [1], [0, 0, 1, 1], [], []>} : vector<128x16xbf16>, vector<16x8xbf16>, vector<128x8xf32> -> vector<128x8xf32>
    %14 = vector.shape_cast %13 : vector<128x8xf32> to vector<8x16x8xf32>
    %15 = vector.extract_strided_slice %4 {offsets = [0, 1, 0], sizes = [8, 16, 4], strides = [1, 1, 1]} : vector<10x18x4xbf16> to vector<8x16x4xbf16>
    %16 = vector.extract_strided_slice %4 {offsets = [0, 2, 0], sizes = [8, 16, 4], strides = [1, 1, 1]} : vector<10x18x4xbf16> to vector<8x16x4xbf16>
    %17 = vector.extract_strided_slice %4 {offsets = [1, 1, 0], sizes = [8, 16, 4], strides = [1, 1, 1]} : vector<10x18x4xbf16> to vector<8x16x4xbf16>
    %18 = vector.extract_strided_slice %4 {offsets = [1, 2, 0], sizes = [8, 16, 4], strides = [1, 1, 1]} : vector<10x18x4xbf16> to vector<8x16x4xbf16>
    %19 = tpu.concatenate %15, %16, %17, %18 in 2 : vector<8x16x4xbf16>, vector<8x16x4xbf16>, vector<8x16x4xbf16>, vector<8x16x4xbf16> -> vector<8x16x16xbf16>
    %20 = vector.shape_cast %19 : vector<8x16x16xbf16> to vector<128x16xbf16>
    %c0_11 = arith.constant 0 : index
    %c1 = arith.constant 1 : index
    %c0_12 = arith.constant 0 : index
    %c0_13 = arith.constant 0 : index
    %21 = vector.load %arg4[%c0_11, %c1, %c0_12, %c0_13] : memref<2x2x16x8xbf16, #tpu.memory_space<vmem>>, vector<1x1x16x8xbf16>
    %22 = vector.shape_cast %21 : vector<1x1x16x8xbf16> to vector<16x8xbf16>
    %cst_14 = arith.constant dense<0.000000e+00> : vector<128x8xf32>
    %23 = tpu.matmul %20, %22, %cst_14 {dimension_numbers = #tpu.dot_dimension_numbers<[1], [0], [0], [1], [0, 0, 1, 1], [], []>} : vector<128x16xbf16>, vector<16x8xbf16>, vector<128x8xf32> -> vector<128x8xf32>
    %24 = vector.shape_cast %23 : vector<128x8xf32> to vector<8x16x8xf32>
    %25 = vector.shape_cast %14 : vector<8x16x8xf32> to vector<8x16x1x8xf32>
    %26 = vector.shape_cast %24 : vector<8x16x8xf32> to vector<8x16x1x8xf32>
    %27 = tpu.concatenate %25, %26 in 2 : vector<8x16x1x8xf32>, vector<8x16x1x8xf32> -> vector<8x16x2x8xf32>
    %28 = vector.shape_cast %27 : vector<8x16x2x8xf32> to vector<8x32x8xf32>
    %29 = vector.extract_strided_slice %4 {offsets = [1, 0, 0], sizes = [8, 16, 4], strides = [1, 1, 1]} : vector<10x18x4xbf16> to vector<8x16x4xbf16>
    %30 = vector.extract_strided_slice %4 {offsets = [1, 1, 0], sizes = [8, 16, 4], strides = [1, 1, 1]} : vector<10x18x4xbf16> to vector<8x16x4xbf16>
    %31 = vector.extract_strided_slice %4 {offsets = [2, 0, 0], sizes = [8, 16, 4], strides = [1, 1, 1]} : vector<10x18x4xbf16> to vector<8x16x4xbf16>
    %32 = vector.extract_strided_slice %4 {offsets = [2, 1, 0], sizes = [8, 16, 4], strides = [1, 1, 1]} : vector<10x18x4xbf16> to vector<8x16x4xbf16>
    %33 = tpu.concatenate %29, %30, %31, %32 in 2 : vector<8x16x4xbf16>, vector<8x16x4xbf16>, vector<8x16x4xbf16>, vector<8x16x4xbf16> -> vector<8x16x16xbf16>
    %34 = vector.shape_cast %33 : vector<8x16x16xbf16> to vector<128x16xbf16>
    %c1_15 = arith.constant 1 : index
    %c0_16 = arith.constant 0 : index
    %c0_17 = arith.constant 0 : index
    %c0_18 = arith.constant 0 : index
    %35 = vector.load %arg4[%c1_15, %c0_16, %c0_17, %c0_18] : memref<2x2x16x8xbf16, #tpu.memory_space<vmem>>, vector<1x1x16x8xbf16>
    %36 = vector.shape_cast %35 : vector<1x1x16x8xbf16> to vector<16x8xbf16>
    %cst_19 = arith.constant dense<0.000000e+00> : vector<128x8xf32>
    %37 = tpu.matmul %34, %36, %cst_19 {dimension_numbers = #tpu.dot_dimension_numbers<[1], [0], [0], [1], [0, 0, 1, 1], [], []>} : vector<128x16xbf16>, vector<16x8xbf16>, vector<128x8xf32> -> vector<128x8xf32>
    %38 = vector.shape_cast %37 : vector<128x8xf32> to vector<8x16x8xf32>
    %39 = vector.extract_strided_slice %4 {offsets = [1, 1, 0], sizes = [8, 16, 4], strides = [1, 1, 1]} : vector<10x18x4xbf16> to vector<8x16x4xbf16>
    %40 = vector.extract_strided_slice %4 {offsets = [1, 2, 0], sizes = [8, 16, 4], strides = [1, 1, 1]} : vector<10x18x4xbf16> to vector<8x16x4xbf16>
    %41 = vector.extract_strided_slice %4 {offsets = [2, 1, 0], sizes = [8, 16, 4], strides = [1, 1, 1]} : vector<10x18x4xbf16> to vector<8x16x4xbf16>
    %42 = vector.extract_strided_slice %4 {offsets = [2, 2, 0], sizes = [8, 16, 4], strides = [1, 1, 1]} : vector<10x18x4xbf16> to vector<8x16x4xbf16>
    %43 = tpu.concatenate %39, %40, %41, %42 in 2 : vector<8x16x4xbf16>, vector<8x16x4xbf16>, vector<8x16x4xbf16>, vector<8x16x4xbf16> -> vector<8x16x16xbf16>
    %44 = vector.shape_cast %43 : vector<8x16x16xbf16> to vector<128x16xbf16>
    %c1_20 = arith.constant 1 : index
    %c1_21 = arith.constant 1 : index
    %c0_22 = arith.constant 0 : index
    %c0_23 = arith.constant 0 : index
    %45 = vector.load %arg4[%c1_20, %c1_21, %c0_22, %c0_23] : memref<2x2x16x8xbf16, #tpu.memory_space<vmem>>, vector<1x1x16x8xbf16>
    %46 = vector.shape_cast %45 : vector<1x1x16x8xbf16> to vector<16x8xbf16>
    %cst_24 = arith.constant dense<0.000000e+00> : vector<128x8xf32>
    %47 = tpu.matmul %44, %46, %cst_24 {dimension_numbers = #tpu.dot_dimension_numbers<[1], [0], [0], [1], [0, 0, 1, 1], [], []>} : vector<128x16xbf16>, vector<16x8xbf16>, vector<128x8xf32> -> vector<128x8xf32>
    %48 = vector.shape_cast %47 : vector<128x8xf32> to vector<8x16x8xf32>
    %49 = vector.shape_cast %38 : vector<8x16x8xf32> to vector<8x16x1x8xf32>
    %50 = vector.shape_cast %48 : vector<8x16x8xf32> to vector<8x16x1x8xf32>
    %51 = tpu.concatenate %49, %50 in 2 : vector<8x16x1x8xf32>, vector<8x16x1x8xf32> -> vector<8x16x2x8xf32>
    %52 = vector.shape_cast %51 : vector<8x16x2x8xf32> to vector<8x32x8xf32>
    %53 = vector.shape_cast %28 : vector<8x32x8xf32> to vector<8x1x32x8xf32>
    %54 = vector.shape_cast %52 : vector<8x32x8xf32> to vector<8x1x32x8xf32>
    %55 = tpu.concatenate %53, %54 in 1 : vector<8x1x32x8xf32>, vector<8x1x32x8xf32> -> vector<8x2x32x8xf32>
    %56 = vector.shape_cast %55 : vector<8x2x32x8xf32> to vector<16x32x8xf32>
    %57 = vector.shape_cast %56 : vector<16x32x8xf32> to vector<512x8xf32>
    %58 = tpu.transpose %57, [1, 0] : vector<512x8xf32> -> vector<8x512xf32>
    %c0_25 = arith.constant 0 : index
    %c0_26 = arith.constant 0 : index
    %59 = vector.load %arg5[%c0_25, %c0_26] : memref<8x1xf32, #tpu.memory_space<vmem>>, vector<8x1xf32>
    %60 = vector.broadcast %59 : vector<8x1xf32> to vector<8x512xf32>
    %61 = arith.addf %58, %60 : vector<8x512xf32>
    %cst_27 = arith.constant 0.000000e+00 : f32
    %62 = vector.broadcast %cst_27 : f32 to vector<8x512xf32>
    %63 = arith.maximumf %61, %62 : vector<8x512xf32>
    %c0_28 = arith.constant 0 : index
    %c0_29 = arith.constant 0 : index
    %c0_30 = arith.constant 0 : index
    %64 = vector.load %arg6[%c0_28, %c0_29, %c0_30] : memref<1x8x512xf32, #tpu.memory_space<vmem>>, vector<1x8x512xf32>
    %65 = vector.shape_cast %64 : vector<1x8x512xf32> to vector<8x512xf32>
    %66 = vector.shape_cast %63 : vector<8x512xf32> to vector<1x8x512xf32>
    tpu.vector_store %arg6[%c0_28, %c0_29, %c0_30], %66 {strides = array<i32>} : memref<1x8x512xf32, #tpu.memory_space<vmem>>, vector<1x8x512xf32>,
    return
  }
  func.func @transform_0(%arg0: i32, %arg1: i32) -> (i32, i32, i32, i32) {
    %c0_i32 = arith.constant 0 : i32
    %c0_i32_0 = arith.constant 0 : i32
    %c0_i32_1 = arith.constant 0 : i32
    return %arg0, %arg1, %c0_i32, %c0_i32_0 : i32, i32, i32, i32
  }
  func.func @transform_1(%arg0: i32, %arg1: i32) -> (i32, i32, i32, i32) {
    %c1_i32 = arith.constant 1 : i32
    %0 = arith.addi %arg1, %c1_i32 : i32
    %c4_i32 = arith.constant 4 : i32
    %1 = arith.muli %0, %c4_i32 : i32
    %c0_i32 = arith.constant 0 : i32
    %c0_i32_0 = arith.constant 0 : i32
    %c0_i32_1 = arith.constant 0 : i32
    return %arg0, %1, %c0_i32, %c0_i32_0 : i32, i32, i32, i32
  }
  func.func @transform_2(%arg0: i32, %arg1: i32) -> (i32, i32, i32, i32) {
    %c0_i32 = arith.constant 0 : i32
    %c0_i32_0 = arith.constant 0 : i32
    %c0_i32_1 = arith.constant 0 : i32
    %c0_i32_2 = arith.constant 0 : i32
    %c0_i32_3 = arith.constant 0 : i32
    return %c0_i32, %c0_i32_0, %c0_i32_1, %c0_i32_2 : i32, i32, i32, i32
  }
  func.func @transform_3(%arg0: i32, %arg1: i32) -> (i32, i32) {
    %c0_i32 = arith.constant 0 : i32
    %c0_i32_0 = arith.constant 0 : i32
    %c0_i32_1 = arith.constant 0 : i32
    return %c0_i32, %c0_i32_0 : i32, i32
  }
  func.func @transform_4(%arg0: i32, %arg1: i32) -> (i32, i32, i32) {
    %c0_i32 = arith.constant 0 : i32
    %c0_i32_0 = arith.constant 0 : i32
    return %arg0, %c0_i32, %arg1 : i32, i32, i32
  }
}

</mosaic_0001>

<llo_original>
// kernel: up_conv_forward.1
$region0: #{up_conv_forward.1}
  #allocation0 [shape = 'u32[]', space=smem, size = 0x4, offset = 0x4, fixed_abs, tag = 'smem constant byte address 0x4 - core index']
  #allocation1 [shape = 'u32[144,128]{1,0:T(1,128)}', space=vmem, size = 0x12000, scoped, tag = 'internal scratch']
  %s0 = inlined_call_operand.vmem [shape: bf16[2,24,18,4], index: 0, kind: input, shape index: {}, may-alias: {0,1}]
  %s1 = inlined_call_operand.vmem [shape: bf16[2,24,18,4], index: 1, kind: input, shape index: {}, may-alias: {0,1}]
  %s2 = inlined_call_operand.vmem [shape: bf16[2,2,16,8], index: 2, kind: input, shape index: {}]
  %s3 = inlined_call_operand.vmem [shape: f32[8,1], index: 3, kind: input, shape index: {}]
  %s4 = inlined_call_operand.vmem [shape: f32[2,8,1024], index: 4, kind: output, shape index: {}]
  %s5 = sld [smem:[#allocation0]]
  $region49: #{up_conv_forward.1} parent=0
    _
  %s7 = ssub.s32 1, %s5
  %s8 = scalar_select 0, %s7, %s5
  loop: start=0, step=1, limit=6
  $region2: #{up_conv_forward.1} parent=0 // loop_pre_header
    _
  $region3: #{up_conv_forward.1} parent=0 // loop_header
    %s10 = sphi 0, %s14
    %p11 = scmp.ge.s32.totalorder %s10, 6
    %s17 = sphi 0, %s29
    %s18 = sphi 0, %s25
    %s19 = sphi 0, %s17
    %s20 = sphi 0, %s18
    %s21 = sphi 0, %s19
    %s22 = sphi 0, %s20
    %s34 = sphi 0, %s36
    %s37 = sphi 0, %s34
    %s38 = sphi 0, %s37
    %s54 = sphi 0, %s38
    %s66 = sphi 0, %s68
    %s69 = sphi 0, %s66
    %s70 = sphi 0, %s69
    %s86 = sphi 0, %s70
    %s90 = sphi 0, %s90
    %s92 = sphi 0, %s90
    %s93 = sphi 0, %s92
    %s107 = sphi 0, %s93
    %s111 = sphi 0, %s111
    %s113 = sphi 0, %s111
    %s114 = sphi 0, %s113
    %s128 = sphi 0, %s114
    %s136 = sphi 0, %s138
    %s139 = sphi 0, %s136
    %s140 = sphi 0, %s139
    %s156 = sphi 0, %s140
  $region4: #{up_conv_forward.1} parent=0 // loop_header_branch
    %13 = sbr.rel (%p11) target = $region8
  $region5: #{up_conv_forward.1} parent=0 // loop_body
    %s15 = ssub.s32 %s10, 1
    %s16 = ssub.s32 %s10, 2
    %s23 = sadd.s32 1, %s18
    %p24 = scmp.ge.s32.totalorder %s23, 2
    %s25 = scalar_select %p24, 0, %s23
    %s26 = sadd.s32 1, %s17
    %s27 = scalar_select %p24, %s26, %s17
    %p28 = scmp.ge.s32.totalorder %s27, 2
    %s29 = scalar_select %p28, 0, %s27
    %s30 = ssub.s32 %s17, %s29
    %s31 = ssub.s32 %s18, %s25
    %s32 = sor.u32 %s30, %s31
    %p33 = scmp.eq.s32.totalorder %s32, 0
    %s35 = sadd.s32 %s34, 1
    %s36 = scalar_select %p33, %s34, %s35
    %p39 = pneg %p33
    %p40 = scmp.eq.s32.totalorder %s10, 3
    %p41 = por %p39, %p40
    %p42 = scmp.ne.s32.totalorder %s34, %s37
    %p43 = scmp.eq.s32.totalorder %s10, 0
    %p44 = por %p42, %p43
    %p45 = scmp.ne.s32.totalorder %s34, %s37
    %p46 = scmp.eq.s32.totalorder %s15, 3
    %p47 = por %p45, %p46
    %p48 = scmp.ne.s32.totalorder %s37, %s38
    %p49 = scmp.eq.s32.totalorder %s15, 0
    %p50 = por %p48, %p49
    %p51 = scmp.ne.s32.totalorder %s37, %s38
    %p52 = scmp.eq.s32.totalorder %s16, 3
    %p53 = por %p51, %p52
    %p55 = scmp.ne.s32.totalorder %s38, %s54
    %p56 = scmp.eq.s32.totalorder %s16, 0
    %p57 = por %p55, %p56
    %s58 = sadd.s32 %s18, 1
    %s59 = smul.u32 %s58, 4
    %s60 = sadd.s32 %s25, 1
    %s61 = smul.u32 %s60, 4
    %s62 = ssub.s32 %s17, %s29
    %s63 = ssub.s32 %s59, %s61
    %s64 = sor.u32 %s62, %s63
    %p65 = scmp.eq.s32.totalorder %s64, 0
    %s67 = sadd.s32 %s66, 1
    %s68 = scalar_select %p65, %s66, %s67
    %p71 = pneg %p65
    %p72 = scmp.eq.s32.totalorder %s10, 3
    %p73 = por %p71, %p72
    %p74 = scmp.ne.s32.totalorder %s66, %s69
    %p75 = scmp.eq.s32.totalorder %s10, 0
    %p76 = por %p74, %p75
    %p77 = scmp.ne.s32.totalorder %s66, %s69
    %p78 = scmp.eq.s32.totalorder %s15, 3
    %p79 = por %p77, %p78
    %p80 = scmp.ne.s32.totalorder %s69, %s70
    %p81 = scmp.eq.s32.totalorder %s15, 0
    %p82 = por %p80, %p81
    %p83 = scmp.ne.s32.totalorder %s69, %s70
    %p84 = scmp.eq.s32.totalorder %s16, 3
    %p85 = por %p83, %p84
    %p87 = scmp.ne.s32.totalorder %s70, %s86
    %p88 = scmp.eq.s32.totalorder %s16, 0
    %p89 = por %p87, %p88
    %s91 = sadd.s32 %s90, 1
    %p94 = scmp.eq.s32.totalorder %s10, 3
    %p95 = scmp.ne.s32.totalorder %s90, %s92
    %p96 = scmp.eq.s32.totalorder %s10, 0
    %p97 = por %p95, %p96
    %p98 = scmp.ne.s32.totalorder %s90, %s92
    %p99 = scmp.eq.s32.totalorder %s15, 3
    %p100 = por %p98, %p99
    %p101 = scmp.ne.s32.totalorder %s92, %s93
    %p102 = scmp.eq.s32.totalorder %s15, 0
    %p103 = por %p101, %p102
    %p104 = scmp.ne.s32.totalorder %s92, %s93
    %p105 = scmp.eq.s32.totalorder %s16, 3
    %p106 = por %p104, %p105
    %p108 = scmp.ne.s32.totalorder %s93, %s107
    %p109 = scmp.eq.s32.totalorder %s16, 0
    %p110 = por %p108, %p109
    %s112 = sadd.s32 %s111, 1
    %p115 = scmp.eq.s32.totalorder %s10, 3
    %p116 = scmp.ne.s32.totalorder %s111, %s113
    %p117 = scmp.eq.s32.totalorder %s10, 0
    %p118 = por %p116, %p117
    %p119 = scmp.ne.s32.totalorder %s111, %s113
    %p120 = scmp.eq.s32.totalorder %s15, 3
    %p121 = por %p119, %p120
    %p122 = scmp.ne.s32.totalorder %s113, %s114
    %p123 = scmp.eq.s32.totalorder %s15, 0
    %p124 = por %p122, %p123
    %p125 = scmp.ne.s32.totalorder %s113, %s114
    %p126 = scmp.eq.s32.totalorder %s16, 3
    %p127 = por %p125, %p126
    %p129 = scmp.ne.s32.totalorder %s114, %s128
    %p130 = scmp.eq.s32.totalorder %s16, 0
    %p131 = por %p129, %p130
    %s132 = ssub.s32 %s17, %s29
    %s133 = ssub.s32 %s18, %s25
    %s134 = sor.u32 %s132, %s133
    %p135 = scmp.eq.s32.totalorder %s134, 0
    %s137 = sadd.s32 %s136, 1
    %s138 = scalar_select %p135, %s136, %s137
    %p141 = pneg %p135
    %p142 = scmp.eq.s32.totalorder %s10, 3
    %p143 = por %p141, %p142
    %p144 = scmp.ne.s32.totalorder %s136, %s139
    %p145 = scmp.eq.s32.totalorder %s10, 0
    %p146 = por %p144, %p145
    %p147 = scmp.ne.s32.totalorder %s136, %s139
    %p148 = scmp.eq.s32.totalorder %s15, 3
    %p149 = por %p147, %p148
    %p150 = scmp.ne.s32.totalorder %s139, %s140
    %p151 = scmp.eq.s32.totalorder %s15, 0
    %p152 = por %p150, %p151
    %p153 = scmp.ne.s32.totalorder %s139, %s140
    %p154 = scmp.eq.s32.totalorder %s16, 3
    %p155 = por %p153, %p154
    %p157 = scmp.ne.s32.totalorder %s140, %s156
    %p158 = scmp.eq.s32.totalorder %s16, 0
    %p159 = por %p157, %p158
    %p160 = scmp.le.s32.totalorder 1, %s10
    %p161 = scmp.lt.s32.totalorder %s10, 5
    %p162 = pnand %p160, %p161
    %p163 = pneg %p162
    // Predicated region
    $region9: #{up_conv_forward.1} parent=5 // pred_check
      _
    $region10: #{up_conv_forward.1} parent=5 // pred_check_branch
      %165 = sbr.rel (%p162) target = $region12
    $region11: #{up_conv_forward.1} parent=5 // pred_region
      %s166 = ssub.s32 %s10, 1
      // Predicated region
      $region13: #{up_conv_forward.1} parent=11 // pred_check
        %p167 = pneg %p103
      $region14: #{up_conv_forward.1} parent=11 // pred_check_branch
        %169 = sbr.rel (%p167) target = $region16
      $region15: #{up_conv_forward.1} parent=11 // pred_region
        _
      $region16: #{up_conv_forward.1} parent=11 // pred_fallthru
        _
      // Predicated region
      $region17: #{up_conv_forward.1} parent=11 // pred_check
        %p170 = pneg %p124
      $region18: #{up_conv_forward.1} parent=11 // pred_check_branch
        %172 = sbr.rel (%p170) target = $region20
      $region19: #{up_conv_forward.1} parent=11 // pred_region
        _
      $region20: #{up_conv_forward.1} parent=11 // pred_fallthru
        _
    $region12: #{up_conv_forward.1} parent=5 // pred_fallthru
      _
    %p173 = scmp.lt.s32.totalorder %s10, 4
    // Predicated region
    $region21: #{up_conv_forward.1} parent=5 // pred_check
      %p174 = pneg %p173
    $region22: #{up_conv_forward.1} parent=5 // pred_check_branch
      %176 = sbr.rel (%p174) target = $region24
    $region23: #{up_conv_forward.1} parent=5 // pred_region
      // Predicated region
      $region25: #{up_conv_forward.1} parent=23 // pred_check
        %p177 = pneg %p44
      $region26: #{up_conv_forward.1} parent=23 // pred_check_branch
        %179 = sbr.rel (%p177) target = $region28
      $region27: #{up_conv_forward.1} parent=23 // pred_region
        %s180 = smul.u32 8, %s18
        %p181 = scmp.lt.s32.totalorder %s17, 1
        %s182 = scalar_select %p181, %s17, 1
        %p183 = scmp.lt.s32.totalorder %s180, 23
        %s184 = scalar_select %p183, %s180, 23
        %s185 = smul.addr %s184, 3
        %s186 = smul.addr %s182, 72
        %s187 = sadd.s32 %s185, %s186
        %s188 = smul.addr %s187, 4
        %s189 = scalar_lea.vmem %s0, %s188
        %s190 = smul.u32 8, %s18
      $region28: #{up_conv_forward.1} parent=23 // pred_fallthru
        _
      // Predicated region
      $region29: #{up_conv_forward.1} parent=23 // pred_check
        %p191 = pneg %p76
      $region30: #{up_conv_forward.1} parent=23 // pred_check_branch
        %193 = sbr.rel (%p191) target = $region32
      $region31: #{up_conv_forward.1} parent=23 // pred_region
        %s194 = sadd.s32 %s18, 1
        %s195 = smul.u32 %s194, 4
        %s196 = smul.u32 2, %s195
        %p197 = scmp.lt.s32.totalorder %s17, 1
        %s198 = scalar_select %p197, %s17, 1
        %p199 = scmp.lt.s32.totalorder %s196, 23
        %s200 = scalar_select %p199, %s196, 23
        %s201 = smul.addr %s200, 3
        %s202 = smul.addr %s198, 72
        %s203 = sadd.s32 %s201, %s202
        %s204 = smul.addr %s203, 4
        %s205 = scalar_lea.vmem %s1, %s204
        %s206 = sadd.s32 %s18, 1
        %s207 = smul.u32 %s206, 4
        %s208 = smul.u32 2, %s207
      $region32: #{up_conv_forward.1} parent=23 // pred_fallthru
        _
    $region24: #{up_conv_forward.1} parent=5 // pred_fallthru
      _
    %p209 = scmp.le.s32.totalorder 1, %s10
    %p210 = scmp.lt.s32.totalorder %s10, 5
    %p211 = pnand %p209, %p210
    %p212 = pneg %p211
    // Predicated region
    $region33: #{up_conv_forward.1} parent=5 // pred_check
      _
    $region34: #{up_conv_forward.1} parent=5 // pred_check_branch
      %214 = sbr.rel (%p211) target = $region36
    $region35: #{up_conv_forward.1} parent=5 // pred_region
      %s215 = ssub.s32 %s10, 1
      %s216 = smul.u32 8, %s20
      %p217 = scmp.lt.s32.totalorder %s19, 1
      %s218 = scalar_select %p217, %s19, 1
      %p219 = scmp.lt.s32.totalorder %s216, 23
      %s220 = scalar_select %p219, %s216, 23
      %s221 = smul.addr %s220, 3
      %s222 = smul.addr %s218, 72
      %s223 = sadd.s32 %s221, %s222
      %s224 = smul.addr %s223, 4
      %s225 = scalar_lea.vmem %s0, %s224
      %p226 = pneg %p50
      %p227 = pneg %p47
      %s228 = sadd.s32 %s20, 1
      %s229 = smul.u32 %s228, 4
      %s230 = smul.u32 2, %s229
      %p231 = scmp.lt.s32.totalorder %s19, 1
      %s232 = scalar_select %p231, %s19, 1
      %p233 = scmp.lt.s32.totalorder %s230, 23
      %s234 = scalar_select %p233, %s230, 23
      %s235 = smul.addr %s234, 3
      %s236 = smul.addr %s232, 72
      %s237 = sadd.s32 %s235, %s236
      %s238 = smul.addr %s237, 4
      %s239 = scalar_lea.vmem %s1, %s238
      %p240 = pneg %p82
      %p241 = pneg %p79
      %p242 = pneg %p103
      %p243 = pneg %p100
      %p244 = pneg %p124
      %p245 = pneg %p121
      %p246 = pneg %p152
      %p247 = pneg %p149
      %s248 = smul.u32 4, %s20
      %p249 = scmp.lt.s32.totalorder %s19, 1
      %s250 = scalar_select %p249, %s19, 1
      %p251 = scmp.lt.s32.totalorder %s248, 7
      %s252 = scalar_select %p251, %s248, 7
      %s253 = smul.addr %s250, 8
      %s254 = sadd.s32 %s252, %s253
      %s255 = smul.addr %s254, 8
      %s256 = scalar_lea.vmem %s4, %s255
      %s257 = smul.u32 8, %s20
      %p258 = scmp.lt.s32.totalorder %s19, 1
      %s259 = scalar_select %p258, %s19, 1
      %p260 = scmp.lt.s32.totalorder %s257, 23
      %s261 = scalar_select %p260, %s257, 23
      %s262 = smul.addr %s261, 3
      %s263 = smul.addr %s259, 72
      %s264 = sadd.s32 %s262, %s263
      %s265 = smul.addr %s264, 4
      %s266 = scalar_lea.vmem %s0, %s265
      %s267 = smul.u32 8, %s20
      %s268 = sadd.s32 %s20, 1
      %s269 = smul.u32 %s268, 4
      %s270 = smul.u32 2, %s269
      %p271 = scmp.lt.s32.totalorder %s19, 1
      %s272 = scalar_select %p271, %s19, 1
      %p273 = scmp.lt.s32.totalorder %s270, 23
      %s274 = scalar_select %p273, %s270, 23
      %s275 = smul.addr %s274, 3
      %s276 = smul.addr %s272, 72
      %s277 = sadd.s32 %s275, %s276
      %s278 = smul.addr %s277, 4
      %s279 = scalar_lea.vmem %s1, %s278
      %s280 = sadd.s32 %s20, 1
      %s281 = smul.u32 %s280, 4
      %s282 = smul.u32 2, %s281
      %s283 = smul.u32 4, %s20
      %p284 = scmp.lt.s32.totalorder %s19, 1
      %s285 = scalar_select %p284, %s19, 1
      %p286 = scmp.lt.s32.totalorder %s283, 7
      %s287 = scalar_select %p286, %s283, 7
      %s288 = smul.addr %s285, 8
      %s289 = sadd.s32 %s287, %s288
      %s290 = smul.addr %s289, 8
      %s291 = scalar_lea.vmem %s4, %s290
      %s292 = smul.u32 4, %s20
      %v294 = vld [vmem:[%s266] sm:$0xf]
      %v295 = vld [vmem:[%s266 + $0x4] sm:$0xf]
      %v296 = vld [vmem:[%s266 + $0x8] sm:$0x1]
      %v297 = vld [vmem:[%s266 + $0xc] sm:$0xf]
      %v298 = vld [vmem:[%s266 + $0x10] sm:$0xf]
      %v299 = vld [vmem:[%s266 + $0x14] sm:$0x1]
      %v300 = vld [vmem:[%s266 + $0x18] sm:$0xf]
      %v301 = vld [vmem:[%s266 + $0x1c] sm:$0xf]
      %v302 = vld [vmem:[%s266 + $0x20] sm:$0x1]
      %v303 = vld [vmem:[%s266 + $0x24] sm:$0xf]
      %v304 = vld [vmem:[%s266 + $0x28] sm:$0xf]
      %v305 = vld [vmem:[%s266 + $0x2c] sm:$0x1]
      %v306 = vld [vmem:[%s266 + $0x30] sm:$0xf]
      %v307 = vld [vmem:[%s266 + $0x34] sm:$0xf]
      %v308 = vld [vmem:[%s266 + $0x38] sm:$0x1]
      %v309 = vld [vmem:[%s266 + $0x3c] sm:$0xf]
      %v310 = vld [vmem:[%s266 + $0x40] sm:$0xf]
      %v311 = vld [vmem:[%s266 + $0x44] sm:$0x1]
      %v312 = vld [vmem:[%s266 + $0x48] sm:$0xf]
      %v313 = vld [vmem:[%s266 + $0x4c] sm:$0xf]
      %v314 = vld [vmem:[%s266 + $0x50] sm:$0x1]
      %v315 = vld [vmem:[%s266 + $0x54] sm:$0xf]
      %v316 = vld [vmem:[%s266 + $0x58] sm:$0xf]
      %v317 = vld [vmem:[%s266 + $0x5c] sm:$0x1]
      %v318 = vld [vmem:[%s279] sm:$0xf]
      %v319 = vld [vmem:[%s279 + $0x4] sm:$0xf]
      %v320 = vld [vmem:[%s279 + $0x8] sm:$0x1]
      %v321 = vld [vmem:[%s279 + $0xc] sm:$0xf]
      %v322 = vld [vmem:[%s279 + $0x10] sm:$0xf]
      %v323 = vld [vmem:[%s279 + $0x14] sm:$0x1]
      %v340 = vunpack.c.l.b16 %v294
      %v341 = vunpack.c.l.b16 %v295
      %v342 = vunpack.c.l.b16 %v297
      %v343 = vunpack.c.l.b16 %v298
      %v344 = vunpack.c.l.b16 %v300
      %v345 = vunpack.c.l.b16 %v301
      %v346 = vunpack.c.l.b16 %v303
      %v347 = vunpack.c.l.b16 %v304
      %v348 = vunpack.c.l.b16 %v306
      %v349 = vunpack.c.l.b16 %v307
      %v350 = vunpack.c.l.b16 %v309
      %v351 = vunpack.c.l.b16 %v310
      %v352 = vunpack.c.l.b16 %v312
      %v353 = vunpack.c.l.b16 %v313
      %v354 = vunpack.c.l.b16 %v315
      %v355 = vunpack.c.l.b16 %v316
      %v356 = vpack.c.b16 %v341, %v340
      %v357 = vpack.c.b16 %v343, %v342
      %v358 = vpack.c.b16 %v345, %v344
      %v359 = vpack.c.b16 %v347, %v346
      %v360 = vpack.c.b16 %v349, %v348
      %v361 = vpack.c.b16 %v351, %v350
      %v362 = vpack.c.b16 %v353, %v352
      %v363 = vpack.c.b16 %v355, %v354
      %v372 = vunpack.c.l.b16 %v296
      %v373 = vunpack.c.l.b16 %v299
      %v374 = vunpack.c.l.b16 %v302
      %v375 = vunpack.c.l.b16 %v305
      %v376 = vunpack.c.l.b16 %v308
      %v377 = vunpack.c.l.b16 %v311
      %v378 = vunpack.c.l.b16 %v314
      %v379 = vunpack.c.l.b16 %v317
      %v380 = vpack.c.b16 %v372, %v372
      %v381 = vpack.c.b16 %v373, %v373
      %v382 = vpack.c.b16 %v374, %v374
      %v383 = vpack.c.b16 %v375, %v375
      %v384 = vpack.c.b16 %v376, %v376
      %v385 = vpack.c.b16 %v377, %v377
      %v386 = vpack.c.b16 %v378, %v378
      %v387 = vpack.c.b16 %v379, %v379
      %vm388 = vsmask.f32 7424
      %v390 = vshrl.u32 %v356, 16
      %v392 = vshll.u32 %v356, 16
      %v394 = vrot.slane %v392, 1
      %v395 = vor.u32 %v390, %v394
      %v397 = vshll.u32 %v380, 16
      %v399 = vrot.slane %v397, 1
      %v400 = vsel %vm388, %v395, %v399
      %v402 = vshrl.u32 %v357, 16
      %v404 = vshll.u32 %v357, 16
      %v406 = vrot.slane %v404, 1
      %v407 = vor.u32 %v402, %v406
      %v409 = vshll.u32 %v381, 16
      %v411 = vrot.slane %v409, 1
      %v412 = vsel %vm388, %v407, %v411
      %v414 = vshrl.u32 %v358, 16
      %v416 = vshll.u32 %v358, 16
      %v418 = vrot.slane %v416, 1
      %v419 = vor.u32 %v414, %v418
      %v421 = vshll.u32 %v382, 16
      %v423 = vrot.slane %v421, 1
      %v424 = vsel %vm388, %v419, %v423
      %v426 = vshrl.u32 %v359, 16
      %v428 = vshll.u32 %v359, 16
      %v430 = vrot.slane %v428, 1
      %v431 = vor.u32 %v426, %v430
      %v433 = vshll.u32 %v383, 16
      %v435 = vrot.slane %v433, 1
      %v436 = vsel %vm388, %v431, %v435
      %v438 = vshrl.u32 %v360, 16
      %v440 = vshll.u32 %v360, 16
      %v442 = vrot.slane %v440, 1
      %v443 = vor.u32 %v438, %v442
      %v445 = vshll.u32 %v384, 16
      %v447 = vrot.slane %v445, 1
      %v448 = vsel %vm388, %v443, %v447
      %v450 = vshrl.u32 %v361, 16
      %v452 = vshll.u32 %v361, 16
      %v454 = vrot.slane %v452, 1
      %v455 = vor.u32 %v450, %v454
      %v457 = vshll.u32 %v385, 16
      %v459 = vrot.slane %v457, 1
      %v460 = vsel %vm388, %v455, %v459
      %v462 = vshrl.u32 %v362, 16
      %v464 = vshll.u32 %v362, 16
      %v466 = vrot.slane %v464, 1
      %v467 = vor.u32 %v462, %v466
      %v469 = vshll.u32 %v386, 16
      %v471 = vrot.slane %v469, 1
      %v472 = vsel %vm388, %v467, %v471
      %v474 = vshrl.u32 %v363, 16
      %v476 = vshll.u32 %v363, 16
      %v478 = vrot.slane %v476, 1
      %v479 = vor.u32 %v474, %v478
      %v481 = vshll.u32 %v387, 16
      %v483 = vrot.slane %v481, 1
      %v484 = vsel %vm388, %v479, %v483
      %485 = vrot.lane.b32.xlu0 %v400, 4
      %v486 = vpop.permute.xlu0 %485
      %487 = vrot.lane.b32.xlu0 %v412, 4
      %v488 = vpop.permute.xlu0 %487
      %489 = vrot.lane.b32.xlu0 %v424, 4
      %v490 = vpop.permute.xlu0 %489
      %491 = vrot.lane.b32.xlu0 %v436, 4
      %v492 = vpop.permute.xlu0 %491
      %493 = vrot.lane.b32.xlu0 %v448, 4
      %v494 = vpop.permute.xlu0 %493
      %495 = vrot.lane.b32.xlu0 %v460, 4
      %v496 = vpop.permute.xlu0 %495
      %497 = vrot.lane.b32.xlu0 %v472, 4
      %v498 = vpop.permute.xlu0 %497
      %499 = vrot.lane.b32.xlu0 %v484, 4
      %v500 = vpop.permute.xlu0 %499
      %v503 = vunpack.c.l.b16 %v318
      %v504 = vunpack.c.l.b16 %v319
      %v505 = vpack.c.b16 %v504, %v503
      %506 = vrot.lane.b32.xlu0 %v357, 8
      %v507 = vpop.permute.xlu0 %506
      %508 = vrot.lane.b32.xlu0 %v358, 8
      %v509 = vpop.permute.xlu0 %508
      %510 = vrot.lane.b32.xlu0 %v359, 8
      %v511 = vpop.permute.xlu0 %510
      %512 = vrot.lane.b32.xlu0 %v360, 8
      %v513 = vpop.permute.xlu0 %512
      %514 = vrot.lane.b32.xlu0 %v361, 8
      %v515 = vpop.permute.xlu0 %514
      %516 = vrot.lane.b32.xlu0 %v362, 8
      %v517 = vpop.permute.xlu0 %516
      %518 = vrot.lane.b32.xlu0 %v363, 8
      %v519 = vpop.permute.xlu0 %518
      %520 = vrot.lane.b32.xlu0 %v505, 8
      %v521 = vpop.permute.xlu0 %520
      %v523 = vunpack.c.l.b16 %v320
      %v524 = vpack.c.b16 %v523, %v523
      %v526 = vshrl.u32 %v505, 16
      %v528 = vshll.u32 %v505, 16
      %v530 = vrot.slane %v528, 1
      %v531 = vor.u32 %v526, %v530
      %v533 = vshll.u32 %v524, 16
      %v535 = vrot.slane %v533, 1
      %v536 = vsel %vm388, %v531, %v535
      %537 = vrot.lane.b32.xlu0 %v412, 12
      %v538 = vpop.permute.xlu0 %537
      %539 = vrot.lane.b32.xlu0 %v424, 12
      %v540 = vpop.permute.xlu0 %539
      %541 = vrot.lane.b32.xlu0 %v436, 12
      %v542 = vpop.permute.xlu0 %541
      %543 = vrot.lane.b32.xlu0 %v448, 12
      %v544 = vpop.permute.xlu0 %543
      %545 = vrot.lane.b32.xlu0 %v460, 12
      %v546 = vpop.permute.xlu0 %545
      %547 = vrot.lane.b32.xlu0 %v472, 12
      %v548 = vpop.permute.xlu0 %547
      %549 = vrot.lane.b32.xlu0 %v484, 12
      %v550 = vpop.permute.xlu0 %549
      %551 = vrot.lane.b32.xlu0 %v536, 12
      %v552 = vpop.permute.xlu0 %551
      %vm553 = vcmask 31744
      %v555 = vsel %vm553, %v356, %v486
      %v557 = vsel %vm553, %v357, %v488
      %v559 = vsel %vm553, %v358, %v490
      %v561 = vsel %vm553, %v359, %v492
      %v563 = vsel %vm553, %v360, %v494
      %v565 = vsel %vm553, %v361, %v496
      %v567 = vsel %vm553, %v362, %v498
      %v569 = vsel %vm553, %v363, %v500
      %vm570 = vcmask 64512
      %v572 = vsel %vm570, %v555, %v507
      %v574 = vsel %vm570, %v557, %v509
      %v576 = vsel %vm570, %v559, %v511
      %v578 = vsel %vm570, %v561, %v513
      %v580 = vsel %vm570, %v563, %v515
      %v582 = vsel %vm570, %v565, %v517
      %v584 = vsel %vm570, %v567, %v519
      %v586 = vsel %vm570, %v569, %v521
      %vm587 = vcmask 97280
      %v589 = vsel %vm587, %v572, %v538
      %v591 = vsel %vm587, %v574, %v540
      %v593 = vsel %vm587, %v576, %v542
      %v595 = vsel %vm587, %v578, %v544
      %v597 = vsel %vm587, %v580, %v546
      %v599 = vsel %vm587, %v582, %v548
      %v601 = vsel %vm587, %v584, %v550
      %v603 = vsel %vm587, %v586, %v552
      %v604 = vld [vmem:[%s2] sm:$0xf]
      %v605 = vld [vmem:[%s2 + $0x4] sm:$0xf]
      %v608 = vunpack.c.l.b16 %v604
      %v609 = vunpack.c.l.b16 %v605
      %v610 = vpack.c.b16 %v609, %v608
      %vm612 = vcmask 130048
      %v613 = vsel %vm612, %v589, 0
      %v615 = vsel %vm612, %v591, 0
      %v617 = vsel %vm612, %v593, 0
      %v619 = vsel %vm612, %v595, 0
      %v621 = vsel %vm612, %v597, 0
      %v623 = vsel %vm612, %v599, 0
      %v625 = vsel %vm612, %v601, 0
      %v627 = vsel %vm612, %v603, 0
      %629 = vmatprep.subr.bf16.mxu0 0
      %630 = vmatpush1.bf16.msra.mxu0 %v610
      %631 = vmatprep.subr.bf16.mxu0 0
      %632 = vmatpush1.bf16.msra.mxu0 0
      %633 = vmatprep.subr.bf16.mxu0 0
      %634 = vmatpush1.bf16.msra.mxu0 0
      %635 = vmatprep.subr.bf16.mxu0 0
      %636 = vmatpush1.bf16.msra.mxu0 0
      %637 = vmatprep.subr.bf16.mxu0 0
      %638 = vmatpush1.bf16.msra.mxu0 0
      %639 = vmatprep.subr.bf16.mxu0 0
      %640 = vmatpush1.bf16.msra.mxu0 0
      %641 = vmatprep.subr.bf16.mxu0 0
      %642 = vmatpush1.bf16.msra.mxu0 0
      %643 = vmatprep.subr.bf16.mxu0 0
      %644 = vmatpush1.bf16.msra.mxu0 0
      %645 = vmatprep.subr.bf16.mxu0 0
      %646 = vmatpush1.bf16.msra.mxu0 0
      %647 = vmatprep.subr.bf16.mxu0 0
      %648 = vmatpush1.bf16.msra.mxu0 0
      %649 = vmatprep.subr.bf16.mxu0 0
      %650 = vmatpush1.bf16.msra.mxu0 0
      %651 = vmatprep.subr.bf16.mxu0 0
      %652 = vmatpush1.bf16.msra.mxu0 0
      %653 = vmatprep.subr.bf16.mxu0 0
      %654 = vmatpush1.bf16.msra.mxu0 0
      %655 = vmatprep.subr.bf16.mxu0 0
      %656 = vmatpush1.bf16.msra.mxu0 0
      %657 = vmatprep.subr.bf16.mxu0 0
      %658 = vmatpush1.bf16.msra.mxu0 0
      %659 = vmatprep.subr.bf16.mxu0 0
      %660 = vmatpush1.bf16.msra.mxu0 0
      %661 = vmatprep.mubr.bf16.mxu0 0
      %662 = vmatmul.mubr.bf16.gmra.mrb[0].mxu0 %v613
      %v663 = vpop.f32.mrb[0].mxu0
      %v664 = vadd.f32 0.0, %v663
      %v665 = vpop.f32.mrb[0].mxu0
      %v666 = vpop.f32.mrb[0].mxu0
      %v667 = vadd.f32 0.0, %v666
      %v668 = vpop.f32.mrb[0].mxu0
      %669 = vmatprep.mubr.bf16.mxu0 0
      %670 = vmatmul.mubr.bf16.gmra.mrb[0].mxu0 %v615
      %v671 = vpop.f32.mrb[0].mxu0
      %v672 = vadd.f32 0.0, %v671
      %v673 = vpop.f32.mrb[0].mxu0
      %v674 = vpop.f32.mrb[0].mxu0
      %v675 = vadd.f32 0.0, %v674
      %v676 = vpop.f32.mrb[0].mxu0
      %677 = vmatprep.mubr.bf16.mxu0 0
      %678 = vmatmul.mubr.bf16.gmra.mrb[0].mxu0 %v617
      %v679 = vpop.f32.mrb[0].mxu0
      %v680 = vadd.f32 0.0, %v679
      %v681 = vpop.f32.mrb[0].mxu0
      %v682 = vpop.f32.mrb[0].mxu0
      %v683 = vadd.f32 0.0, %v682
      %v684 = vpop.f32.mrb[0].mxu0
      %685 = vmatprep.mubr.bf16.mxu0 0
      %686 = vmatmul.mubr.bf16.gmra.mrb[0].mxu0 %v619
      %v687 = vpop.f32.mrb[0].mxu0
      %v688 = vadd.f32 0.0, %v687
      %v689 = vpop.f32.mrb[0].mxu0
      %v690 = vpop.f32.mrb[0].mxu0
      %v691 = vadd.f32 0.0, %v690
      %v692 = vpop.f32.mrb[0].mxu0
      %693 = vmatprep.mubr.bf16.mxu0 0
      %694 = vmatmul.mubr.bf16.gmra.mrb[0].mxu0 %v621
      %v695 = vpop.f32.mrb[0].mxu0
      %v696 = vadd.f32 0.0, %v695
      %v697 = vpop.f32.mrb[0].mxu0
      %v698 = vpop.f32.mrb[0].mxu0
      %v699 = vadd.f32 0.0, %v698
      %v700 = vpop.f32.mrb[0].mxu0
      %701 = vmatprep.mubr.bf16.mxu0 0
      %702 = vmatmul.mubr.bf16.gmra.mrb[0].mxu0 %v623
      %v703 = vpop.f32.mrb[0].mxu0
      %v704 = vadd.f32 0.0, %v703
      %v705 = vpop.f32.mrb[0].mxu0
      %v706 = vpop.f32.mrb[0].mxu0
      %v707 = vadd.f32 0.0, %v706
      %v708 = vpop.f32.mrb[0].mxu0
      %709 = vmatprep.mubr.bf16.mxu0 0
      %710 = vmatmul.mubr.bf16.gmra.mrb[0].mxu0 %v625
      %v711 = vpop.f32.mrb[0].mxu0
      %v712 = vadd.f32 0.0, %v711
      %v713 = vpop.f32.mrb[0].mxu0
      %v714 = vpop.f32.mrb[0].mxu0
      %v715 = vadd.f32 0.0, %v714
      %v716 = vpop.f32.mrb[0].mxu0
      %717 = vmatprep.mubr.bf16.mxu0 0
      %718 = vmatmul.mubr.bf16.gmra.mrb[0].mxu0 %v627
      %v719 = vpop.f32.mrb[0].mxu0
      %v720 = vadd.f32 0.0, %v719
      %v721 = vpop.f32.mrb[0].mxu0
      %v722 = vpop.f32.mrb[0].mxu0
      %v723 = vadd.f32 0.0, %v722
      %v724 = vpop.f32.mrb[0].mxu0
      %725 = vdwg.mxu0
      %v726 = vshrl.u32 %v380, 16
      %v728 = vshrl.u32 %v381, 16
      %v730 = vshrl.u32 %v382, 16
      %v732 = vshrl.u32 %v383, 16
      %v734 = vshrl.u32 %v384, 16
      %v736 = vshrl.u32 %v385, 16
      %v738 = vshrl.u32 %v386, 16
      %v740 = vshrl.u32 %v387, 16
      %742 = vrot.lane.b32.xlu0 %v726, 4
      %v743 = vpop.permute.xlu0 %742
      %744 = vrot.lane.b32.xlu0 %v728, 4
      %v745 = vpop.permute.xlu0 %744
      %746 = vrot.lane.b32.xlu0 %v730, 4
      %v747 = vpop.permute.xlu0 %746
      %748 = vrot.lane.b32.xlu0 %v732, 4
      %v749 = vpop.permute.xlu0 %748
      %750 = vrot.lane.b32.xlu0 %v734, 4
      %v751 = vpop.permute.xlu0 %750
      %752 = vrot.lane.b32.xlu0 %v736, 4
      %v753 = vpop.permute.xlu0 %752
      %754 = vrot.lane.b32.xlu0 %v738, 4
      %v755 = vpop.permute.xlu0 %754
      %756 = vrot.lane.b32.xlu0 %v740, 4
      %v757 = vpop.permute.xlu0 %756
      %758 = vrot.lane.b32.xlu0 %v381, 8
      %v759 = vpop.permute.xlu0 %758
      %760 = vrot.lane.b32.xlu0 %v382, 8
      %v761 = vpop.permute.xlu0 %760
      %762 = vrot.lane.b32.xlu0 %v383, 8
      %v763 = vpop.permute.xlu0 %762
      %764 = vrot.lane.b32.xlu0 %v384, 8
      %v765 = vpop.permute.xlu0 %764
      %766 = vrot.lane.b32.xlu0 %v385, 8
      %v767 = vpop.permute.xlu0 %766
      %768 = vrot.lane.b32.xlu0 %v386, 8
      %v769 = vpop.permute.xlu0 %768
      %770 = vrot.lane.b32.xlu0 %v387, 8
      %v771 = vpop.permute.xlu0 %770
      %772 = vrot.lane.b32.xlu0 %v524, 8
      %v773 = vpop.permute.xlu0 %772
      %v774 = vshrl.u32 %v524, 16
      %776 = vrot.lane.b32.xlu0 %v728, 12
      %v777 = vpop.permute.xlu0 %776
      %778 = vrot.lane.b32.xlu0 %v730, 12
      %v779 = vpop.permute.xlu0 %778
      %780 = vrot.lane.b32.xlu0 %v732, 12
      %v781 = vpop.permute.xlu0 %780
      %782 = vrot.lane.b32.xlu0 %v734, 12
      %v783 = vpop.permute.xlu0 %782
      %784 = vrot.lane.b32.xlu0 %v736, 12
      %v785 = vpop.permute.xlu0 %784
      %786 = vrot.lane.b32.xlu0 %v738, 12
      %v787 = vpop.permute.xlu0 %786
      %788 = vrot.lane.b32.xlu0 %v740, 12
      %v789 = vpop.permute.xlu0 %788
      %790 = vrot.lane.b32.xlu0 %v774, 12
      %v791 = vpop.permute.xlu0 %790
      %v793 = vsel %vm553, %v380, %v743
      %v795 = vsel %vm553, %v381, %v745
      %v797 = vsel %vm553, %v382, %v747
      %v799 = vsel %vm553, %v383, %v749
      %v801 = vsel %vm553, %v384, %v751
      %v803 = vsel %vm553, %v385, %v753
      %v805 = vsel %vm553, %v386, %v755
      %v807 = vsel %vm553, %v387, %v757
      %v809 = vsel %vm570, %v793, %v759
      %v811 = vsel %vm570, %v795, %v761
      %v813 = vsel %vm570, %v797, %v763
      %v815 = vsel %vm570, %v799, %v765
      %v817 = vsel %vm570, %v801, %v767
      %v819 = vsel %vm570, %v803, %v769
      %v821 = vsel %vm570, %v805, %v771
      %v823 = vsel %vm570, %v807, %v773
      %v825 = vsel %vm587, %v809, %v777
      %v827 = vsel %vm587, %v811, %v779
      %v829 = vsel %vm587, %v813, %v781
      %v831 = vsel %vm587, %v815, %v783
      %v833 = vsel %vm587, %v817, %v785
      %v835 = vsel %vm587, %v819, %v787
      %v837 = vsel %vm587, %v821, %v789
      %v839 = vsel %vm587, %v823, %v791
      %v840 = vshrl.u32 %v589, 16
      %v842 = vshll.u32 %v589, 16
      %v844 = vrot.slane %v842, 1
      %v845 = vor.u32 %v840, %v844
      %v846 = vshll.u32 %v825, 16
      %v848 = vrot.slane %v846, 1
      %v849 = vsel %vm388, %v845, %v848
      %v850 = vshrl.u32 %v591, 16
      %v852 = vshll.u32 %v591, 16
      %v854 = vrot.slane %v852, 1
      %v855 = vor.u32 %v850, %v854
      %v856 = vshll.u32 %v827, 16
      %v858 = vrot.slane %v856, 1
      %v859 = vsel %vm388, %v855, %v858
      %v860 = vshrl.u32 %v593, 16
      %v862 = vshll.u32 %v593, 16
      %v864 = vrot.slane %v862, 1
      %v865 = vor.u32 %v860, %v864
      %v866 = vshll.u32 %v829, 16
      %v868 = vrot.slane %v866, 1
      %v869 = vsel %vm388, %v865, %v868
      %v870 = vshrl.u32 %v595, 16
      %v872 = vshll.u32 %v595, 16
      %v874 = vrot.slane %v872, 1
      %v875 = vor.u32 %v870, %v874
      %v876 = vshll.u32 %v831, 16
      %v878 = vrot.slane %v876, 1
      %v879 = vsel %vm388, %v875, %v878
      %v880 = vshrl.u32 %v597, 16
      %v882 = vshll.u32 %v597, 16
      %v884 = vrot.slane %v882, 1
      %v885 = vor.u32 %v880, %v884
      %v886 = vshll.u32 %v833, 16
      %v888 = vrot.slane %v886, 1
      %v889 = vsel %vm388, %v885, %v888
      %v890 = vshrl.u32 %v599, 16
      %v892 = vshll.u32 %v599, 16
      %v894 = vrot.slane %v892, 1
      %v895 = vor.u32 %v890, %v894
      %v896 = vshll.u32 %v835, 16
      %v898 = vrot.slane %v896, 1
      %v899 = vsel %vm388, %v895, %v898
      %v900 = vshrl.u32 %v601, 16
      %v902 = vshll.u32 %v601, 16
      %v904 = vrot.slane %v902, 1
      %v905 = vor.u32 %v900, %v904
      %v906 = vshll.u32 %v837, 16
      %v908 = vrot.slane %v906, 1
      %v909 = vsel %vm388, %v905, %v908
      %v910 = vshrl.u32 %v603, 16
      %v912 = vshll.u32 %v603, 16
      %v914 = vrot.slane %v912, 1
      %v915 = vor.u32 %v910, %v914
      %v916 = vshll.u32 %v839, 16
      %v918 = vrot.slane %v916, 1
      %v919 = vsel %vm388, %v915, %v918
      %s920 = scalar_lea.vmem %s2, 8
      %v921 = vld [vmem:[%s920] sm:$0xf]
      %v922 = vld [vmem:[%s920 + $0x4] sm:$0xf]
      %v925 = vunpack.c.l.b16 %v921
      %v926 = vunpack.c.l.b16 %v922
      %v927 = vpack.c.b16 %v926, %v925
      %v930 = vsel %vm612, %v849, 0
      %v933 = vsel %vm612, %v859, 0
      %v936 = vsel %vm612, %v869, 0
      %v939 = vsel %vm612, %v879, 0
      %v942 = vsel %vm612, %v889, 0
      %v945 = vsel %vm612, %v899, 0
      %v948 = vsel %vm612, %v909, 0
      %v951 = vsel %vm612, %v919, 0
      %953 = vmatprep.subr.bf16.mxu0 0
      %954 = vmatpush1.bf16.msra.mxu0 %v927
      %955 = vmatprep.subr.bf16.mxu0 0
      %956 = vmatpush1.bf16.msra.mxu0 0
      %957 = vmatprep.subr.bf16.mxu0 0
      %958 = vmatpush1.bf16.msra.mxu0 0
      %959 = vmatprep.subr.bf16.mxu0 0
      %960 = vmatpush1.bf16.msra.mxu0 0
      %961 = vmatprep.subr.bf16.mxu0 0
      %962 = vmatpush1.bf16.msra.mxu0 0
      %963 = vmatprep.subr.bf16.mxu0 0
      %964 = vmatpush1.bf16.msra.mxu0 0
      %965 = vmatprep.subr.bf16.mxu0 0
      %966 = vmatpush1.bf16.msra.mxu0 0
      %967 = vmatprep.subr.bf16.mxu0 0
      %968 = vmatpush1.bf16.msra.mxu0 0
      %969 = vmatprep.subr.bf16.mxu0 0
      %970 = vmatpush1.bf16.msra.mxu0 0
      %971 = vmatprep.subr.bf16.mxu0 0
      %972 = vmatpush1.bf16.msra.mxu0 0
      %973 = vmatprep.subr.bf16.mxu0 0
      %974 = vmatpush1.bf16.msra.mxu0 0
      %975 = vmatprep.subr.bf16.mxu0 0
      %976 = vmatpush1.bf16.msra.mxu0 0
      %977 = vmatprep.subr.bf16.mxu0 0
      %978 = vmatpush1.bf16.msra.mxu0 0
      %979 = vmatprep.subr.bf16.mxu0 0
      %980 = vmatpush1.bf16.msra.mxu0 0
      %981 = vmatprep.subr.bf16.mxu0 0
      %982 = vmatpush1.bf16.msra.mxu0 0
      %983 = vmatprep.subr.bf16.mxu0 0
      %984 = vmatpush1.bf16.msra.mxu0 0
      %985 = vmatprep.mubr.bf16.mxu0 0
      %986 = vmatmul.mubr.bf16.gmra.mrb[0].mxu0 %v930
      %v987 = vpop.f32.mrb[0].mxu0
      %v988 = vadd.f32 0.0, %v987
      %v989 = vpop.f32.mrb[0].mxu0
      %v990 = vpop.f32.mrb[0].mxu0
      %v991 = vadd.f32 0.0, %v990
      %v992 = vpop.f32.mrb[0].mxu0
      %993 = vmatprep.mubr.bf16.mxu0 0
      %994 = vmatmul.mubr.bf16.gmra.mrb[0].mxu0 %v933
      %v995 = vpop.f32.mrb[0].mxu0
      %v996 = vadd.f32 0.0, %v995
      %v997 = vpop.f32.mrb[0].mxu0
      %v998 = vpop.f32.mrb[0].mxu0
      %v999 = vadd.f32 0.0, %v998
      %v1000 = vpop.f32.mrb[0].mxu0
      %1001 = vmatprep.mubr.bf16.mxu0 0
      %1002 = vmatmul.mubr.bf16.gmra.mrb[0].mxu0 %v936
      %v1003 = vpop.f32.mrb[0].mxu0
      %v1004 = vadd.f32 0.0, %v1003
      %v1005 = vpop.f32.mrb[0].mxu0
      %v1006 = vpop.f32.mrb[0].mxu0
      %v1007 = vadd.f32 0.0, %v1006
      %v1008 = vpop.f32.mrb[0].mxu0
      %1009 = vmatprep.mubr.bf16.mxu0 0
      %1010 = vmatmul.mubr.bf16.gmra.mrb[0].mxu0 %v939
      %v1011 = vpop.f32.mrb[0].mxu0
      %v1012 = vadd.f32 0.0, %v1011
      %v1013 = vpop.f32.mrb[0].mxu0
      %v1014 = vpop.f32.mrb[0].mxu0
      %v1015 = vadd.f32 0.0, %v1014
      %v1016 = vpop.f32.mrb[0].mxu0
      %1017 = vmatprep.mubr.bf16.mxu0 0
      %1018 = vmatmul.mubr.bf16.gmra.mrb[0].mxu0 %v942
      %v1019 = vpop.f32.mrb[0].mxu0
      %v1020 = vadd.f32 0.0, %v1019
      %v1021 = vpop.f32.mrb[0].mxu0
      %v1022 = vpop.f32.mrb[0].mxu0
      %v1023 = vadd.f32 0.0, %v1022
      %v1024 = vpop.f32.mrb[0].mxu0
      %1025 = vmatprep.mubr.bf16.mxu0 0
      %1026 = vmatmul.mubr.bf16.gmra.mrb[0].mxu0 %v945
      %v1027 = vpop.f32.mrb[0].mxu0
      %v1028 = vadd.f32 0.0, %v1027
      %v1029 = vpop.f32.mrb[0].mxu0
      %v1030 = vpop.f32.mrb[0].mxu0
      %v1031 = vadd.f32 0.0, %v1030
      %v1032 = vpop.f32.mrb[0].mxu0
      %1033 = vmatprep.mubr.bf16.mxu0 0
      %1034 = vmatmul.mubr.bf16.gmra.mrb[0].mxu0 %v948
      %v1035 = vpop.f32.mrb[0].mxu0
      %v1036 = vadd.f32 0.0, %v1035
      %v1037 = vpop.f32.mrb[0].mxu0
      %v1038 = vpop.f32.mrb[0].mxu0
      %v1039 = vadd.f32 0.0, %v1038
      %v1040 = vpop.f32.mrb[0].mxu0
      %1041 = vmatprep.mubr.bf16.mxu0 0
      %1042 = vmatmul.mubr.bf16.gmra.mrb[0].mxu0 %v951
      %v1043 = vpop.f32.mrb[0].mxu0
      %v1044 = vadd.f32 0.0, %v1043
      %v1045 = vpop.f32.mrb[0].mxu0
      %v1046 = vpop.f32.mrb[0].mxu0
      %v1047 = vadd.f32 0.0, %v1046
      %v1048 = vpop.f32.mrb[0].mxu0
      %1049 = vdwg.mxu0
      %v1066 = vcombine.high %v664, %v664
      %v1068 = vunpack.c.l.s4 1966171168
      %v1069 = vunpack.c.0.s8 %v1068
      %v1070 = vlaneseq
      %v1071 = vshrl.u32 %v1070, 7
      %v1072 = vsub.s32 %v1069, %v1071
      %v1073 = vrot.slane %v664, %v1072
      %v1075 = vunpack.c.l.s4 1966171168
      %v1076 = vunpack.c.0.s8 %v1075
      %v1077 = vlaneseq
      %v1078 = vshrl.u32 %v1077, 7
      %v1079 = vsub.s32 %v1076, %v1078
      %v1080 = vrot.slane %v1066, %v1079
      %v1081 = vcombine.high %v1073, %v1073
      %v1082 = vcombine.high %v1080, %v1080
      %v1084 = vunpack.c.l.s4 1966171168
      %v1085 = vunpack.c.0.s8 %v1084
      %v1086 = vlaneseq
      %v1087 = vshrl.u32 %v1086, 7
      %v1088 = vsub.s32 %v1085, %v1087
      %v1089 = vrot.slane %v1073, %v1088
      %v1091 = vunpack.c.l.s4 1966171168
      %v1092 = vunpack.c.0.s8 %v1091
      %v1093 = vlaneseq
      %v1094 = vshrl.u32 %v1093, 7
      %v1095 = vsub.s32 %v1092, %v1094
      %v1096 = vrot.slane %v1080, %v1095
      %v1098 = vunpack.c.l.s4 1966171168
      %v1099 = vunpack.c.0.s8 %v1098
      %v1100 = vlaneseq
      %v1101 = vshrl.u32 %v1100, 7
      %v1102 = vsub.s32 %v1099, %v1101
      %v1103 = vrot.slane %v1081, %v1102
      %v1105 = vunpack.c.l.s4 1966171168
      %v1106 = vunpack.c.0.s8 %v1105
      %v1107 = vlaneseq
      %v1108 = vshrl.u32 %v1107, 7
      %v1109 = vsub.s32 %v1106, %v1108
      %v1110 = vrot.slane %v1082, %v1109
      %v1111 = vcombine.high %v1089, %v1089
      %v1112 = vcombine.high %v1096, %v1096
      %v1113 = vcombine.high %v1103, %v1103
      %v1114 = vcombine.high %v1110, %v1110
      %v1115 = vcombine.high %v667, %v667
      %v1117 = vunpack.c.l.s4 1966171168
      %v1118 = vunpack.c.0.s8 %v1117
      %v1119 = vlaneseq
      %v1120 = vshrl.u32 %v1119, 7
      %v1121 = vsub.s32 %v1118, %v1120
      %v1122 = vrot.slane %v667, %v1121
      %v1124 = vunpack.c.l.s4 1966171168
      %v1125 = vunpack.c.0.s8 %v1124
      %v1126 = vlaneseq
      %v1127 = vshrl.u32 %v1126, 7
      %v1128 = vsub.s32 %v1125, %v1127
      %v1129 = vrot.slane %v1115, %v1128
      %v1130 = vcombine.high %v1122, %v1122
      %v1131 = vcombine.high %v1129, %v1129
      %v1133 = vunpack.c.l.s4 1966171168
      %v1134 = vunpack.c.0.s8 %v1133
      %v1135 = vlaneseq
      %v1136 = vshrl.u32 %v1135, 7
      %v1137 = vsub.s32 %v1134, %v1136
      %v1138 = vrot.slane %v1122, %v1137
      %v1140 = vunpack.c.l.s4 1966171168
      %v1141 = vunpack.c.0.s8 %v1140
      %v1142 = vlaneseq
      %v1143 = vshrl.u32 %v1142, 7
      %v1144 = vsub.s32 %v1141, %v1143
      %v1145 = vrot.slane %v1129, %v1144
      %v1147 = vunpack.c.l.s4 1966171168
      %v1148 = vunpack.c.0.s8 %v1147
      %v1149 = vlaneseq
      %v1150 = vshrl.u32 %v1149, 7
      %v1151 = vsub.s32 %v1148, %v1150
      %v1152 = vrot.slane %v1130, %v1151
      %v1154 = vunpack.c.l.s4 1966171168
      %v1155 = vunpack.c.0.s8 %v1154
      %v1156 = vlaneseq
      %v1157 = vshrl.u32 %v1156, 7
      %v1158 = vsub.s32 %v1155, %v1157
      %v1159 = vrot.slane %v1131, %v1158
      %v1160 = vcombine.high %v1138, %v1138
      %v1161 = vcombine.high %v1145, %v1145
      %v1162 = vcombine.high %v1152, %v1152
      %v1163 = vcombine.high %v1159, %v1159
      %v1164 = vcombine.high %v672, %v672
      %v1166 = vunpack.c.l.s4 1966171168
      %v1167 = vunpack.c.0.s8 %v1166
      %v1168 = vlaneseq
      %v1169 = vshrl.u32 %v1168, 7
      %v1170 = vsub.s32 %v1167, %v1169
      %v1171 = vrot.slane %v672, %v1170
      %v1173 = vunpack.c.l.s4 1966171168
      %v1174 = vunpack.c.0.s8 %v1173
      %v1175 = vlaneseq
      %v1176 = vshrl.u32 %v1175, 7
      %v1177 = vsub.s32 %v1174, %v1176
      %v1178 = vrot.slane %v1164, %v1177
      %v1179 = vcombine.high %v1171, %v1171
      %v1180 = vcombine.high %v1178, %v1178
      %v1182 = vunpack.c.l.s4 1966171168
      %v1183 = vunpack.c.0.s8 %v1182
      %v1184 = vlaneseq
      %v1185 = vshrl.u32 %v1184, 7
      %v1186 = vsub.s32 %v1183, %v1185
      %v1187 = vrot.slane %v1171, %v1186
      %v1189 = vunpack.c.l.s4 1966171168
      %v1190 = vunpack.c.0.s8 %v1189
      %v1191 = vlaneseq
      %v1192 = vshrl.u32 %v1191, 7
      %v1193 = vsub.s32 %v1190, %v1192
      %v1194 = vrot.slane %v1178, %v1193
      %v1196 = vunpack.c.l.s4 1966171168
      %v1197 = vunpack.c.0.s8 %v1196
      %v1198 = vlaneseq
      %v1199 = vshrl.u32 %v1198, 7
      %v1200 = vsub.s32 %v1197, %v1199
      %v1201 = vrot.slane %v1179, %v1200
      %v1203 = vunpack.c.l.s4 1966171168
      %v1204 = vunpack.c.0.s8 %v1203
      %v1205 = vlaneseq
      %v1206 = vshrl.u32 %v1205, 7
      %v1207 = vsub.s32 %v1204, %v1206
      %v1208 = vrot.slane %v1180, %v1207
      %v1209 = vcombine.high %v1187, %v1187
      %v1210 = vcombine.high %v1194, %v1194
      %v1211 = vcombine.high %v1201, %v1201
      %v1212 = vcombine.high %v1208, %v1208
      %v1213 = vcombine.high %v675, %v675
      %v1215 = vunpack.c.l.s4 1966171168
      %v1216 = vunpack.c.0.s8 %v1215
      %v1217 = vlaneseq
      %v1218 = vshrl.u32 %v1217, 7
      %v1219 = vsub.s32 %v1216, %v1218
      %v1220 = vrot.slane %v675, %v1219
      %v1222 = vunpack.c.l.s4 1966171168
      %v1223 = vunpack.c.0.s8 %v1222
      %v1224 = vlaneseq
      %v1225 = vshrl.u32 %v1224, 7
      %v1226 = vsub.s32 %v1223, %v1225
      %v1227 = vrot.slane %v1213, %v1226
      %v1228 = vcombine.high %v1220, %v1220
      %v1229 = vcombine.high %v1227, %v1227
      %v1231 = vunpack.c.l.s4 1966171168
      %v1232 = vunpack.c.0.s8 %v1231
      %v1233 = vlaneseq
      %v1234 = vshrl.u32 %v1233, 7
      %v1235 = vsub.s32 %v1232, %v1234
      %v1236 = vrot.slane %v1220, %v1235
      %v1238 = vunpack.c.l.s4 1966171168
      %v1239 = vunpack.c.0.s8 %v1238
      %v1240 = vlaneseq
      %v1241 = vshrl.u32 %v1240, 7
      %v1242 = vsub.s32 %v1239, %v1241
      %v1243 = vrot.slane %v1227, %v1242
      %v1245 = vunpack.c.l.s4 1966171168
      %v1246 = vunpack.c.0.s8 %v1245
      %v1247 = vlaneseq
      %v1248 = vshrl.u32 %v1247, 7
      %v1249 = vsub.s32 %v1246, %v1248
      %v1250 = vrot.slane %v1228, %v1249
      %v1252 = vunpack.c.l.s4 1966171168
      %v1253 = vunpack.c.0.s8 %v1252
      %v1254 = vlaneseq
      %v1255 = vshrl.u32 %v1254, 7
      %v1256 = vsub.s32 %v1253, %v1255
      %v1257 = vrot.slane %v1229, %v1256
      %v1258 = vcombine.high %v1236, %v1236
      %v1259 = vcombine.high %v1243, %v1243
      %v1260 = vcombine.high %v1250, %v1250
      %v1261 = vcombine.high %v1257, %v1257
      %v1262 = vcombine.high %v680, %v680
      %v1264 = vunpack.c.l.s4 1966171168
      %v1265 = vunpack.c.0.s8 %v1264
      %v1266 = vlaneseq
      %v1267 = vshrl.u32 %v1266, 7
      %v1268 = vsub.s32 %v1265, %v1267
      %v1269 = vrot.slane %v680, %v1268
      %v1271 = vunpack.c.l.s4 1966171168
      %v1272 = vunpack.c.0.s8 %v1271
      %v1273 = vlaneseq
      %v1274 = vshrl.u32 %v1273, 7
      %v1275 = vsub.s32 %v1272, %v1274
      %v1276 = vrot.slane %v1262, %v1275
      %v1277 = vcombine.high %v1269, %v1269
      %v1278 = vcombine.high %v1276, %v1276
      %v1280 = vunpack.c.l.s4 1966171168
      %v1281 = vunpack.c.0.s8 %v1280
      %v1282 = vlaneseq
      %v1283 = vshrl.u32 %v1282, 7
      %v1284 = vsub.s32 %v1281, %v1283
      %v1285 = vrot.slane %v1269, %v1284
      %v1287 = vunpack.c.l.s4 1966171168
      %v1288 = vunpack.c.0.s8 %v1287
      %v1289 = vlaneseq
      %v1290 = vshrl.u32 %v1289, 7
      %v1291 = vsub.s32 %v1288, %v1290
      %v1292 = vrot.slane %v1276, %v1291
      %v1294 = vunpack.c.l.s4 1966171168
      %v1295 = vunpack.c.0.s8 %v1294
      %v1296 = vlaneseq
      %v1297 = vshrl.u32 %v1296, 7
      %v1298 = vsub.s32 %v1295, %v1297
      %v1299 = vrot.slane %v1277, %v1298
      %v1301 = vunpack.c.l.s4 1966171168
      %v1302 = vunpack.c.0.s8 %v1301
      %v1303 = vlaneseq
      %v1304 = vshrl.u32 %v1303, 7
      %v1305 = vsub.s32 %v1302, %v1304
      %v1306 = vrot.slane %v1278, %v1305
      %v1307 = vcombine.high %v1285, %v1285
      %v1308 = vcombine.high %v1292, %v1292
      %v1309 = vcombine.high %v1299, %v1299
      %v1310 = vcombine.high %v1306, %v1306
      %v1311 = vcombine.high %v683, %v683
      %v1313 = vunpack.c.l.s4 1966171168
      %v1314 = vunpack.c.0.s8 %v1313
      %v1315 = vlaneseq
      %v1316 = vshrl.u32 %v1315, 7
      %v1317 = vsub.s32 %v1314, %v1316
      %v1318 = vrot.slane %v683, %v1317
      %v1320 = vunpack.c.l.s4 1966171168
      %v1321 = vunpack.c.0.s8 %v1320
      %v1322 = vlaneseq
      %v1323 = vshrl.u32 %v1322, 7
      %v1324 = vsub.s32 %v1321, %v1323
      %v1325 = vrot.slane %v1311, %v1324
      %v1326 = vcombine.high %v1318, %v1318
      %v1327 = vcombine.high %v1325, %v1325
      %v1329 = vunpack.c.l.s4 1966171168
      %v1330 = vunpack.c.0.s8 %v1329
      %v1331 = vlaneseq
      %v1332 = vshrl.u32 %v1331, 7
      %v1333 = vsub.s32 %v1330, %v1332
      %v1334 = vrot.slane %v1318, %v1333
      %v1336 = vunpack.c.l.s4 1966171168
      %v1337 = vunpack.c.0.s8 %v1336
      %v1338 = vlaneseq
      %v1339 = vshrl.u32 %v1338, 7
      %v1340 = vsub.s32 %v1337, %v1339
      %v1341 = vrot.slane %v1325, %v1340
      %v1343 = vunpack.c.l.s4 1966171168
      %v1344 = vunpack.c.0.s8 %v1343
      %v1345 = vlaneseq
      %v1346 = vshrl.u32 %v1345, 7
      %v1347 = vsub.s32 %v1344, %v1346
      %v1348 = vrot.slane %v1326, %v1347
      %v1350 = vunpack.c.l.s4 1966171168
      %v1351 = vunpack.c.0.s8 %v1350
      %v1352 = vlaneseq
      %v1353 = vshrl.u32 %v1352, 7
      %v1354 = vsub.s32 %v1351, %v1353
      %v1355 = vrot.slane %v1327, %v1354
      %v1356 = vcombine.high %v1334, %v1334
      %v1357 = vcombine.high %v1341, %v1341
      %v1358 = vcombine.high %v1348, %v1348
      %v1359 = vcombine.high %v1355, %v1355
      %v1360 = vcombine.high %v688, %v688
      %v1362 = vunpack.c.l.s4 1966171168
      %v1363 = vunpack.c.0.s8 %v1362
      %v1364 = vlaneseq
      %v1365 = vshrl.u32 %v1364, 7
      %v1366 = vsub.s32 %v1363, %v1365
      %v1367 = vrot.slane %v688, %v1366
      %v1369 = vunpack.c.l.s4 1966171168
      %v1370 = vunpack.c.0.s8 %v1369
      %v1371 = vlaneseq
      %v1372 = vshrl.u32 %v1371, 7
      %v1373 = vsub.s32 %v1370, %v1372
      %v1374 = vrot.slane %v1360, %v1373
      %v1375 = vcombine.high %v1367, %v1367
      %v1376 = vcombine.high %v1374, %v1374
      %v1378 = vunpack.c.l.s4 1966171168
      %v1379 = vunpack.c.0.s8 %v1378
      %v1380 = vlaneseq
      %v1381 = vshrl.u32 %v1380, 7
      %v1382 = vsub.s32 %v1379, %v1381
      %v1383 = vrot.slane %v1367, %v1382
      %v1385 = vunpack.c.l.s4 1966171168
      %v1386 = vunpack.c.0.s8 %v1385
      %v1387 = vlaneseq
      %v1388 = vshrl.u32 %v1387, 7
      %v1389 = vsub.s32 %v1386, %v1388
      %v1390 = vrot.slane %v1374, %v1389
      %v1392 = vunpack.c.l.s4 1966171168
      %v1393 = vunpack.c.0.s8 %v1392
      %v1394 = vlaneseq
      %v1395 = vshrl.u32 %v1394, 7
      %v1396 = vsub.s32 %v1393, %v1395
      %v1397 = vrot.slane %v1375, %v1396
      %v1399 = vunpack.c.l.s4 1966171168
      %v1400 = vunpack.c.0.s8 %v1399
      %v1401 = vlaneseq
      %v1402 = vshrl.u32 %v1401, 7
      %v1403 = vsub.s32 %v1400, %v1402
      %v1404 = vrot.slane %v1376, %v1403
      %v1405 = vcombine.high %v1383, %v1383
      %v1406 = vcombine.high %v1390, %v1390
      %v1407 = vcombine.high %v1397, %v1397
      %v1408 = vcombine.high %v1404, %v1404
      %v1409 = vcombine.high %v691, %v691
      %v1411 = vunpack.c.l.s4 1966171168
      %v1412 = vunpack.c.0.s8 %v1411
      %v1413 = vlaneseq
      %v1414 = vshrl.u32 %v1413, 7
      %v1415 = vsub.s32 %v1412, %v1414
      %v1416 = vrot.slane %v691, %v1415
      %v1418 = vunpack.c.l.s4 1966171168
      %v1419 = vunpack.c.0.s8 %v1418
      %v1420 = vlaneseq
      %v1421 = vshrl.u32 %v1420, 7
      %v1422 = vsub.s32 %v1419, %v1421
      %v1423 = vrot.slane %v1409, %v1422
      %v1424 = vcombine.high %v1416, %v1416
      %v1425 = vcombine.high %v1423, %v1423
      %v1427 = vunpack.c.l.s4 1966171168
      %v1428 = vunpack.c.0.s8 %v1427
      %v1429 = vlaneseq
      %v1430 = vshrl.u32 %v1429, 7
      %v1431 = vsub.s32 %v1428, %v1430
      %v1432 = vrot.slane %v1416, %v1431
      %v1434 = vunpack.c.l.s4 1966171168
      %v1435 = vunpack.c.0.s8 %v1434
      %v1436 = vlaneseq
      %v1437 = vshrl.u32 %v1436, 7
      %v1438 = vsub.s32 %v1435, %v1437
      %v1439 = vrot.slane %v1423, %v1438
      %v1441 = vunpack.c.l.s4 1966171168
      %v1442 = vunpack.c.0.s8 %v1441
      %v1443 = vlaneseq
      %v1444 = vshrl.u32 %v1443, 7
      %v1445 = vsub.s32 %v1442, %v1444
      %v1446 = vrot.slane %v1424, %v1445
      %v1448 = vunpack.c.l.s4 1966171168
      %v1449 = vunpack.c.0.s8 %v1448
      %v1450 = vlaneseq
      %v1451 = vshrl.u32 %v1450, 7
      %v1452 = vsub.s32 %v1449, %v1451
      %v1453 = vrot.slane %v1425, %v1452
      %v1454 = vcombine.high %v1432, %v1432
      %v1455 = vcombine.high %v1439, %v1439
      %v1456 = vcombine.high %v1446, %v1446
      %v1457 = vcombine.high %v1453, %v1453
      %v1458 = vcombine.high %v696, %v696
      %v1460 = vunpack.c.l.s4 1966171168
      %v1461 = vunpack.c.0.s8 %v1460
      %v1462 = vlaneseq
      %v1463 = vshrl.u32 %v1462, 7
      %v1464 = vsub.s32 %v1461, %v1463
      %v1465 = vrot.slane %v696, %v1464
      %v1467 = vunpack.c.l.s4 1966171168
      %v1468 = vunpack.c.0.s8 %v1467
      %v1469 = vlaneseq
      %v1470 = vshrl.u32 %v1469, 7
      %v1471 = vsub.s32 %v1468, %v1470
      %v1472 = vrot.slane %v1458, %v1471
      %v1473 = vcombine.high %v1465, %v1465
      %v1474 = vcombine.high %v1472, %v1472
      %v1476 = vunpack.c.l.s4 1966171168
      %v1477 = vunpack.c.0.s8 %v1476
      %v1478 = vlaneseq
      %v1479 = vshrl.u32 %v1478, 7
      %v1480 = vsub.s32 %v1477, %v1479
      %v1481 = vrot.slane %v1465, %v1480
      %v1483 = vunpack.c.l.s4 1966171168
      %v1484 = vunpack.c.0.s8 %v1483
      %v1485 = vlaneseq
      %v1486 = vshrl.u32 %v1485, 7
      %v1487 = vsub.s32 %v1484, %v1486
      %v1488 = vrot.slane %v1472, %v1487
      %v1490 = vunpack.c.l.s4 1966171168
      %v1491 = vunpack.c.0.s8 %v1490
      %v1492 = vlaneseq
      %v1493 = vshrl.u32 %v1492, 7
      %v1494 = vsub.s32 %v1491, %v1493
      %v1495 = vrot.slane %v1473, %v1494
      %v1497 = vunpack.c.l.s4 1966171168
      %v1498 = vunpack.c.0.s8 %v1497
      %v1499 = vlaneseq
      %v1500 = vshrl.u32 %v1499, 7
      %v1501 = vsub.s32 %v1498, %v1500
      %v1502 = vrot.slane %v1474, %v1501
      %v1503 = vcombine.high %v1481, %v1481
      %v1504 = vcombine.high %v1488, %v1488
      %v1505 = vcombine.high %v1495, %v1495
      %v1506 = vcombine.high %v1502, %v1502
      %v1507 = vcombine.high %v699, %v699
      %v1509 = vunpack.c.l.s4 1966171168
      %v1510 = vunpack.c.0.s8 %v1509
      %v1511 = vlaneseq
      %v1512 = vshrl.u32 %v1511, 7
      %v1513 = vsub.s32 %v1510, %v1512
      %v1514 = vrot.slane %v699, %v1513
      %v1516 = vunpack.c.l.s4 1966171168
      %v1517 = vunpack.c.0.s8 %v1516
      %v1518 = vlaneseq
      %v1519 = vshrl.u32 %v1518, 7
      %v1520 = vsub.s32 %v1517, %v1519
      %v1521 = vrot.slane %v1507, %v1520
      %v1522 = vcombine.high %v1514, %v1514
      %v1523 = vcombine.high %v1521, %v1521
      %v1525 = vunpack.c.l.s4 1966171168
      %v1526 = vunpack.c.0.s8 %v1525
      %v1527 = vlaneseq
      %v1528 = vshrl.u32 %v1527, 7
      %v1529 = vsub.s32 %v1526, %v1528
      %v1530 = vrot.slane %v1514, %v1529
      %v1532 = vunpack.c.l.s4 1966171168
      %v1533 = vunpack.c.0.s8 %v1532
      %v1534 = vlaneseq
      %v1535 = vshrl.u32 %v1534, 7
      %v1536 = vsub.s32 %v1533, %v1535
      %v1537 = vrot.slane %v1521, %v1536
      %v1539 = vunpack.c.l.s4 1966171168
      %v1540 = vunpack.c.0.s8 %v1539
      %v1541 = vlaneseq
      %v1542 = vshrl.u32 %v1541, 7
      %v1543 = vsub.s32 %v1540, %v1542
      %v1544 = vrot.slane %v1522, %v1543
      %v1546 = vunpack.c.l.s4 1966171168
      %v1547 = vunpack.c.0.s8 %v1546
      %v1548 = vlaneseq
      %v1549 = vshrl.u32 %v1548, 7
      %v1550 = vsub.s32 %v1547, %v1549
      %v1551 = vrot.slane %v1523, %v1550
      %v1552 = vcombine.high %v1530, %v1530
      %v1553 = vcombine.high %v1537, %v1537
      %v1554 = vcombine.high %v1544, %v1544
      %v1555 = vcombine.high %v1551, %v1551
      %v1556 = vcombine.high %v704, %v704
      %v1558 = vunpack.c.l.s4 1966171168
      %v1559 = vunpack.c.0.s8 %v1558
      %v1560 = vlaneseq
      %v1561 = vshrl.u32 %v1560, 7
      %v1562 = vsub.s32 %v1559, %v1561
      %v1563 = vrot.slane %v704, %v1562
      %v1565 = vunpack.c.l.s4 1966171168
      %v1566 = vunpack.c.0.s8 %v1565
      %v1567 = vlaneseq
      %v1568 = vshrl.u32 %v1567, 7
      %v1569 = vsub.s32 %v1566, %v1568
      %v1570 = vrot.slane %v1556, %v1569
      %v1571 = vcombine.high %v1563, %v1563
      %v1572 = vcombine.high %v1570, %v1570
      %v1574 = vunpack.c.l.s4 1966171168
      %v1575 = vunpack.c.0.s8 %v1574
      %v1576 = vlaneseq
      %v1577 = vshrl.u32 %v1576, 7
      %v1578 = vsub.s32 %v1575, %v1577
      %v1579 = vrot.slane %v1563, %v1578
      %v1581 = vunpack.c.l.s4 1966171168
      %v1582 = vunpack.c.0.s8 %v1581
      %v1583 = vlaneseq
      %v1584 = vshrl.u32 %v1583, 7
      %v1585 = vsub.s32 %v1582, %v1584
      %v1586 = vrot.slane %v1570, %v1585
      %v1588 = vunpack.c.l.s4 1966171168
      %v1589 = vunpack.c.0.s8 %v1588
      %v1590 = vlaneseq
      %v1591 = vshrl.u32 %v1590, 7
      %v1592 = vsub.s32 %v1589, %v1591
      %v1593 = vrot.slane %v1571, %v1592
      %v1595 = vunpack.c.l.s4 1966171168
      %v1596 = vunpack.c.0.s8 %v1595
      %v1597 = vlaneseq
      %v1598 = vshrl.u32 %v1597, 7
      %v1599 = vsub.s32 %v1596, %v1598
      %v1600 = vrot.slane %v1572, %v1599
      %v1601 = vcombine.high %v1579, %v1579
      %v1602 = vcombine.high %v1586, %v1586
      %v1603 = vcombine.high %v1593, %v1593
      %v1604 = vcombine.high %v1600, %v1600
      %v1605 = vcombine.high %v707, %v707
      %v1607 = vunpack.c.l.s4 1966171168
      %v1608 = vunpack.c.0.s8 %v1607
      %v1609 = vlaneseq
      %v1610 = vshrl.u32 %v1609, 7
      %v1611 = vsub.s32 %v1608, %v1610
      %v1612 = vrot.slane %v707, %v1611
      %v1614 = vunpack.c.l.s4 1966171168
      %v1615 = vunpack.c.0.s8 %v1614
      %v1616 = vlaneseq
      %v1617 = vshrl.u32 %v1616, 7
      %v1618 = vsub.s32 %v1615, %v1617
      %v1619 = vrot.slane %v1605, %v1618
      %v1620 = vcombine.high %v1612, %v1612
      %v1621 = vcombine.high %v1619, %v1619
      %v1623 = vunpack.c.l.s4 1966171168
      %v1624 = vunpack.c.0.s8 %v1623
      %v1625 = vlaneseq
      %v1626 = vshrl.u32 %v1625, 7
      %v1627 = vsub.s32 %v1624, %v1626
      %v1628 = vrot.slane %v1612, %v1627
      %v1630 = vunpack.c.l.s4 1966171168
      %v1631 = vunpack.c.0.s8 %v1630
      %v1632 = vlaneseq
      %v1633 = vshrl.u32 %v1632, 7
      %v1634 = vsub.s32 %v1631, %v1633
      %v1635 = vrot.slane %v1619, %v1634
      %v1637 = vunpack.c.l.s4 1966171168
      %v1638 = vunpack.c.0.s8 %v1637
      %v1639 = vlaneseq
      %v1640 = vshrl.u32 %v1639, 7
      %v1641 = vsub.s32 %v1638, %v1640
      %v1642 = vrot.slane %v1620, %v1641
      %v1644 = vunpack.c.l.s4 1966171168
      %v1645 = vunpack.c.0.s8 %v1644
      %v1646 = vlaneseq
      %v1647 = vshrl.u32 %v1646, 7
      %v1648 = vsub.s32 %v1645, %v1647
      %v1649 = vrot.slane %v1621, %v1648
      %v1650 = vcombine.high %v1628, %v1628
      %v1651 = vcombine.high %v1635, %v1635
      %v1652 = vcombine.high %v1642, %v1642
      %v1653 = vcombine.high %v1649, %v1649
      %v1654 = vcombine.high %v712, %v712
      %v1656 = vunpack.c.l.s4 1966171168
      %v1657 = vunpack.c.0.s8 %v1656
      %v1658 = vlaneseq
      %v1659 = vshrl.u32 %v1658, 7
      %v1660 = vsub.s32 %v1657, %v1659
      %v1661 = vrot.slane %v712, %v1660
      %v1663 = vunpack.c.l.s4 1966171168
      %v1664 = vunpack.c.0.s8 %v1663
      %v1665 = vlaneseq
      %v1666 = vshrl.u32 %v1665, 7
      %v1667 = vsub.s32 %v1664, %v1666
      %v1668 = vrot.slane %v1654, %v1667
      %v1669 = vcombine.high %v1661, %v1661
      %v1670 = vcombine.high %v1668, %v1668
      %v1672 = vunpack.c.l.s4 1966171168
      %v1673 = vunpack.c.0.s8 %v1672
      %v1674 = vlaneseq
      %v1675 = vshrl.u32 %v1674, 7
      %v1676 = vsub.s32 %v1673, %v1675
      %v1677 = vrot.slane %v1661, %v1676
      %v1679 = vunpack.c.l.s4 1966171168
      %v1680 = vunpack.c.0.s8 %v1679
      %v1681 = vlaneseq
      %v1682 = vshrl.u32 %v1681, 7
      %v1683 = vsub.s32 %v1680, %v1682
      %v1684 = vrot.slane %v1668, %v1683
      %v1686 = vunpack.c.l.s4 1966171168
      %v1687 = vunpack.c.0.s8 %v1686
      %v1688 = vlaneseq
      %v1689 = vshrl.u32 %v1688, 7
      %v1690 = vsub.s32 %v1687, %v1689
      %v1691 = vrot.slane %v1669, %v1690
      %v1693 = vunpack.c.l.s4 1966171168
      %v1694 = vunpack.c.0.s8 %v1693
      %v1695 = vlaneseq
      %v1696 = vshrl.u32 %v1695, 7
      %v1697 = vsub.s32 %v1694, %v1696
      %v1698 = vrot.slane %v1670, %v1697
      %v1699 = vcombine.high %v1677, %v1677
      %v1700 = vcombine.high %v1684, %v1684
      %v1701 = vcombine.high %v1691, %v1691
      %v1702 = vcombine.high %v1698, %v1698
      %v1703 = vcombine.high %v715, %v715
      %v1705 = vunpack.c.l.s4 1966171168
      %v1706 = vunpack.c.0.s8 %v1705
      %v1707 = vlaneseq
      %v1708 = vshrl.u32 %v1707, 7
      %v1709 = vsub.s32 %v1706, %v1708
      %v1710 = vrot.slane %v715, %v1709
      %v1712 = vunpack.c.l.s4 1966171168
      %v1713 = vunpack.c.0.s8 %v1712
      %v1714 = vlaneseq
      %v1715 = vshrl.u32 %v1714, 7
      %v1716 = vsub.s32 %v1713, %v1715
      %v1717 = vrot.slane %v1703, %v1716
      %v1718 = vcombine.high %v1710, %v1710
      %v1719 = vcombine.high %v1717, %v1717
      %v1721 = vunpack.c.l.s4 1966171168
      %v1722 = vunpack.c.0.s8 %v1721
      %v1723 = vlaneseq
      %v1724 = vshrl.u32 %v1723, 7
      %v1725 = vsub.s32 %v1722, %v1724
      %v1726 = vrot.slane %v1710, %v1725
      %v1728 = vunpack.c.l.s4 1966171168
      %v1729 = vunpack.c.0.s8 %v1728
      %v1730 = vlaneseq
      %v1731 = vshrl.u32 %v1730, 7
      %v1732 = vsub.s32 %v1729, %v1731
      %v1733 = vrot.slane %v1717, %v1732
      %v1735 = vunpack.c.l.s4 1966171168
      %v1736 = vunpack.c.0.s8 %v1735
      %v1737 = vlaneseq
      %v1738 = vshrl.u32 %v1737, 7
      %v1739 = vsub.s32 %v1736, %v1738
      %v1740 = vrot.slane %v1718, %v1739
      %v1742 = vunpack.c.l.s4 1966171168
      %v1743 = vunpack.c.0.s8 %v1742
      %v1744 = vlaneseq
      %v1745 = vshrl.u32 %v1744, 7
      %v1746 = vsub.s32 %v1743, %v1745
      %v1747 = vrot.slane %v1719, %v1746
      %v1748 = vcombine.high %v1726, %v1726
      %v1749 = vcombine.high %v1733, %v1733
      %v1750 = vcombine.high %v1740, %v1740
      %v1751 = vcombine.high %v1747, %v1747
      %v1752 = vcombine.high %v720, %v720
      %v1754 = vunpack.c.l.s4 1966171168
      %v1755 = vunpack.c.0.s8 %v1754
      %v1756 = vlaneseq
      %v1757 = vshrl.u32 %v1756, 7
      %v1758 = vsub.s32 %v1755, %v1757
      %v1759 = vrot.slane %v720, %v1758
      %v1761 = vunpack.c.l.s4 1966171168
      %v1762 = vunpack.c.0.s8 %v1761
      %v1763 = vlaneseq
      %v1764 = vshrl.u32 %v1763, 7
      %v1765 = vsub.s32 %v1762, %v1764
      %v1766 = vrot.slane %v1752, %v1765
      %v1767 = vcombine.high %v1759, %v1759
      %v1768 = vcombine.high %v1766, %v1766
      %v1770 = vunpack.c.l.s4 1966171168
      %v1771 = vunpack.c.0.s8 %v1770
      %v1772 = vlaneseq
      %v1773 = vshrl.u32 %v1772, 7
      %v1774 = vsub.s32 %v1771, %v1773
      %v1775 = vrot.slane %v1759, %v1774
      %v1777 = vunpack.c.l.s4 1966171168
      %v1778 = vunpack.c.0.s8 %v1777
      %v1779 = vlaneseq
      %v1780 = vshrl.u32 %v1779, 7
      %v1781 = vsub.s32 %v1778, %v1780
      %v1782 = vrot.slane %v1766, %v1781
      %v1784 = vunpack.c.l.s4 1966171168
      %v1785 = vunpack.c.0.s8 %v1784
      %v1786 = vlaneseq
      %v1787 = vshrl.u32 %v1786, 7
      %v1788 = vsub.s32 %v1785, %v1787
      %v1789 = vrot.slane %v1767, %v1788
      %v1791 = vunpack.c.l.s4 1966171168
      %v1792 = vunpack.c.0.s8 %v1791
      %v1793 = vlaneseq
      %v1794 = vshrl.u32 %v1793, 7
      %v1795 = vsub.s32 %v1792, %v1794
      %v1796 = vrot.slane %v1768, %v1795
      %v1797 = vcombine.high %v1775, %v1775
      %v1798 = vcombine.high %v1782, %v1782
      %v1799 = vcombine.high %v1789, %v1789
      %v1800 = vcombine.high %v1796, %v1796
      %v1801 = vcombine.high %v723, %v723
      %v1803 = vunpack.c.l.s4 1966171168
      %v1804 = vunpack.c.0.s8 %v1803
      %v1805 = vlaneseq
      %v1806 = vshrl.u32 %v1805, 7
      %v1807 = vsub.s32 %v1804, %v1806
      %v1808 = vrot.slane %v723, %v1807
      %v1810 = vunpack.c.l.s4 1966171168
      %v1811 = vunpack.c.0.s8 %v1810
      %v1812 = vlaneseq
      %v1813 = vshrl.u32 %v1812, 7
      %v1814 = vsub.s32 %v1811, %v1813
      %v1815 = vrot.slane %v1801, %v1814
      %v1816 = vcombine.high %v1808, %v1808
      %v1817 = vcombine.high %v1815, %v1815
      %v1819 = vunpack.c.l.s4 1966171168
      %v1820 = vunpack.c.0.s8 %v1819
      %v1821 = vlaneseq
      %v1822 = vshrl.u32 %v1821, 7
      %v1823 = vsub.s32 %v1820, %v1822
      %v1824 = vrot.slane %v1808, %v1823
      %v1826 = vunpack.c.l.s4 1966171168
      %v1827 = vunpack.c.0.s8 %v1826
      %v1828 = vlaneseq
      %v1829 = vshrl.u32 %v1828, 7
      %v1830 = vsub.s32 %v1827, %v1829
      %v1831 = vrot.slane %v1815, %v1830
      %v1833 = vunpack.c.l.s4 1966171168
      %v1834 = vunpack.c.0.s8 %v1833
      %v1835 = vlaneseq
      %v1836 = vshrl.u32 %v1835, 7
      %v1837 = vsub.s32 %v1834, %v1836
      %v1838 = vrot.slane %v1816, %v1837
      %v1840 = vunpack.c.l.s4 1966171168
      %v1841 = vunpack.c.0.s8 %v1840
      %v1842 = vlaneseq
      %v1843 = vshrl.u32 %v1842, 7
      %v1844 = vsub.s32 %v1841, %v1843
      %v1845 = vrot.slane %v1817, %v1844
      %v1846 = vcombine.high %v1824, %v1824
      %v1847 = vcombine.high %v1831, %v1831
      %v1848 = vcombine.high %v1838, %v1838
      %v1849 = vcombine.high %v1845, %v1845
      %v1994 = vcombine.high %v988, %v988
      %v1996 = vunpack.c.l.s4 1966171168
      %v1997 = vunpack.c.0.s8 %v1996
      %v1998 = vlaneseq
      %v1999 = vshrl.u32 %v1998, 7
      %v2000 = vsub.s32 %v1997, %v1999
      %v2001 = vrot.slane %v988, %v2000
      %v2003 = vunpack.c.l.s4 1966171168
      %v2004 = vunpack.c.0.s8 %v2003
      %v2005 = vlaneseq
      %v2006 = vshrl.u32 %v2005, 7
      %v2007 = vsub.s32 %v2004, %v2006
      %v2008 = vrot.slane %v1994, %v2007
      %v2009 = vcombine.high %v2001, %v2001
      %v2010 = vcombine.high %v2008, %v2008
      %v2012 = vunpack.c.l.s4 1966171168
      %v2013 = vunpack.c.0.s8 %v2012
      %v2014 = vlaneseq
      %v2015 = vshrl.u32 %v2014, 7
      %v2016 = vsub.s32 %v2013, %v2015
      %v2017 = vrot.slane %v2001, %v2016
      %v2019 = vunpack.c.l.s4 1966171168
      %v2020 = vunpack.c.0.s8 %v2019
      %v2021 = vlaneseq
      %v2022 = vshrl.u32 %v2021, 7
      %v2023 = vsub.s32 %v2020, %v2022
      %v2024 = vrot.slane %v2008, %v2023
      %v2026 = vunpack.c.l.s4 1966171168
      %v2027 = vunpack.c.0.s8 %v2026
      %v2028 = vlaneseq
      %v2029 = vshrl.u32 %v2028, 7
      %v2030 = vsub.s32 %v2027, %v2029
      %v2031 = vrot.slane %v2009, %v2030
      %v2033 = vunpack.c.l.s4 1966171168
      %v2034 = vunpack.c.0.s8 %v2033
      %v2035 = vlaneseq
      %v2036 = vshrl.u32 %v2035, 7
      %v2037 = vsub.s32 %v2034, %v2036
      %v2038 = vrot.slane %v2010, %v2037
      %v2039 = vcombine.high %v2017, %v2017
      %v2040 = vcombine.high %v2024, %v2024
      %v2041 = vcombine.high %v2031, %v2031
      %v2042 = vcombine.high %v2038, %v2038
      %v2043 = vcombine.high %v991, %v991
      %v2045 = vunpack.c.l.s4 1966171168
      %v2046 = vunpack.c.0.s8 %v2045
      %v2047 = vlaneseq
      %v2048 = vshrl.u32 %v2047, 7
      %v2049 = vsub.s32 %v2046, %v2048
      %v2050 = vrot.slane %v991, %v2049
      %v2052 = vunpack.c.l.s4 1966171168
      %v2053 = vunpack.c.0.s8 %v2052
      %v2054 = vlaneseq
      %v2055 = vshrl.u32 %v2054, 7
      %v2056 = vsub.s32 %v2053, %v2055
      %v2057 = vrot.slane %v2043, %v2056
      %v2058 = vcombine.high %v2050, %v2050
      %v2059 = vcombine.high %v2057, %v2057
      %v2061 = vunpack.c.l.s4 1966171168
      %v2062 = vunpack.c.0.s8 %v2061
      %v2063 = vlaneseq
      %v2064 = vshrl.u32 %v2063, 7
      %v2065 = vsub.s32 %v2062, %v2064
      %v2066 = vrot.slane %v2050, %v2065
      %v2068 = vunpack.c.l.s4 1966171168
      %v2069 = vunpack.c.0.s8 %v2068
      %v2070 = vlaneseq
      %v2071 = vshrl.u32 %v2070, 7
      %v2072 = vsub.s32 %v2069, %v2071
      %v2073 = vrot.slane %v2057, %v2072
      %v2075 = vunpack.c.l.s4 1966171168
      %v2076 = vunpack.c.0.s8 %v2075
      %v2077 = vlaneseq
      %v2078 = vshrl.u32 %v2077, 7
      %v2079 = vsub.s32 %v2076, %v2078
      %v2080 = vrot.slane %v2058, %v2079
      %v2082 = vunpack.c.l.s4 1966171168
      %v2083 = vunpack.c.0.s8 %v2082
      %v2084 = vlaneseq
      %v2085 = vshrl.u32 %v2084, 7
      %v2086 = vsub.s32 %v2083, %v2085
      %v2087 = vrot.slane %v2059, %v2086
      %v2088 = vcombine.high %v2066, %v2066
      %v2089 = vcombine.high %v2073, %v2073
      %v2090 = vcombine.high %v2080, %v2080
      %v2091 = vcombine.high %v2087, %v2087
      %v2092 = vcombine.high %v996, %v996
      %v2094 = vunpack.c.l.s4 1966171168
      %v2095 = vunpack.c.0.s8 %v2094
      %v2096 = vlaneseq
      %v2097 = vshrl.u32 %v2096, 7
      %v2098 = vsub.s32 %v2095, %v2097
      %v2099 = vrot.slane %v996, %v2098
      %v2101 = vunpack.c.l.s4 1966171168
      %v2102 = vunpack.c.0.s8 %v2101
      %v2103 = vlaneseq
      %v2104 = vshrl.u32 %v2103, 7
      %v2105 = vsub.s32 %v2102, %v2104
      %v2106 = vrot.slane %v2092, %v2105
      %v2107 = vcombine.high %v2099, %v2099
      %v2108 = vcombine.high %v2106, %v2106
      %v2110 = vunpack.c.l.s4 1966171168
      %v2111 = vunpack.c.0.s8 %v2110
      %v2112 = vlaneseq
      %v2113 = vshrl.u32 %v2112, 7
      %v2114 = vsub.s32 %v2111, %v2113
      %v2115 = vrot.slane %v2099, %v2114
      %v2117 = vunpack.c.l.s4 1966171168
      %v2118 = vunpack.c.0.s8 %v2117
      %v2119 = vlaneseq
      %v2120 = vshrl.u32 %v2119, 7
      %v2121 = vsub.s32 %v2118, %v2120
      %v2122 = vrot.slane %v2106, %v2121
      %v2124 = vunpack.c.l.s4 1966171168
      %v2125 = vunpack.c.0.s8 %v2124
      %v2126 = vlaneseq
      %v2127 = vshrl.u32 %v2126, 7
      %v2128 = vsub.s32 %v2125, %v2127
      %v2129 = vrot.slane %v2107, %v2128
      %v2131 = vunpack.c.l.s4 1966171168
      %v2132 = vunpack.c.0.s8 %v2131
      %v2133 = vlaneseq
      %v2134 = vshrl.u32 %v2133, 7
      %v2135 = vsub.s32 %v2132, %v2134
      %v2136 = vrot.slane %v2108, %v2135
      %v2137 = vcombine.high %v2115, %v2115
      %v2138 = vcombine.high %v2122, %v2122
      %v2139 = vcombine.high %v2129, %v2129
      %v2140 = vcombine.high %v2136, %v2136
      %v2141 = vcombine.high %v999, %v999
      %v2143 = vunpack.c.l.s4 1966171168
      %v2144 = vunpack.c.0.s8 %v2143
      %v2145 = vlaneseq
      %v2146 = vshrl.u32 %v2145, 7
      %v2147 = vsub.s32 %v2144, %v2146
      %v2148 = vrot.slane %v999, %v2147
      %v2150 = vunpack.c.l.s4 1966171168
      %v2151 = vunpack.c.0.s8 %v2150
      %v2152 = vlaneseq
      %v2153 = vshrl.u32 %v2152, 7
      %v2154 = vsub.s32 %v2151, %v2153
      %v2155 = vrot.slane %v2141, %v2154
      %v2156 = vcombine.high %v2148, %v2148
      %v2157 = vcombine.high %v2155, %v2155
      %v2159 = vunpack.c.l.s4 1966171168
      %v2160 = vunpack.c.0.s8 %v2159
      %v2161 = vlaneseq
      %v2162 = vshrl.u32 %v2161, 7
      %v2163 = vsub.s32 %v2160, %v2162
      %v2164 = vrot.slane %v2148, %v2163
      %v2166 = vunpack.c.l.s4 1966171168
      %v2167 = vunpack.c.0.s8 %v2166
      %v2168 = vlaneseq
      %v2169 = vshrl.u32 %v2168, 7
      %v2170 = vsub.s32 %v2167, %v2169
      %v2171 = vrot.slane %v2155, %v2170
      %v2173 = vunpack.c.l.s4 1966171168
      %v2174 = vunpack.c.0.s8 %v2173
      %v2175 = vlaneseq
      %v2176 = vshrl.u32 %v2175, 7
      %v2177 = vsub.s32 %v2174, %v2176
      %v2178 = vrot.slane %v2156, %v2177
      %v2180 = vunpack.c.l.s4 1966171168
      %v2181 = vunpack.c.0.s8 %v2180
      %v2182 = vlaneseq
      %v2183 = vshrl.u32 %v2182, 7
      %v2184 = vsub.s32 %v2181, %v2183
      %v2185 = vrot.slane %v2157, %v2184
      %v2186 = vcombine.high %v2164, %v2164
      %v2187 = vcombine.high %v2171, %v2171
      %v2188 = vcombine.high %v2178, %v2178
      %v2189 = vcombine.high %v2185, %v2185
      %v2190 = vcombine.high %v1004, %v1004
      %v2192 = vunpack.c.l.s4 1966171168
      %v2193 = vunpack.c.0.s8 %v2192
      %v2194 = vlaneseq
      %v2195 = vshrl.u32 %v2194, 7
      %v2196 = vsub.s32 %v2193, %v2195
      %v2197 = vrot.slane %v1004, %v2196
      %v2199 = vunpack.c.l.s4 1966171168
      %v2200 = vunpack.c.0.s8 %v2199
      %v2201 = vlaneseq
      %v2202 = vshrl.u32 %v2201, 7
      %v2203 = vsub.s32 %v2200, %v2202
      %v2204 = vrot.slane %v2190, %v2203
      %v2205 = vcombine.high %v2197, %v2197
      %v2206 = vcombine.high %v2204, %v2204
      %v2208 = vunpack.c.l.s4 1966171168
      %v2209 = vunpack.c.0.s8 %v2208
      %v2210 = vlaneseq
      %v2211 = vshrl.u32 %v2210, 7
      %v2212 = vsub.s32 %v2209, %v2211
      %v2213 = vrot.slane %v2197, %v2212
      %v2215 = vunpack.c.l.s4 1966171168
      %v2216 = vunpack.c.0.s8 %v2215
      %v2217 = vlaneseq
      %v2218 = vshrl.u32 %v2217, 7
      %v2219 = vsub.s32 %v2216, %v2218
      %v2220 = vrot.slane %v2204, %v2219
      %v2222 = vunpack.c.l.s4 1966171168
      %v2223 = vunpack.c.0.s8 %v2222
      %v2224 = vlaneseq
      %v2225 = vshrl.u32 %v2224, 7
      %v2226 = vsub.s32 %v2223, %v2225
      %v2227 = vrot.slane %v2205, %v2226
      %v2229 = vunpack.c.l.s4 1966171168
      %v2230 = vunpack.c.0.s8 %v2229
      %v2231 = vlaneseq
      %v2232 = vshrl.u32 %v2231, 7
      %v2233 = vsub.s32 %v2230, %v2232
      %v2234 = vrot.slane %v2206, %v2233
      %v2235 = vcombine.high %v2213, %v2213
      %v2236 = vcombine.high %v2220, %v2220
      %v2237 = vcombine.high %v2227, %v2227
      %v2238 = vcombine.high %v2234, %v2234
      %v2239 = vcombine.high %v1007, %v1007
      %v2241 = vunpack.c.l.s4 1966171168
      %v2242 = vunpack.c.0.s8 %v2241
      %v2243 = vlaneseq
      %v2244 = vshrl.u32 %v2243, 7
      %v2245 = vsub.s32 %v2242, %v2244
      %v2246 = vrot.slane %v1007, %v2245
      %v2248 = vunpack.c.l.s4 1966171168
      %v2249 = vunpack.c.0.s8 %v2248
      %v2250 = vlaneseq
      %v2251 = vshrl.u32 %v2250, 7
      %v2252 = vsub.s32 %v2249, %v2251
      %v2253 = vrot.slane %v2239, %v2252
      %v2254 = vcombine.high %v2246, %v2246
      %v2255 = vcombine.high %v2253, %v2253
      %v2257 = vunpack.c.l.s4 1966171168
      %v2258 = vunpack.c.0.s8 %v2257
      %v2259 = vlaneseq
      %v2260 = vshrl.u32 %v2259, 7
      %v2261 = vsub.s32 %v2258, %v2260
      %v2262 = vrot.slane %v2246, %v2261
      %v2264 = vunpack.c.l.s4 1966171168
      %v2265 = vunpack.c.0.s8 %v2264
      %v2266 = vlaneseq
      %v2267 = vshrl.u32 %v2266, 7
      %v2268 = vsub.s32 %v2265, %v2267
      %v2269 = vrot.slane %v2253, %v2268
      %v2271 = vunpack.c.l.s4 1966171168
      %v2272 = vunpack.c.0.s8 %v2271
      %v2273 = vlaneseq
      %v2274 = vshrl.u32 %v2273, 7
      %v2275 = vsub.s32 %v2272, %v2274
      %v2276 = vrot.slane %v2254, %v2275
      %v2278 = vunpack.c.l.s4 1966171168
      %v2279 = vunpack.c.0.s8 %v2278
      %v2280 = vlaneseq
      %v2281 = vshrl.u32 %v2280, 7
      %v2282 = vsub.s32 %v2279, %v2281
      %v2283 = vrot.slane %v2255, %v2282
      %v2284 = vcombine.high %v2262, %v2262
      %v2285 = vcombine.high %v2269, %v2269
      %v2286 = vcombine.high %v2276, %v2276
      %v2287 = vcombine.high %v2283, %v2283
      %v2288 = vcombine.high %v1012, %v1012
      %v2290 = vunpack.c.l.s4 1966171168
      %v2291 = vunpack.c.0.s8 %v2290
      %v2292 = vlaneseq
      %v2293 = vshrl.u32 %v2292, 7
      %v2294 = vsub.s32 %v2291, %v2293
      %v2295 = vrot.slane %v1012, %v2294
      %v2297 = vunpack.c.l.s4 1966171168
      %v2298 = vunpack.c.0.s8 %v2297
      %v2299 = vlaneseq
      %v2300 = vshrl.u32 %v2299, 7
      %v2301 = vsub.s32 %v2298, %v2300
      %v2302 = vrot.slane %v2288, %v2301
      %v2303 = vcombine.high %v2295, %v2295
      %v2304 = vcombine.high %v2302, %v2302
      %v2306 = vunpack.c.l.s4 1966171168
      %v2307 = vunpack.c.0.s8 %v2306
      %v2308 = vlaneseq
      %v2309 = vshrl.u32 %v2308, 7
      %v2310 = vsub.s32 %v2307, %v2309
      %v2311 = vrot.slane %v2295, %v2310
      %v2313 = vunpack.c.l.s4 1966171168
      %v2314 = vunpack.c.0.s8 %v2313
      %v2315 = vlaneseq
      %v2316 = vshrl.u32 %v2315, 7
      %v2317 = vsub.s32 %v2314, %v2316
      %v2318 = vrot.slane %v2302, %v2317
      %v2320 = vunpack.c.l.s4 1966171168
      %v2321 = vunpack.c.0.s8 %v2320
      %v2322 = vlaneseq
      %v2323 = vshrl.u32 %v2322, 7
      %v2324 = vsub.s32 %v2321, %v2323
      %v2325 = vrot.slane %v2303, %v2324
      %v2327 = vunpack.c.l.s4 1966171168
      %v2328 = vunpack.c.0.s8 %v2327
      %v2329 = vlaneseq
      %v2330 = vshrl.u32 %v2329, 7
      %v2331 = vsub.s32 %v2328, %v2330
      %v2332 = vrot.slane %v2304, %v2331
      %v2333 = vcombine.high %v2311, %v2311
      %v2334 = vcombine.high %v2318, %v2318
      %v2335 = vcombine.high %v2325, %v2325
      %v2336 = vcombine.high %v2332, %v2332
      %v2337 = vcombine.high %v1015, %v1015
      %v2339 = vunpack.c.l.s4 1966171168
      %v2340 = vunpack.c.0.s8 %v2339
      %v2341 = vlaneseq
      %v2342 = vshrl.u32 %v2341, 7
      %v2343 = vsub.s32 %v2340, %v2342
      %v2344 = vrot.slane %v1015, %v2343
      %v2346 = vunpack.c.l.s4 1966171168
      %v2347 = vunpack.c.0.s8 %v2346
      %v2348 = vlaneseq
      %v2349 = vshrl.u32 %v2348, 7
      %v2350 = vsub.s32 %v2347, %v2349
      %v2351 = vrot.slane %v2337, %v2350
      %v2352 = vcombine.high %v2344, %v2344
      %v2353 = vcombine.high %v2351, %v2351
      %v2355 = vunpack.c.l.s4 1966171168
      %v2356 = vunpack.c.0.s8 %v2355
      %v2357 = vlaneseq
      %v2358 = vshrl.u32 %v2357, 7
      %v2359 = vsub.s32 %v2356, %v2358
      %v2360 = vrot.slane %v2344, %v2359
      %v2362 = vunpack.c.l.s4 1966171168
      %v2363 = vunpack.c.0.s8 %v2362
      %v2364 = vlaneseq
      %v2365 = vshrl.u32 %v2364, 7
      %v2366 = vsub.s32 %v2363, %v2365
      %v2367 = vrot.slane %v2351, %v2366
      %v2369 = vunpack.c.l.s4 1966171168
      %v2370 = vunpack.c.0.s8 %v2369
      %v2371 = vlaneseq
      %v2372 = vshrl.u32 %v2371, 7
      %v2373 = vsub.s32 %v2370, %v2372
      %v2374 = vrot.slane %v2352, %v2373
      %v2376 = vunpack.c.l.s4 1966171168
      %v2377 = vunpack.c.0.s8 %v2376
      %v2378 = vlaneseq
      %v2379 = vshrl.u32 %v2378, 7
      %v2380 = vsub.s32 %v2377, %v2379
      %v2381 = vrot.slane %v2353, %v2380
      %v2382 = vcombine.high %v2360, %v2360
      %v2383 = vcombine.high %v2367, %v2367
      %v2384 = vcombine.high %v2374, %v2374
      %v2385 = vcombine.high %v2381, %v2381
      %v2386 = vcombine.high %v1020, %v1020
      %v2388 = vunpack.c.l.s4 1966171168
      %v2389 = vunpack.c.0.s8 %v2388
      %v2390 = vlaneseq
      %v2391 = vshrl.u32 %v2390, 7
      %v2392 = vsub.s32 %v2389, %v2391
      %v2393 = vrot.slane %v1020, %v2392
      %v2395 = vunpack.c.l.s4 1966171168
      %v2396 = vunpack.c.0.s8 %v2395
      %v2397 = vlaneseq
      %v2398 = vshrl.u32 %v2397, 7
      %v2399 = vsub.s32 %v2396, %v2398
      %v2400 = vrot.slane %v2386, %v2399
      %v2401 = vcombine.high %v2393, %v2393
      %v2402 = vcombine.high %v2400, %v2400
      %v2404 = vunpack.c.l.s4 1966171168
      %v2405 = vunpack.c.0.s8 %v2404
      %v2406 = vlaneseq
      %v2407 = vshrl.u32 %v2406, 7
      %v2408 = vsub.s32 %v2405, %v2407
      %v2409 = vrot.slane %v2393, %v2408
      %v2411 = vunpack.c.l.s4 1966171168
      %v2412 = vunpack.c.0.s8 %v2411
      %v2413 = vlaneseq
      %v2414 = vshrl.u32 %v2413, 7
      %v2415 = vsub.s32 %v2412, %v2414
      %v2416 = vrot.slane %v2400, %v2415
      %v2418 = vunpack.c.l.s4 1966171168
      %v2419 = vunpack.c.0.s8 %v2418
      %v2420 = vlaneseq
      %v2421 = vshrl.u32 %v2420, 7
      %v2422 = vsub.s32 %v2419, %v2421
      %v2423 = vrot.slane %v2401, %v2422
      %v2425 = vunpack.c.l.s4 1966171168
      %v2426 = vunpack.c.0.s8 %v2425
      %v2427 = vlaneseq
      %v2428 = vshrl.u32 %v2427, 7
      %v2429 = vsub.s32 %v2426, %v2428
      %v2430 = vrot.slane %v2402, %v2429
      %v2431 = vcombine.high %v2409, %v2409
      %v2432 = vcombine.high %v2416, %v2416
      %v2433 = vcombine.high %v2423, %v2423
      %v2434 = vcombine.high %v2430, %v2430
      %v2435 = vcombine.high %v1023, %v1023
      %v2437 = vunpack.c.l.s4 1966171168
      %v2438 = vunpack.c.0.s8 %v2437
      %v2439 = vlaneseq
      %v2440 = vshrl.u32 %v2439, 7
      %v2441 = vsub.s32 %v2438, %v2440
      %v2442 = vrot.slane %v1023, %v2441
      %v2444 = vunpack.c.l.s4 1966171168
      %v2445 = vunpack.c.0.s8 %v2444
      %v2446 = vlaneseq
      %v2447 = vshrl.u32 %v2446, 7
      %v2448 = vsub.s32 %v2445, %v2447
      %v2449 = vrot.slane %v2435, %v2448
      %v2450 = vcombine.high %v2442, %v2442
      %v2451 = vcombine.high %v2449, %v2449
      %v2453 = vunpack.c.l.s4 1966171168
      %v2454 = vunpack.c.0.s8 %v2453
      %v2455 = vlaneseq
      %v2456 = vshrl.u32 %v2455, 7
      %v2457 = vsub.s32 %v2454, %v2456
      %v2458 = vrot.slane %v2442, %v2457
      %v2460 = vunpack.c.l.s4 1966171168
      %v2461 = vunpack.c.0.s8 %v2460
      %v2462 = vlaneseq
      %v2463 = vshrl.u32 %v2462, 7
      %v2464 = vsub.s32 %v2461, %v2463
      %v2465 = vrot.slane %v2449, %v2464
      %v2467 = vunpack.c.l.s4 1966171168
      %v2468 = vunpack.c.0.s8 %v2467
      %v2469 = vlaneseq
      %v2470 = vshrl.u32 %v2469, 7
      %v2471 = vsub.s32 %v2468, %v2470
      %v2472 = vrot.slane %v2450, %v2471
      %v2474 = vunpack.c.l.s4 1966171168
      %v2475 = vunpack.c.0.s8 %v2474
      %v2476 = vlaneseq
      %v2477 = vshrl.u32 %v2476, 7
      %v2478 = vsub.s32 %v2475, %v2477
      %v2479 = vrot.slane %v2451, %v2478
      %v2480 = vcombine.high %v2458, %v2458
      %v2481 = vcombine.high %v2465, %v2465
      %v2482 = vcombine.high %v2472, %v2472
      %v2483 = vcombine.high %v2479, %v2479
      %v2484 = vcombine.high %v1028, %v1028
      %v2486 = vunpack.c.l.s4 1966171168
      %v2487 = vunpack.c.0.s8 %v2486
      %v2488 = vlaneseq
      %v2489 = vshrl.u32 %v2488, 7
      %v2490 = vsub.s32 %v2487, %v2489
      %v2491 = vrot.slane %v1028, %v2490
      %v2493 = vunpack.c.l.s4 1966171168
      %v2494 = vunpack.c.0.s8 %v2493
      %v2495 = vlaneseq
      %v2496 = vshrl.u32 %v2495, 7
      %v2497 = vsub.s32 %v2494, %v2496
      %v2498 = vrot.slane %v2484, %v2497
      %v2499 = vcombine.high %v2491, %v2491
      %v2500 = vcombine.high %v2498, %v2498
      %v2502 = vunpack.c.l.s4 1966171168
      %v2503 = vunpack.c.0.s8 %v2502
      %v2504 = vlaneseq
      %v2505 = vshrl.u32 %v2504, 7
      %v2506 = vsub.s32 %v2503, %v2505
      %v2507 = vrot.slane %v2491, %v2506
      %v2509 = vunpack.c.l.s4 1966171168
      %v2510 = vunpack.c.0.s8 %v2509
      %v2511 = vlaneseq
      %v2512 = vshrl.u32 %v2511, 7
      %v2513 = vsub.s32 %v2510, %v2512
      %v2514 = vrot.slane %v2498, %v2513
      %v2516 = vunpack.c.l.s4 1966171168
      %v2517 = vunpack.c.0.s8 %v2516
      %v2518 = vlaneseq
      %v2519 = vshrl.u32 %v2518, 7
      %v2520 = vsub.s32 %v2517, %v2519
      %v2521 = vrot.slane %v2499, %v2520
      %v2523 = vunpack.c.l.s4 1966171168
      %v2524 = vunpack.c.0.s8 %v2523
      %v2525 = vlaneseq
      %v2526 = vshrl.u32 %v2525, 7
      %v2527 = vsub.s32 %v2524, %v2526
      %v2528 = vrot.slane %v2500, %v2527
      %v2529 = vcombine.high %v2507, %v2507
      %v2530 = vcombine.high %v2514, %v2514
      %v2531 = vcombine.high %v2521, %v2521
      %v2532 = vcombine.high %v2528, %v2528
      %v2533 = vcombine.high %v1031, %v1031
      %v2535 = vunpack.c.l.s4 1966171168
      %v2536 = vunpack.c.0.s8 %v2535
      %v2537 = vlaneseq
      %v2538 = vshrl.u32 %v2537, 7
      %v2539 = vsub.s32 %v2536, %v2538
      %v2540 = vrot.slane %v1031, %v2539
      %v2542 = vunpack.c.l.s4 1966171168
      %v2543 = vunpack.c.0.s8 %v2542
      %v2544 = vlaneseq
      %v2545 = vshrl.u32 %v2544, 7
      %v2546 = vsub.s32 %v2543, %v2545
      %v2547 = vrot.slane %v2533, %v2546
      %v2548 = vcombine.high %v2540, %v2540
      %v2549 = vcombine.high %v2547, %v2547
      %v2551 = vunpack.c.l.s4 1966171168
      %v2552 = vunpack.c.0.s8 %v2551
      %v2553 = vlaneseq
      %v2554 = vshrl.u32 %v2553, 7
      %v2555 = vsub.s32 %v2552, %v2554
      %v2556 = vrot.slane %v2540, %v2555
      %v2558 = vunpack.c.l.s4 1966171168
      %v2559 = vunpack.c.0.s8 %v2558
      %v2560 = vlaneseq
      %v2561 = vshrl.u32 %v2560, 7
      %v2562 = vsub.s32 %v2559, %v2561
      %v2563 = vrot.slane %v2547, %v2562
      %v2565 = vunpack.c.l.s4 1966171168
      %v2566 = vunpack.c.0.s8 %v2565
      %v2567 = vlaneseq
      %v2568 = vshrl.u32 %v2567, 7
      %v2569 = vsub.s32 %v2566, %v2568
      %v2570 = vrot.slane %v2548, %v2569
      %v2572 = vunpack.c.l.s4 1966171168
      %v2573 = vunpack.c.0.s8 %v2572
      %v2574 = vlaneseq
      %v2575 = vshrl.u32 %v2574, 7
      %v2576 = vsub.s32 %v2573, %v2575
      %v2577 = vrot.slane %v2549, %v2576
      %v2578 = vcombine.high %v2556, %v2556
      %v2579 = vcombine.high %v2563, %v2563
      %v2580 = vcombine.high %v2570, %v2570
      %v2581 = vcombine.high %v2577, %v2577
      %v2582 = vcombine.high %v1036, %v1036
      %v2584 = vunpack.c.l.s4 1966171168
      %v2585 = vunpack.c.0.s8 %v2584
      %v2586 = vlaneseq
      %v2587 = vshrl.u32 %v2586, 7
      %v2588 = vsub.s32 %v2585, %v2587
      %v2589 = vrot.slane %v1036, %v2588
      %v2591 = vunpack.c.l.s4 1966171168
      %v2592 = vunpack.c.0.s8 %v2591
      %v2593 = vlaneseq
      %v2594 = vshrl.u32 %v2593, 7
      %v2595 = vsub.s32 %v2592, %v2594
      %v2596 = vrot.slane %v2582, %v2595
      %v2597 = vcombine.high %v2589, %v2589
      %v2598 = vcombine.high %v2596, %v2596
      %v2600 = vunpack.c.l.s4 1966171168
      %v2601 = vunpack.c.0.s8 %v2600
      %v2602 = vlaneseq
      %v2603 = vshrl.u32 %v2602, 7
      %v2604 = vsub.s32 %v2601, %v2603
      %v2605 = vrot.slane %v2589, %v2604
      %v2607 = vunpack.c.l.s4 1966171168
      %v2608 = vunpack.c.0.s8 %v2607
      %v2609 = vlaneseq
      %v2610 = vshrl.u32 %v2609, 7
      %v2611 = vsub.s32 %v2608, %v2610
      %v2612 = vrot.slane %v2596, %v2611
      %v2614 = vunpack.c.l.s4 1966171168
      %v2615 = vunpack.c.0.s8 %v2614
      %v2616 = vlaneseq
      %v2617 = vshrl.u32 %v2616, 7
      %v2618 = vsub.s32 %v2615, %v2617
      %v2619 = vrot.slane %v2597, %v2618
      %v2621 = vunpack.c.l.s4 1966171168
      %v2622 = vunpack.c.0.s8 %v2621
      %v2623 = vlaneseq
      %v2624 = vshrl.u32 %v2623, 7
      %v2625 = vsub.s32 %v2622, %v2624
      %v2626 = vrot.slane %v2598, %v2625
      %v2627 = vcombine.high %v2605, %v2605
      %v2628 = vcombine.high %v2612, %v2612
      %v2629 = vcombine.high %v2619, %v2619
      %v2630 = vcombine.high %v2626, %v2626
      %v2631 = vcombine.high %v1039, %v1039
      %v2633 = vunpack.c.l.s4 1966171168
      %v2634 = vunpack.c.0.s8 %v2633
      %v2635 = vlaneseq
      %v2636 = vshrl.u32 %v2635, 7
      %v2637 = vsub.s32 %v2634, %v2636
      %v2638 = vrot.slane %v1039, %v2637
      %v2640 = vunpack.c.l.s4 1966171168
      %v2641 = vunpack.c.0.s8 %v2640
      %v2642 = vlaneseq
      %v2643 = vshrl.u32 %v2642, 7
      %v2644 = vsub.s32 %v2641, %v2643
      %v2645 = vrot.slane %v2631, %v2644
      %v2646 = vcombine.high %v2638, %v2638
      %v2647 = vcombine.high %v2645, %v2645
      %v2649 = vunpack.c.l.s4 1966171168
      %v2650 = vunpack.c.0.s8 %v2649
      %v2651 = vlaneseq
      %v2652 = vshrl.u32 %v2651, 7
      %v2653 = vsub.s32 %v2650, %v2652
      %v2654 = vrot.slane %v2638, %v2653
      %v2656 = vunpack.c.l.s4 1966171168
      %v2657 = vunpack.c.0.s8 %v2656
      %v2658 = vlaneseq
      %v2659 = vshrl.u32 %v2658, 7
      %v2660 = vsub.s32 %v2657, %v2659
      %v2661 = vrot.slane %v2645, %v2660
      %v2663 = vunpack.c.l.s4 1966171168
      %v2664 = vunpack.c.0.s8 %v2663
      %v2665 = vlaneseq
      %v2666 = vshrl.u32 %v2665, 7
      %v2667 = vsub.s32 %v2664, %v2666
      %v2668 = vrot.slane %v2646, %v2667
      %v2670 = vunpack.c.l.s4 1966171168
      %v2671 = vunpack.c.0.s8 %v2670
      %v2672 = vlaneseq
      %v2673 = vshrl.u32 %v2672, 7
      %v2674 = vsub.s32 %v2671, %v2673
      %v2675 = vrot.slane %v2647, %v2674
      %v2676 = vcombine.high %v2654, %v2654
      %v2677 = vcombine.high %v2661, %v2661
      %v2678 = vcombine.high %v2668, %v2668
      %v2679 = vcombine.high %v2675, %v2675
      %v2680 = vcombine.high %v1044, %v1044
      %v2682 = vunpack.c.l.s4 1966171168
      %v2683 = vunpack.c.0.s8 %v2682
      %v2684 = vlaneseq
      %v2685 = vshrl.u32 %v2684, 7
      %v2686 = vsub.s32 %v2683, %v2685
      %v2687 = vrot.slane %v1044, %v2686
      %v2689 = vunpack.c.l.s4 1966171168
      %v2690 = vunpack.c.0.s8 %v2689
      %v2691 = vlaneseq
      %v2692 = vshrl.u32 %v2691, 7
      %v2693 = vsub.s32 %v2690, %v2692
      %v2694 = vrot.slane %v2680, %v2693
      %v2695 = vcombine.high %v2687, %v2687
      %v2696 = vcombine.high %v2694, %v2694
      %v2698 = vunpack.c.l.s4 1966171168
      %v2699 = vunpack.c.0.s8 %v2698
      %v2700 = vlaneseq
      %v2701 = vshrl.u32 %v2700, 7
      %v2702 = vsub.s32 %v2699, %v2701
      %v2703 = vrot.slane %v2687, %v2702
      %v2705 = vunpack.c.l.s4 1966171168
      %v2706 = vunpack.c.0.s8 %v2705
      %v2707 = vlaneseq
      %v2708 = vshrl.u32 %v2707, 7
      %v2709 = vsub.s32 %v2706, %v2708
      %v2710 = vrot.slane %v2694, %v2709
      %v2712 = vunpack.c.l.s4 1966171168
      %v2713 = vunpack.c.0.s8 %v2712
      %v2714 = vlaneseq
      %v2715 = vshrl.u32 %v2714, 7
      %v2716 = vsub.s32 %v2713, %v2715
      %v2717 = vrot.slane %v2695, %v2716
      %v2719 = vunpack.c.l.s4 1966171168
      %v2720 = vunpack.c.0.s8 %v2719
      %v2721 = vlaneseq
      %v2722 = vshrl.u32 %v2721, 7
      %v2723 = vsub.s32 %v2720, %v2722
      %v2724 = vrot.slane %v2696, %v2723
      %v2725 = vcombine.high %v2703, %v2703
      %v2726 = vcombine.high %v2710, %v2710
      %v2727 = vcombine.high %v2717, %v2717
      %v2728 = vcombine.high %v2724, %v2724
      %v2729 = vcombine.high %v1047, %v1047
      %v2731 = vunpack.c.l.s4 1966171168
      %v2732 = vunpack.c.0.s8 %v2731
      %v2733 = vlaneseq
      %v2734 = vshrl.u32 %v2733, 7
      %v2735 = vsub.s32 %v2732, %v2734
      %v2736 = vrot.slane %v1047, %v2735
      %v2738 = vunpack.c.l.s4 1966171168
      %v2739 = vunpack.c.0.s8 %v2738
      %v2740 = vlaneseq
      %v2741 = vshrl.u32 %v2740, 7
      %v2742 = vsub.s32 %v2739, %v2741
      %v2743 = vrot.slane %v2729, %v2742
      %v2744 = vcombine.high %v2736, %v2736
      %v2745 = vcombine.high %v2743, %v2743
      %v2747 = vunpack.c.l.s4 1966171168
      %v2748 = vunpack.c.0.s8 %v2747
      %v2749 = vlaneseq
      %v2750 = vshrl.u32 %v2749, 7
      %v2751 = vsub.s32 %v2748, %v2750
      %v2752 = vrot.slane %v2736, %v2751
      %v2754 = vunpack.c.l.s4 1966171168
      %v2755 = vunpack.c.0.s8 %v2754
      %v2756 = vlaneseq
      %v2757 = vshrl.u32 %v2756, 7
      %v2758 = vsub.s32 %v2755, %v2757
      %v2759 = vrot.slane %v2743, %v2758
      %v2761 = vunpack.c.l.s4 1966171168
      %v2762 = vunpack.c.0.s8 %v2761
      %v2763 = vlaneseq
      %v2764 = vshrl.u32 %v2763, 7
      %v2765 = vsub.s32 %v2762, %v2764
      %v2766 = vrot.slane %v2744, %v2765
      %v2768 = vunpack.c.l.s4 1966171168
      %v2769 = vunpack.c.0.s8 %v2768
      %v2770 = vlaneseq
      %v2771 = vshrl.u32 %v2770, 7
      %v2772 = vsub.s32 %v2769, %v2771
      %v2773 = vrot.slane %v2745, %v2772
      %v2774 = vcombine.high %v2752, %v2752
      %v2775 = vcombine.high %v2759, %v2759
      %v2776 = vcombine.high %v2766, %v2766
      %v2777 = vcombine.high %v2773, %v2773
      %v2778 = vlaneseq
      %v2779 = vshrl.u32 %v2778, 7
      %v2780 = vsub.s32 0, %v2779
      %v2781 = vrot.slane %v2017, %v2780
      %v2782 = vlaneseq
      %v2783 = vshrl.u32 %v2782, 7
      %v2784 = vsub.s32 0, %v2783
      %v2785 = vrot.slane %v2031, %v2784
      %v2786 = vlaneseq
      %v2787 = vshrl.u32 %v2786, 7
      %v2788 = vsub.s32 0, %v2787
      %v2789 = vrot.slane %v2039, %v2788
      %v2790 = vlaneseq
      %v2791 = vshrl.u32 %v2790, 7
      %v2792 = vsub.s32 0, %v2791
      %v2793 = vrot.slane %v2041, %v2792
      %v2794 = vlaneseq
      %v2795 = vshrl.u32 %v2794, 7
      %v2796 = vsub.s32 0, %v2795
      %v2797 = vrot.slane %v2024, %v2796
      %v2798 = vlaneseq
      %v2799 = vshrl.u32 %v2798, 7
      %v2800 = vsub.s32 0, %v2799
      %v2801 = vrot.slane %v2038, %v2800
      %v2802 = vlaneseq
      %v2803 = vshrl.u32 %v2802, 7
      %v2804 = vsub.s32 0, %v2803
      %v2805 = vrot.slane %v2040, %v2804
      %v2806 = vlaneseq
      %v2807 = vshrl.u32 %v2806, 7
      %v2808 = vsub.s32 0, %v2807
      %v2809 = vrot.slane %v2042, %v2808
      %v2810 = vlaneseq
      %v2811 = vshrl.u32 %v2810, 7
      %v2812 = vsub.s32 0, %v2811
      %v2813 = vrot.slane %v2066, %v2812
      %v2814 = vlaneseq
      %v2815 = vshrl.u32 %v2814, 7
      %v2816 = vsub.s32 0, %v2815
      %v2817 = vrot.slane %v2080, %v2816
      %v2818 = vlaneseq
      %v2819 = vshrl.u32 %v2818, 7
      %v2820 = vsub.s32 0, %v2819
      %v2821 = vrot.slane %v2088, %v2820
      %v2822 = vlaneseq
      %v2823 = vshrl.u32 %v2822, 7
      %v2824 = vsub.s32 0, %v2823
      %v2825 = vrot.slane %v2090, %v2824
      %v2826 = vlaneseq
      %v2827 = vshrl.u32 %v2826, 7
      %v2828 = vsub.s32 0, %v2827
      %v2829 = vrot.slane %v2073, %v2828
      %v2830 = vlaneseq
      %v2831 = vshrl.u32 %v2830, 7
      %v2832 = vsub.s32 0, %v2831
      %v2833 = vrot.slane %v2087, %v2832
      %v2834 = vlaneseq
      %v2835 = vshrl.u32 %v2834, 7
      %v2836 = vsub.s32 0, %v2835
      %v2837 = vrot.slane %v2089, %v2836
      %v2838 = vlaneseq
      %v2839 = vshrl.u32 %v2838, 7
      %v2840 = vsub.s32 0, %v2839
      %v2841 = vrot.slane %v2091, %v2840
      %v2842 = vlaneseq
      %v2843 = vshrl.u32 %v2842, 7
      %v2844 = vsub.s32 0, %v2843
      %v2845 = vrot.slane %v2115, %v2844
      %v2846 = vlaneseq
      %v2847 = vshrl.u32 %v2846, 7
      %v2848 = vsub.s32 0, %v2847
      %v2849 = vrot.slane %v2129, %v2848
      %v2850 = vlaneseq
      %v2851 = vshrl.u32 %v2850, 7
      %v2852 = vsub.s32 0, %v2851
      %v2853 = vrot.slane %v2137, %v2852
      %v2854 = vlaneseq
      %v2855 = vshrl.u32 %v2854, 7
      %v2856 = vsub.s32 0, %v2855
      %v2857 = vrot.slane %v2139, %v2856
      %v2858 = vlaneseq
      %v2859 = vshrl.u32 %v2858, 7
      %v2860 = vsub.s32 0, %v2859
      %v2861 = vrot.slane %v2122, %v2860
      %v2862 = vlaneseq
      %v2863 = vshrl.u32 %v2862, 7
      %v2864 = vsub.s32 0, %v2863
      %v2865 = vrot.slane %v2136, %v2864
      %v2866 = vlaneseq
      %v2867 = vshrl.u32 %v2866, 7
      %v2868 = vsub.s32 0, %v2867
      %v2869 = vrot.slane %v2138, %v2868
      %v2870 = vlaneseq
      %v2871 = vshrl.u32 %v2870, 7
      %v2872 = vsub.s32 0, %v2871
      %v2873 = vrot.slane %v2140, %v2872
      %v2874 = vlaneseq
      %v2875 = vshrl.u32 %v2874, 7
      %v2876 = vsub.s32 0, %v2875
      %v2877 = vrot.slane %v2164, %v2876
      %v2878 = vlaneseq
      %v2879 = vshrl.u32 %v2878, 7
      %v2880 = vsub.s32 0, %v2879
      %v2881 = vrot.slane %v2178, %v2880
      %v2882 = vlaneseq
      %v2883 = vshrl.u32 %v2882, 7
      %v2884 = vsub.s32 0, %v2883
      %v2885 = vrot.slane %v2186, %v2884
      %v2886 = vlaneseq
      %v2887 = vshrl.u32 %v2886, 7
      %v2888 = vsub.s32 0, %v2887
      %v2889 = vrot.slane %v2188, %v2888
      %v2890 = vlaneseq
      %v2891 = vshrl.u32 %v2890, 7
      %v2892 = vsub.s32 0, %v2891
      %v2893 = vrot.slane %v2171, %v2892
      %v2894 = vlaneseq
      %v2895 = vshrl.u32 %v2894, 7
      %v2896 = vsub.s32 0, %v2895
      %v2897 = vrot.slane %v2185, %v2896
      %v2898 = vlaneseq
      %v2899 = vshrl.u32 %v2898, 7
      %v2900 = vsub.s32 0, %v2899
      %v2901 = vrot.slane %v2187, %v2900
      %v2902 = vlaneseq
      %v2903 = vshrl.u32 %v2902, 7
      %v2904 = vsub.s32 0, %v2903
      %v2905 = vrot.slane %v2189, %v2904
      %v2906 = vlaneseq
      %v2907 = vshrl.u32 %v2906, 7
      %v2908 = vsub.s32 0, %v2907
      %v2909 = vrot.slane %v2213, %v2908
      %v2910 = vlaneseq
      %v2911 = vshrl.u32 %v2910, 7
      %v2912 = vsub.s32 0, %v2911
      %v2913 = vrot.slane %v2227, %v2912
      %v2914 = vlaneseq
      %v2915 = vshrl.u32 %v2914, 7
      %v2916 = vsub.s32 0, %v2915
      %v2917 = vrot.slane %v2235, %v2916
      %v2918 = vlaneseq
      %v2919 = vshrl.u32 %v2918, 7
      %v2920 = vsub.s32 0, %v2919
      %v2921 = vrot.slane %v2237, %v2920
      %v2922 = vlaneseq
      %v2923 = vshrl.u32 %v2922, 7
      %v2924 = vsub.s32 0, %v2923
      %v2925 = vrot.slane %v2220, %v2924
      %v2926 = vlaneseq
      %v2927 = vshrl.u32 %v2926, 7
      %v2928 = vsub.s32 0, %v2927
      %v2929 = vrot.slane %v2234, %v2928
      %v2930 = vlaneseq
      %v2931 = vshrl.u32 %v2930, 7
      %v2932 = vsub.s32 0, %v2931
      %v2933 = vrot.slane %v2236, %v2932
      %v2934 = vlaneseq
      %v2935 = vshrl.u32 %v2934, 7
      %v2936 = vsub.s32 0, %v2935
      %v2937 = vrot.slane %v2238, %v2936
      %v2938 = vlaneseq
      %v2939 = vshrl.u32 %v2938, 7
      %v2940 = vsub.s32 0, %v2939
      %v2941 = vrot.slane %v2262, %v2940
      %v2942 = vlaneseq
      %v2943 = vshrl.u32 %v2942, 7
      %v2944 = vsub.s32 0, %v2943
      %v2945 = vrot.slane %v2276, %v2944
      %v2946 = vlaneseq
      %v2947 = vshrl.u32 %v2946, 7
      %v2948 = vsub.s32 0, %v2947
      %v2949 = vrot.slane %v2284, %v2948
      %v2950 = vlaneseq
      %v2951 = vshrl.u32 %v2950, 7
      %v2952 = vsub.s32 0, %v2951
      %v2953 = vrot.slane %v2286, %v2952
      %v2954 = vlaneseq
      %v2955 = vshrl.u32 %v2954, 7
      %v2956 = vsub.s32 0, %v2955
      %v2957 = vrot.slane %v2269, %v2956
      %v2958 = vlaneseq
      %v2959 = vshrl.u32 %v2958, 7
      %v2960 = vsub.s32 0, %v2959
      %v2961 = vrot.slane %v2283, %v2960
      %v2962 = vlaneseq
      %v2963 = vshrl.u32 %v2962, 7
      %v2964 = vsub.s32 0, %v2963
      %v2965 = vrot.slane %v2285, %v2964
      %v2966 = vlaneseq
      %v2967 = vshrl.u32 %v2966, 7
      %v2968 = vsub.s32 0, %v2967
      %v2969 = vrot.slane %v2287, %v2968
      %v2970 = vlaneseq
      %v2971 = vshrl.u32 %v2970, 7
      %v2972 = vsub.s32 0, %v2971
      %v2973 = vrot.slane %v2311, %v2972
      %v2974 = vlaneseq
      %v2975 = vshrl.u32 %v2974, 7
      %v2976 = vsub.s32 0, %v2975
      %v2977 = vrot.slane %v2325, %v2976
      %v2978 = vlaneseq
      %v2979 = vshrl.u32 %v2978, 7
      %v2980 = vsub.s32 0, %v2979
      %v2981 = vrot.slane %v2333, %v2980
      %v2982 = vlaneseq
      %v2983 = vshrl.u32 %v2982, 7
      %v2984 = vsub.s32 0, %v2983
      %v2985 = vrot.slane %v2335, %v2984
      %v2986 = vlaneseq
      %v2987 = vshrl.u32 %v2986, 7
      %v2988 = vsub.s32 0, %v2987
      %v2989 = vrot.slane %v2318, %v2988
      %v2990 = vlaneseq
      %v2991 = vshrl.u32 %v2990, 7
      %v2992 = vsub.s32 0, %v2991
      %v2993 = vrot.slane %v2332, %v2992
      %v2994 = vlaneseq
      %v2995 = vshrl.u32 %v2994, 7
      %v2996 = vsub.s32 0, %v2995
      %v2997 = vrot.slane %v2334, %v2996
      %v2998 = vlaneseq
      %v2999 = vshrl.u32 %v2998, 7
      %v3000 = vsub.s32 0, %v2999
      %v3001 = vrot.slane %v2336, %v3000
      %v3002 = vlaneseq
      %v3003 = vshrl.u32 %v3002, 7
      %v3004 = vsub.s32 0, %v3003
      %v3005 = vrot.slane %v2360, %v3004
      %v3006 = vlaneseq
      %v3007 = vshrl.u32 %v3006, 7
      %v3008 = vsub.s32 0, %v3007
      %v3009 = vrot.slane %v2374, %v3008
      %v3010 = vlaneseq
      %v3011 = vshrl.u32 %v3010, 7
      %v3012 = vsub.s32 0, %v3011
      %v3013 = vrot.slane %v2382, %v3012
      %v3014 = vlaneseq
      %v3015 = vshrl.u32 %v3014, 7
      %v3016 = vsub.s32 0, %v3015
      %v3017 = vrot.slane %v2384, %v3016
      %v3018 = vlaneseq
      %v3019 = vshrl.u32 %v3018, 7
      %v3020 = vsub.s32 0, %v3019
      %v3021 = vrot.slane %v2367, %v3020
      %v3022 = vlaneseq
      %v3023 = vshrl.u32 %v3022, 7
      %v3024 = vsub.s32 0, %v3023
      %v3025 = vrot.slane %v2381, %v3024
      %v3026 = vlaneseq
      %v3027 = vshrl.u32 %v3026, 7
      %v3028 = vsub.s32 0, %v3027
      %v3029 = vrot.slane %v2383, %v3028
      %v3030 = vlaneseq
      %v3031 = vshrl.u32 %v3030, 7
      %v3032 = vsub.s32 0, %v3031
      %v3033 = vrot.slane %v2385, %v3032
      %v3034 = vlaneseq
      %v3035 = vshrl.u32 %v3034, 7
      %v3036 = vsub.s32 0, %v3035
      %v3037 = vrot.slane %v2409, %v3036
      %v3038 = vlaneseq
      %v3039 = vshrl.u32 %v3038, 7
      %v3040 = vsub.s32 0, %v3039
      %v3041 = vrot.slane %v2423, %v3040
      %v3042 = vlaneseq
      %v3043 = vshrl.u32 %v3042, 7
      %v3044 = vsub.s32 0, %v3043
      %v3045 = vrot.slane %v2431, %v3044
      %v3046 = vlaneseq
      %v3047 = vshrl.u32 %v3046, 7
      %v3048 = vsub.s32 0, %v3047
      %v3049 = vrot.slane %v2433, %v3048
      %v3050 = vlaneseq
      %v3051 = vshrl.u32 %v3050, 7
      %v3052 = vsub.s32 0, %v3051
      %v3053 = vrot.slane %v2416, %v3052
      %v3054 = vlaneseq
      %v3055 = vshrl.u32 %v3054, 7
      %v3056 = vsub.s32 0, %v3055
      %v3057 = vrot.slane %v2430, %v3056
      %v3058 = vlaneseq
      %v3059 = vshrl.u32 %v3058, 7
      %v3060 = vsub.s32 0, %v3059
      %v3061 = vrot.slane %v2432, %v3060
      %v3062 = vlaneseq
      %v3063 = vshrl.u32 %v3062, 7
      %v3064 = vsub.s32 0, %v3063
      %v3065 = vrot.slane %v2434, %v3064
      %v3066 = vlaneseq
      %v3067 = vshrl.u32 %v3066, 7
      %v3068 = vsub.s32 0, %v3067
      %v3069 = vrot.slane %v2458, %v3068
      %v3070 = vlaneseq
      %v3071 = vshrl.u32 %v3070, 7
      %v3072 = vsub.s32 0, %v3071
      %v3073 = vrot.slane %v2472, %v3072
      %v3074 = vlaneseq
      %v3075 = vshrl.u32 %v3074, 7
      %v3076 = vsub.s32 0, %v3075
      %v3077 = vrot.slane %v2480, %v3076
      %v3078 = vlaneseq
      %v3079 = vshrl.u32 %v3078, 7
      %v3080 = vsub.s32 0, %v3079
      %v3081 = vrot.slane %v2482, %v3080
      %v3082 = vlaneseq
      %v3083 = vshrl.u32 %v3082, 7
      %v3084 = vsub.s32 0, %v3083
      %v3085 = vrot.slane %v2465, %v3084
      %v3086 = vlaneseq
      %v3087 = vshrl.u32 %v3086, 7
      %v3088 = vsub.s32 0, %v3087
      %v3089 = vrot.slane %v2479, %v3088
      %v3090 = vlaneseq
      %v3091 = vshrl.u32 %v3090, 7
      %v3092 = vsub.s32 0, %v3091
      %v3093 = vrot.slane %v2481, %v3092
      %v3094 = vlaneseq
      %v3095 = vshrl.u32 %v3094, 7
      %v3096 = vsub.s32 0, %v3095
      %v3097 = vrot.slane %v2483, %v3096
      %v3098 = vlaneseq
      %v3099 = vshrl.u32 %v3098, 7
      %v3100 = vsub.s32 0, %v3099
      %v3101 = vrot.slane %v2507, %v3100
      %v3102 = vlaneseq
      %v3103 = vshrl.u32 %v3102, 7
      %v3104 = vsub.s32 0, %v3103
      %v3105 = vrot.slane %v2521, %v3104
      %v3106 = vlaneseq
      %v3107 = vshrl.u32 %v3106, 7
      %v3108 = vsub.s32 0, %v3107
      %v3109 = vrot.slane %v2529, %v3108
      %v3110 = vlaneseq
      %v3111 = vshrl.u32 %v3110, 7
      %v3112 = vsub.s32 0, %v3111
      %v3113 = vrot.slane %v2531, %v3112
      %v3114 = vlaneseq
      %v3115 = vshrl.u32 %v3114, 7
      %v3116 = vsub.s32 0, %v3115
      %v3117 = vrot.slane %v2514, %v3116
      %v3118 = vlaneseq
      %v3119 = vshrl.u32 %v3118, 7
      %v3120 = vsub.s32 0, %v3119
      %v3121 = vrot.slane %v2528, %v3120
      %v3122 = vlaneseq
      %v3123 = vshrl.u32 %v3122, 7
      %v3124 = vsub.s32 0, %v3123
      %v3125 = vrot.slane %v2530, %v3124
      %v3126 = vlaneseq
      %v3127 = vshrl.u32 %v3126, 7
      %v3128 = vsub.s32 0, %v3127
      %v3129 = vrot.slane %v2532, %v3128
      %v3130 = vlaneseq
      %v3131 = vshrl.u32 %v3130, 7
      %v3132 = vsub.s32 0, %v3131
      %v3133 = vrot.slane %v2556, %v3132
      %v3134 = vlaneseq
      %v3135 = vshrl.u32 %v3134, 7
      %v3136 = vsub.s32 0, %v3135
      %v3137 = vrot.slane %v2570, %v3136
      %v3138 = vlaneseq
      %v3139 = vshrl.u32 %v3138, 7
      %v3140 = vsub.s32 0, %v3139
      %v3141 = vrot.slane %v2578, %v3140
      %v3142 = vlaneseq
      %v3143 = vshrl.u32 %v3142, 7
      %v3144 = vsub.s32 0, %v3143
      %v3145 = vrot.slane %v2580, %v3144
      %v3146 = vlaneseq
      %v3147 = vshrl.u32 %v3146, 7
      %v3148 = vsub.s32 0, %v3147
      %v3149 = vrot.slane %v2563, %v3148
      %v3150 = vlaneseq
      %v3151 = vshrl.u32 %v3150, 7
      %v3152 = vsub.s32 0, %v3151
      %v3153 = vrot.slane %v2577, %v3152
      %v3154 = vlaneseq
      %v3155 = vshrl.u32 %v3154, 7
      %v3156 = vsub.s32 0, %v3155
      %v3157 = vrot.slane %v2579, %v3156
      %v3158 = vlaneseq
      %v3159 = vshrl.u32 %v3158, 7
      %v3160 = vsub.s32 0, %v3159
      %v3161 = vrot.slane %v2581, %v3160
      %v3162 = vlaneseq
      %v3163 = vshrl.u32 %v3162, 7
      %v3164 = vsub.s32 0, %v3163
      %v3165 = vrot.slane %v2605, %v3164
      %v3166 = vlaneseq
      %v3167 = vshrl.u32 %v3166, 7
      %v3168 = vsub.s32 0, %v3167
      %v3169 = vrot.slane %v2619, %v3168
      %v3170 = vlaneseq
      %v3171 = vshrl.u32 %v3170, 7
      %v3172 = vsub.s32 0, %v3171
      %v3173 = vrot.slane %v2627, %v3172
      %v3174 = vlaneseq
      %v3175 = vshrl.u32 %v3174, 7
      %v3176 = vsub.s32 0, %v3175
      %v3177 = vrot.slane %v2629, %v3176
      %v3178 = vlaneseq
      %v3179 = vshrl.u32 %v3178, 7
      %v3180 = vsub.s32 0, %v3179
      %v3181 = vrot.slane %v2612, %v3180
      %v3182 = vlaneseq
      %v3183 = vshrl.u32 %v3182, 7
      %v3184 = vsub.s32 0, %v3183
      %v3185 = vrot.slane %v2626, %v3184
      %v3186 = vlaneseq
      %v3187 = vshrl.u32 %v3186, 7
      %v3188 = vsub.s32 0, %v3187
      %v3189 = vrot.slane %v2628, %v3188
      %v3190 = vlaneseq
      %v3191 = vshrl.u32 %v3190, 7
      %v3192 = vsub.s32 0, %v3191
      %v3193 = vrot.slane %v2630, %v3192
      %v3194 = vlaneseq
      %v3195 = vshrl.u32 %v3194, 7
      %v3196 = vsub.s32 0, %v3195
      %v3197 = vrot.slane %v2654, %v3196
      %v3198 = vlaneseq
      %v3199 = vshrl.u32 %v3198, 7
      %v3200 = vsub.s32 0, %v3199
      %v3201 = vrot.slane %v2668, %v3200
      %v3202 = vlaneseq
      %v3203 = vshrl.u32 %v3202, 7
      %v3204 = vsub.s32 0, %v3203
      %v3205 = vrot.slane %v2676, %v3204
      %v3206 = vlaneseq
      %v3207 = vshrl.u32 %v3206, 7
      %v3208 = vsub.s32 0, %v3207
      %v3209 = vrot.slane %v2678, %v3208
      %v3210 = vlaneseq
      %v3211 = vshrl.u32 %v3210, 7
      %v3212 = vsub.s32 0, %v3211
      %v3213 = vrot.slane %v2661, %v3212
      %v3214 = vlaneseq
      %v3215 = vshrl.u32 %v3214, 7
      %v3216 = vsub.s32 0, %v3215
      %v3217 = vrot.slane %v2675, %v3216
      %v3218 = vlaneseq
      %v3219 = vshrl.u32 %v3218, 7
      %v3220 = vsub.s32 0, %v3219
      %v3221 = vrot.slane %v2677, %v3220
      %v3222 = vlaneseq
      %v3223 = vshrl.u32 %v3222, 7
      %v3224 = vsub.s32 0, %v3223
      %v3225 = vrot.slane %v2679, %v3224
      %v3226 = vlaneseq
      %v3227 = vshrl.u32 %v3226, 7
      %v3228 = vsub.s32 0, %v3227
      %v3229 = vrot.slane %v2703, %v3228
      %v3230 = vlaneseq
      %v3231 = vshrl.u32 %v3230, 7
      %v3232 = vsub.s32 0, %v3231
      %v3233 = vrot.slane %v2717, %v3232
      %v3234 = vlaneseq
      %v3235 = vshrl.u32 %v3234, 7
      %v3236 = vsub.s32 0, %v3235
      %v3237 = vrot.slane %v2725, %v3236
      %v3238 = vlaneseq
      %v3239 = vshrl.u32 %v3238, 7
      %v3240 = vsub.s32 0, %v3239
      %v3241 = vrot.slane %v2727, %v3240
      %v3242 = vlaneseq
      %v3243 = vshrl.u32 %v3242, 7
      %v3244 = vsub.s32 0, %v3243
      %v3245 = vrot.slane %v2710, %v3244
      %v3246 = vlaneseq
      %v3247 = vshrl.u32 %v3246, 7
      %v3248 = vsub.s32 0, %v3247
      %v3249 = vrot.slane %v2724, %v3248
      %v3250 = vlaneseq
      %v3251 = vshrl.u32 %v3250, 7
      %v3252 = vsub.s32 0, %v3251
      %v3253 = vrot.slane %v2726, %v3252
      %v3254 = vlaneseq
      %v3255 = vshrl.u32 %v3254, 7
      %v3256 = vsub.s32 0, %v3255
      %v3257 = vrot.slane %v2728, %v3256
      %v3258 = vlaneseq
      %v3259 = vshrl.u32 %v3258, 7
      %v3260 = vsub.s32 0, %v3259
      %v3261 = vrot.slane %v2752, %v3260
      %v3262 = vlaneseq
      %v3263 = vshrl.u32 %v3262, 7
      %v3264 = vsub.s32 0, %v3263
      %v3265 = vrot.slane %v2766, %v3264
      %v3266 = vlaneseq
      %v3267 = vshrl.u32 %v3266, 7
      %v3268 = vsub.s32 0, %v3267
      %v3269 = vrot.slane %v2774, %v3268
      %v3270 = vlaneseq
      %v3271 = vshrl.u32 %v3270, 7
      %v3272 = vsub.s32 0, %v3271
      %v3273 = vrot.slane %v2776, %v3272
      %v3274 = vlaneseq
      %v3275 = vshrl.u32 %v3274, 7
      %v3276 = vsub.s32 0, %v3275
      %v3277 = vrot.slane %v2759, %v3276
      %v3278 = vlaneseq
      %v3279 = vshrl.u32 %v3278, 7
      %v3280 = vsub.s32 0, %v3279
      %v3281 = vrot.slane %v2773, %v3280
      %v3282 = vlaneseq
      %v3283 = vshrl.u32 %v3282, 7
      %v3284 = vsub.s32 0, %v3283
      %v3285 = vrot.slane %v2775, %v3284
      %v3286 = vlaneseq
      %v3287 = vshrl.u32 %v3286, 7
      %v3288 = vsub.s32 0, %v3287
      %v3289 = vrot.slane %v2777, %v3288
      %vm3418 = vcmask 1040384
      %v3419 = vsel %vm3418, %v1089, %v2781
      %v3420 = vsel %vm3418, %v1103, %v2785
      %v3421 = vsel %vm3418, %v1111, %v2789
      %v3422 = vsel %vm3418, %v1113, %v2793
      %v3423 = vsel %vm3418, %v1096, %v2797
      %v3424 = vsel %vm3418, %v1110, %v2801
      %v3425 = vsel %vm3418, %v1112, %v2805
      %v3426 = vsel %vm3418, %v1114, %v2809
      %v3427 = vsel %vm3418, %v1138, %v2813
      %v3428 = vsel %vm3418, %v1152, %v2817
      %v3429 = vsel %vm3418, %v1160, %v2821
      %v3430 = vsel %vm3418, %v1162, %v2825
      %v3431 = vsel %vm3418, %v1145, %v2829
      %v3432 = vsel %vm3418, %v1159, %v2833
      %v3433 = vsel %vm3418, %v1161, %v2837
      %v3434 = vsel %vm3418, %v1163, %v2841
      %v3435 = vsel %vm3418, %v1187, %v2845
      %v3436 = vsel %vm3418, %v1201, %v2849
      %v3437 = vsel %vm3418, %v1209, %v2853
      %v3438 = vsel %vm3418, %v1211, %v2857
      %v3439 = vsel %vm3418, %v1194, %v2861
      %v3440 = vsel %vm3418, %v1208, %v2865
      %v3441 = vsel %vm3418, %v1210, %v2869
      %v3442 = vsel %vm3418, %v1212, %v2873
      %v3443 = vsel %vm3418, %v1236, %v2877
      %v3444 = vsel %vm3418, %v1250, %v2881
      %v3445 = vsel %vm3418, %v1258, %v2885
      %v3446 = vsel %vm3418, %v1260, %v2889
      %v3447 = vsel %vm3418, %v1243, %v2893
      %v3448 = vsel %vm3418, %v1257, %v2897
      %v3449 = vsel %vm3418, %v1259, %v2901
      %v3450 = vsel %vm3418, %v1261, %v2905
      %v3451 = vsel %vm3418, %v1285, %v2909
      %v3452 = vsel %vm3418, %v1299, %v2913
      %v3453 = vsel %vm3418, %v1307, %v2917
      %v3454 = vsel %vm3418, %v1309, %v2921
      %v3455 = vsel %vm3418, %v1292, %v2925
      %v3456 = vsel %vm3418, %v1306, %v2929
      %v3457 = vsel %vm3418, %v1308, %v2933
      %v3458 = vsel %vm3418, %v1310, %v2937
      %v3459 = vsel %vm3418, %v1334, %v2941
      %v3460 = vsel %vm3418, %v1348, %v2945
      %v3461 = vsel %vm3418, %v1356, %v2949
      %v3462 = vsel %vm3418, %v1358, %v2953
      %v3463 = vsel %vm3418, %v1341, %v2957
      %v3464 = vsel %vm3418, %v1355, %v2961
      %v3465 = vsel %vm3418, %v1357, %v2965
      %v3466 = vsel %vm3418, %v1359, %v2969
      %v3467 = vsel %vm3418, %v1383, %v2973
      %v3468 = vsel %vm3418, %v1397, %v2977
      %v3469 = vsel %vm3418, %v1405, %v2981
      %v3470 = vsel %vm3418, %v1407, %v2985
      %v3471 = vsel %vm3418, %v1390, %v2989
      %v3472 = vsel %vm3418, %v1404, %v2993
      %v3473 = vsel %vm3418, %v1406, %v2997
      %v3474 = vsel %vm3418, %v1408, %v3001
      %v3475 = vsel %vm3418, %v1432, %v3005
      %v3476 = vsel %vm3418, %v1446, %v3009
      %v3477 = vsel %vm3418, %v1454, %v3013
      %v3478 = vsel %vm3418, %v1456, %v3017
      %v3479 = vsel %vm3418, %v1439, %v3021
      %v3480 = vsel %vm3418, %v1453, %v3025
      %v3481 = vsel %vm3418, %v1455, %v3029
      %v3482 = vsel %vm3418, %v1457, %v3033
      %v3483 = vsel %vm3418, %v1481, %v3037
      %v3484 = vsel %vm3418, %v1495, %v3041
      %v3485 = vsel %vm3418, %v1503, %v3045
      %v3486 = vsel %vm3418, %v1505, %v3049
      %v3487 = vsel %vm3418, %v1488, %v3053
      %v3488 = vsel %vm3418, %v1502, %v3057
      %v3489 = vsel %vm3418, %v1504, %v3061
      %v3490 = vsel %vm3418, %v1506, %v3065
      %v3491 = vsel %vm3418, %v1530, %v3069
      %v3492 = vsel %vm3418, %v1544, %v3073
      %v3493 = vsel %vm3418, %v1552, %v3077
      %v3494 = vsel %vm3418, %v1554, %v3081
      %v3495 = vsel %vm3418, %v1537, %v3085
      %v3496 = vsel %vm3418, %v1551, %v3089
      %v3497 = vsel %vm3418, %v1553, %v3093
      %v3498 = vsel %vm3418, %v1555, %v3097
      %v3499 = vsel %vm3418, %v1579, %v3101
      %v3500 = vsel %vm3418, %v1593, %v3105
      %v3501 = vsel %vm3418, %v1601, %v3109
      %v3502 = vsel %vm3418, %v1603, %v3113
      %v3503 = vsel %vm3418, %v1586, %v3117
      %v3504 = vsel %vm3418, %v1600, %v3121
      %v3505 = vsel %vm3418, %v1602, %v3125
      %v3506 = vsel %vm3418, %v1604, %v3129
      %v3507 = vsel %vm3418, %v1628, %v3133
      %v3508 = vsel %vm3418, %v1642, %v3137
      %v3509 = vsel %vm3418, %v1650, %v3141
      %v3510 = vsel %vm3418, %v1652, %v3145
      %v3511 = vsel %vm3418, %v1635, %v3149
      %v3512 = vsel %vm3418, %v1649, %v3153
      %v3513 = vsel %vm3418, %v1651, %v3157
      %v3514 = vsel %vm3418, %v1653, %v3161
      %v3515 = vsel %vm3418, %v1677, %v3165
      %v3516 = vsel %vm3418, %v1691, %v3169
      %v3517 = vsel %vm3418, %v1699, %v3173
      %v3518 = vsel %vm3418, %v1701, %v3177
      %v3519 = vsel %vm3418, %v1684, %v3181
      %v3520 = vsel %vm3418, %v1698, %v3185
      %v3521 = vsel %vm3418, %v1700, %v3189
      %v3522 = vsel %vm3418, %v1702, %v3193
      %v3523 = vsel %vm3418, %v1726, %v3197
      %v3524 = vsel %vm3418, %v1740, %v3201
      %v3525 = vsel %vm3418, %v1748, %v3205
      %v3526 = vsel %vm3418, %v1750, %v3209
      %v3527 = vsel %vm3418, %v1733, %v3213
      %v3528 = vsel %vm3418, %v1747, %v3217
      %v3529 = vsel %vm3418, %v1749, %v3221
      %v3530 = vsel %vm3418, %v1751, %v3225
      %v3531 = vsel %vm3418, %v1775, %v3229
      %v3532 = vsel %vm3418, %v1789, %v3233
      %v3533 = vsel %vm3418, %v1797, %v3237
      %v3534 = vsel %vm3418, %v1799, %v3241
      %v3535 = vsel %vm3418, %v1782, %v3245
      %v3536 = vsel %vm3418, %v1796, %v3249
      %v3537 = vsel %vm3418, %v1798, %v3253
      %v3538 = vsel %vm3418, %v1800, %v3257
      %v3539 = vsel %vm3418, %v1824, %v3261
      %v3540 = vsel %vm3418, %v1838, %v3265
      %v3541 = vsel %vm3418, %v1846, %v3269
      %v3542 = vsel %vm3418, %v1848, %v3273
      %v3543 = vsel %vm3418, %v1831, %v3277
      %v3544 = vsel %vm3418, %v1845, %v3281
      %v3545 = vsel %vm3418, %v1847, %v3285
      %v3546 = vsel %vm3418, %v1849, %v3289
      %3547 = vrot.lane.b32.xlu0 %v536, 4
      %v3548 = vpop.permute.xlu0 %3547
      %v3551 = vunpack.c.l.b16 %v321
      %v3552 = vunpack.c.l.b16 %v322
      %v3553 = vpack.c.b16 %v3552, %v3551
      %3554 = vrot.lane.b32.xlu0 %v3553, 8
      %v3555 = vpop.permute.xlu0 %3554
      %v3557 = vunpack.c.l.b16 %v323
      %v3558 = vpack.c.b16 %v3557, %v3557
      %v3560 = vshrl.u32 %v3553, 16
      %v3562 = vshll.u32 %v3553, 16
      %v3564 = vrot.slane %v3562, 1
      %v3565 = vor.u32 %v3560, %v3564
      %v3567 = vshll.u32 %v3558, 16
      %v3569 = vrot.slane %v3567, 1
      %v3570 = vsel %vm388, %v3565, %v3569
      %3571 = vrot.lane.b32.xlu0 %v3570, 12
      %v3572 = vpop.permute.xlu0 %3571
      %v3574 = vsel %vm553, %v505, %v3548
      %v3576 = vsel %vm570, %v3574, %v3555
      %v3578 = vsel %vm587, %v3576, %v3572
      %s3579 = scalar_lea.vmem %s2, 16
      %v3580 = vld [vmem:[%s3579] sm:$0xf]
      %v3581 = vld [vmem:[%s3579 + $0x4] sm:$0xf]
      %v3584 = vunpack.c.l.b16 %v3580
      %v3585 = vunpack.c.l.b16 %v3581
      %v3586 = vpack.c.b16 %v3585, %v3584
      %v3588 = vsel %vm612, %v3578, 0
      %3590 = vmatprep.subr.bf16.mxu0 0
      %3591 = vmatpush1.bf16.msra.mxu0 %v3586
      %3592 = vmatprep.subr.bf16.mxu0 0
      %3593 = vmatpush1.bf16.msra.mxu0 0
      %3594 = vmatprep.subr.bf16.mxu0 0
      %3595 = vmatpush1.bf16.msra.mxu0 0
      %3596 = vmatprep.subr.bf16.mxu0 0
      %3597 = vmatpush1.bf16.msra.mxu0 0
      %3598 = vmatprep.subr.bf16.mxu0 0
      %3599 = vmatpush1.bf16.msra.mxu0 0
      %3600 = vmatprep.subr.bf16.mxu0 0
      %3601 = vmatpush1.bf16.msra.mxu0 0
      %3602 = vmatprep.subr.bf16.mxu0 0
      %3603 = vmatpush1.bf16.msra.mxu0 0
      %3604 = vmatprep.subr.bf16.mxu0 0
      %3605 = vmatpush1.bf16.msra.mxu0 0
      %3606 = vmatprep.subr.bf16.mxu0 0
      %3607 = vmatpush1.bf16.msra.mxu0 0
      %3608 = vmatprep.subr.bf16.mxu0 0
      %3609 = vmatpush1.bf16.msra.mxu0 0
      %3610 = vmatprep.subr.bf16.mxu0 0
      %3611 = vmatpush1.bf16.msra.mxu0 0
      %3612 = vmatprep.subr.bf16.mxu0 0
      %3613 = vmatpush1.bf16.msra.mxu0 0
      %3614 = vmatprep.subr.bf16.mxu0 0
      %3615 = vmatpush1.bf16.msra.mxu0 0
      %3616 = vmatprep.subr.bf16.mxu0 0
      %3617 = vmatpush1.bf16.msra.mxu0 0
      %3618 = vmatprep.subr.bf16.mxu0 0
      %3619 = vmatpush1.bf16.msra.mxu0 0
      %3620 = vmatprep.subr.bf16.mxu0 0
      %3621 = vmatpush1.bf16.msra.mxu0 0
      %3622 = vmatprep.mubr.bf16.mxu0 0
      %3623 = vmatmul.mubr.bf16.gmra.mrb[0].mxu0 %v615
      %v3624 = vpop.f32.mrb[0].mxu0
      %v3625 = vadd.f32 0.0, %v3624
      %v3626 = vpop.f32.mrb[0].mxu0
      %v3627 = vpop.f32.mrb[0].mxu0
      %v3628 = vadd.f32 0.0, %v3627
      %v3629 = vpop.f32.mrb[0].mxu0
      %3630 = vmatprep.mubr.bf16.mxu0 0
      %3631 = vmatmul.mubr.bf16.gmra.mrb[0].mxu0 %v617
      %v3632 = vpop.f32.mrb[0].mxu0
      %v3633 = vadd.f32 0.0, %v3632
      %v3634 = vpop.f32.mrb[0].mxu0
      %v3635 = vpop.f32.mrb[0].mxu0
      %v3636 = vadd.f32 0.0, %v3635
      %v3637 = vpop.f32.mrb[0].mxu0
      %3638 = vmatprep.mubr.bf16.mxu0 0
      %3639 = vmatmul.mubr.bf16.gmra.mrb[0].mxu0 %v619
      %v3640 = vpop.f32.mrb[0].mxu0
      %v3641 = vadd.f32 0.0, %v3640
      %v3642 = vpop.f32.mrb[0].mxu0
      %v3643 = vpop.f32.mrb[0].mxu0
      %v3644 = vadd.f32 0.0, %v3643
      %v3645 = vpop.f32.mrb[0].mxu0
      %3646 = vmatprep.mubr.bf16.mxu0 0
      %3647 = vmatmul.mubr.bf16.gmra.mrb[0].mxu0 %v621
      %v3648 = vpop.f32.mrb[0].mxu0
      %v3649 = vadd.f32 0.0, %v3648
      %v3650 = vpop.f32.mrb[0].mxu0
      %v3651 = vpop.f32.mrb[0].mxu0
      %v3652 = vadd.f32 0.0, %v3651
      %v3653 = vpop.f32.mrb[0].mxu0
      %3654 = vmatprep.mubr.bf16.mxu0 0
      %3655 = vmatmul.mubr.bf16.gmra.mrb[0].mxu0 %v623
      %v3656 = vpop.f32.mrb[0].mxu0
      %v3657 = vadd.f32 0.0, %v3656
      %v3658 = vpop.f32.mrb[0].mxu0
      %v3659 = vpop.f32.mrb[0].mxu0
      %v3660 = vadd.f32 0.0, %v3659
      %v3661 = vpop.f32.mrb[0].mxu0
      %3662 = vmatprep.mubr.bf16.mxu0 0
      %3663 = vmatmul.mubr.bf16.gmra.mrb[0].mxu0 %v625
      %v3664 = vpop.f32.mrb[0].mxu0
      %v3665 = vadd.f32 0.0, %v3664
      %v3666 = vpop.f32.mrb[0].mxu0
      %v3667 = vpop.f32.mrb[0].mxu0
      %v3668 = vadd.f32 0.0, %v3667
      %v3669 = vpop.f32.mrb[0].mxu0
      %3670 = vmatprep.mubr.bf16.mxu0 0
      %3671 = vmatmul.mubr.bf16.gmra.mrb[0].mxu0 %v627
      %v3672 = vpop.f32.mrb[0].mxu0
      %v3673 = vadd.f32 0.0, %v3672
      %v3674 = vpop.f32.mrb[0].mxu0
      %v3675 = vpop.f32.mrb[0].mxu0
      %v3676 = vadd.f32 0.0, %v3675
      %v3677 = vpop.f32.mrb[0].mxu0
      %3678 = vmatprep.mubr.bf16.mxu0 0
      %3679 = vmatmul.mubr.bf16.gmra.mrb[0].mxu0 %v3588
      %v3680 = vpop.f32.mrb[0].mxu0
      %v3681 = vadd.f32 0.0, %v3680
      %v3682 = vpop.f32.mrb[0].mxu0
      %v3683 = vpop.f32.mrb[0].mxu0
      %v3684 = vadd.f32 0.0, %v3683
      %v3685 = vpop.f32.mrb[0].mxu0
      %3686 = vdwg.mxu0
      %3687 = vrot.lane.b32.xlu0 %v774, 4
      %v3688 = vpop.permute.xlu0 %3687
      %3689 = vrot.lane.b32.xlu0 %v3558, 8
      %v3690 = vpop.permute.xlu0 %3689
      %v3691 = vshrl.u32 %v3558, 16
      %3693 = vrot.lane.b32.xlu0 %v3691, 12
      %v3694 = vpop.permute.xlu0 %3693
      %v3696 = vsel %vm553, %v524, %v3688
      %v3698 = vsel %vm570, %v3696, %v3690
      %v3700 = vsel %vm587, %v3698, %v3694
      %v3701 = vshrl.u32 %v3578, 16
      %v3703 = vshll.u32 %v3578, 16
      %v3705 = vrot.slane %v3703, 1
      %v3706 = vor.u32 %v3701, %v3705
      %v3707 = vshll.u32 %v3700, 16
      %v3709 = vrot.slane %v3707, 1
      %v3710 = vsel %vm388, %v3706, %v3709
      %s3711 = scalar_lea.vmem %s2, 24
      %v3712 = vld [vmem:[%s3711] sm:$0xf]
      %v3713 = vld [vmem:[%s3711 + $0x4] sm:$0xf]
      %v3716 = vunpack.c.l.b16 %v3712
      %v3717 = vunpack.c.l.b16 %v3713
      %v3718 = vpack.c.b16 %v3717, %v3716
      %v3721 = vsel %vm612, %v3710, 0
      %3723 = vmatprep.subr.bf16.mxu0 0
      %3724 = vmatpush1.bf16.msra.mxu0 %v3718
      %3725 = vmatprep.subr.bf16.mxu0 0
      %3726 = vmatpush1.bf16.msra.mxu0 0
      %3727 = vmatprep.subr.bf16.mxu0 0
      %3728 = vmatpush1.bf16.msra.mxu0 0
      %3729 = vmatprep.subr.bf16.mxu0 0
      %3730 = vmatpush1.bf16.msra.mxu0 0
      %3731 = vmatprep.subr.bf16.mxu0 0
      %3732 = vmatpush1.bf16.msra.mxu0 0
      %3733 = vmatprep.subr.bf16.mxu0 0
      %3734 = vmatpush1.bf16.msra.mxu0 0
      %3735 = vmatprep.subr.bf16.mxu0 0
      %3736 = vmatpush1.bf16.msra.mxu0 0
      %3737 = vmatprep.subr.bf16.mxu0 0
      %3738 = vmatpush1.bf16.msra.mxu0 0
      %3739 = vmatprep.subr.bf16.mxu0 0
      %3740 = vmatpush1.bf16.msra.mxu0 0
      %3741 = vmatprep.subr.bf16.mxu0 0
      %3742 = vmatpush1.bf16.msra.mxu0 0
      %3743 = vmatprep.subr.bf16.mxu0 0
      %3744 = vmatpush1.bf16.msra.mxu0 0
      %3745 = vmatprep.subr.bf16.mxu0 0
      %3746 = vmatpush1.bf16.msra.mxu0 0
      %3747 = vmatprep.subr.bf16.mxu0 0
      %3748 = vmatpush1.bf16.msra.mxu0 0
      %3749 = vmatprep.subr.bf16.mxu0 0
      %3750 = vmatpush1.bf16.msra.mxu0 0
      %3751 = vmatprep.subr.bf16.mxu0 0
      %3752 = vmatpush1.bf16.msra.mxu0 0
      %3753 = vmatprep.subr.bf16.mxu0 0
      %3754 = vmatpush1.bf16.msra.mxu0 0
      %3755 = vmatprep.mubr.bf16.mxu0 0
      %3756 = vmatmul.mubr.bf16.gmra.mrb[0].mxu0 %v933
      %v3757 = vpop.f32.mrb[0].mxu0
      %v3758 = vadd.f32 0.0, %v3757
      %v3759 = vpop.f32.mrb[0].mxu0
      %v3760 = vpop.f32.mrb[0].mxu0
      %v3761 = vadd.f32 0.0, %v3760
      %v3762 = vpop.f32.mrb[0].mxu0
      %3763 = vmatprep.mubr.bf16.mxu0 0
      %3764 = vmatmul.mubr.bf16.gmra.mrb[0].mxu0 %v936
      %v3765 = vpop.f32.mrb[0].mxu0
      %v3766 = vadd.f32 0.0, %v3765
      %v3767 = vpop.f32.mrb[0].mxu0
      %v3768 = vpop.f32.mrb[0].mxu0
      %v3769 = vadd.f32 0.0, %v3768
      %v3770 = vpop.f32.mrb[0].mxu0
      %3771 = vmatprep.mubr.bf16.mxu0 0
      %3772 = vmatmul.mubr.bf16.gmra.mrb[0].mxu0 %v939
      %v3773 = vpop.f32.mrb[0].mxu0
      %v3774 = vadd.f32 0.0, %v3773
      %v3775 = vpop.f32.mrb[0].mxu0
      %v3776 = vpop.f32.mrb[0].mxu0
      %v3777 = vadd.f32 0.0, %v3776
      %v3778 = vpop.f32.mrb[0].mxu0
      %3779 = vmatprep.mubr.bf16.mxu0 0
      %3780 = vmatmul.mubr.bf16.gmra.mrb[0].mxu0 %v942
      %v3781 = vpop.f32.mrb[0].mxu0
      %v3782 = vadd.f32 0.0, %v3781
      %v3783 = vpop.f32.mrb[0].mxu0
      %v3784 = vpop.f32.mrb[0].mxu0
      %v3785 = vadd.f32 0.0, %v3784
      %v3786 = vpop.f32.mrb[0].mxu0
      %3787 = vmatprep.mubr.bf16.mxu0 0
      %3788 = vmatmul.mubr.bf16.gmra.mrb[0].mxu0 %v945
      %v3789 = vpop.f32.mrb[0].mxu0
      %v3790 = vadd.f32 0.0, %v3789
      %v3791 = vpop.f32.mrb[0].mxu0
      %v3792 = vpop.f32.mrb[0].mxu0
      %v3793 = vadd.f32 0.0, %v3792
      %v3794 = vpop.f32.mrb[0].mxu0
      %3795 = vmatprep.mubr.bf16.mxu0 0
      %3796 = vmatmul.mubr.bf16.gmra.mrb[0].mxu0 %v948
      %v3797 = vpop.f32.mrb[0].mxu0
      %v3798 = vadd.f32 0.0, %v3797
      %v3799 = vpop.f32.mrb[0].mxu0
      %v3800 = vpop.f32.mrb[0].mxu0
      %v3801 = vadd.f32 0.0, %v3800
      %v3802 = vpop.f32.mrb[0].mxu0
      %3803 = vmatprep.mubr.bf16.mxu0 0
      %3804 = vmatmul.mubr.bf16.gmra.mrb[0].mxu0 %v951
      %v3805 = vpop.f32.mrb[0].mxu0
      %v3806 = vadd.f32 0.0, %v3805
      %v3807 = vpop.f32.mrb[0].mxu0
      %v3808 = vpop.f32.mrb[0].mxu0
      %v3809 = vadd.f32 0.0, %v3808
      %v3810 = vpop.f32.mrb[0].mxu0
      %3811 = vmatprep.mubr.bf16.mxu0 0
      %3812 = vmatmul.mubr.bf16.gmra.mrb[0].mxu0 %v3721
      %v3813 = vpop.f32.mrb[0].mxu0
      %v3814 = vadd.f32 0.0, %v3813
      %v3815 = vpop.f32.mrb[0].mxu0
      %v3816 = vpop.f32.mrb[0].mxu0
      %v3817 = vadd.f32 0.0, %v3816
      %v3818 = vpop.f32.mrb[0].mxu0
      %3819 = vdwg.mxu0
      %v3836 = vcombine.high %v3625, %v3625
      %v3838 = vunpack.c.l.s4 1966171168
      %v3839 = vunpack.c.0.s8 %v3838
      %v3840 = vlaneseq
      %v3841 = vshrl.u32 %v3840, 7
      %v3842 = vsub.s32 %v3839, %v3841
      %v3843 = vrot.slane %v3625, %v3842
      %v3845 = vunpack.c.l.s4 1966171168
      %v3846 = vunpack.c.0.s8 %v3845
      %v3847 = vlaneseq
      %v3848 = vshrl.u32 %v3847, 7
      %v3849 = vsub.s32 %v3846, %v3848
      %v3850 = vrot.slane %v3836, %v3849
      %v3851 = vcombine.high %v3843, %v3843
      %v3852 = vcombine.high %v3850, %v3850
      %v3854 = vunpack.c.l.s4 1966171168
      %v3855 = vunpack.c.0.s8 %v3854
      %v3856 = vlaneseq
      %v3857 = vshrl.u32 %v3856, 7
      %v3858 = vsub.s32 %v3855, %v3857
      %v3859 = vrot.slane %v3843, %v3858
      %v3861 = vunpack.c.l.s4 1966171168
      %v3862 = vunpack.c.0.s8 %v3861
      %v3863 = vlaneseq
      %v3864 = vshrl.u32 %v3863, 7
      %v3865 = vsub.s32 %v3862, %v3864
      %v3866 = vrot.slane %v3850, %v3865
      %v3868 = vunpack.c.l.s4 1966171168
      %v3869 = vunpack.c.0.s8 %v3868
      %v3870 = vlaneseq
      %v3871 = vshrl.u32 %v3870, 7
      %v3872 = vsub.s32 %v3869, %v3871
      %v3873 = vrot.slane %v3851, %v3872
      %v3875 = vunpack.c.l.s4 1966171168
      %v3876 = vunpack.c.0.s8 %v3875
      %v3877 = vlaneseq
      %v3878 = vshrl.u32 %v3877, 7
      %v3879 = vsub.s32 %v3876, %v3878
      %v3880 = vrot.slane %v3852, %v3879
      %v3881 = vcombine.high %v3859, %v3859
      %v3882 = vcombine.high %v3866, %v3866
      %v3883 = vcombine.high %v3873, %v3873
      %v3884 = vcombine.high %v3880, %v3880
      %v3885 = vcombine.high %v3628, %v3628
      %v3887 = vunpack.c.l.s4 1966171168
      %v3888 = vunpack.c.0.s8 %v3887
      %v3889 = vlaneseq
      %v3890 = vshrl.u32 %v3889, 7
      %v3891 = vsub.s32 %v3888, %v3890
      %v3892 = vrot.slane %v3628, %v3891
      %v3894 = vunpack.c.l.s4 1966171168
      %v3895 = vunpack.c.0.s8 %v3894
      %v3896 = vlaneseq
      %v3897 = vshrl.u32 %v3896, 7
      %v3898 = vsub.s32 %v3895, %v3897
      %v3899 = vrot.slane %v3885, %v3898
      %v3900 = vcombine.high %v3892, %v3892
      %v3901 = vcombine.high %v3899, %v3899
      %v3903 = vunpack.c.l.s4 1966171168
      %v3904 = vunpack.c.0.s8 %v3903
      %v3905 = vlaneseq
      %v3906 = vshrl.u32 %v3905, 7
      %v3907 = vsub.s32 %v3904, %v3906
      %v3908 = vrot.slane %v3892, %v3907
      %v3910 = vunpack.c.l.s4 1966171168
      %v3911 = vunpack.c.0.s8 %v3910
      %v3912 = vlaneseq
      %v3913 = vshrl.u32 %v3912, 7
      %v3914 = vsub.s32 %v3911, %v3913
      %v3915 = vrot.slane %v3899, %v3914
      %v3917 = vunpack.c.l.s4 1966171168
      %v3918 = vunpack.c.0.s8 %v3917
      %v3919 = vlaneseq
      %v3920 = vshrl.u32 %v3919, 7
      %v3921 = vsub.s32 %v3918, %v3920
      %v3922 = vrot.slane %v3900, %v3921
      %v3924 = vunpack.c.l.s4 1966171168
      %v3925 = vunpack.c.0.s8 %v3924
      %v3926 = vlaneseq
      %v3927 = vshrl.u32 %v3926, 7
      %v3928 = vsub.s32 %v3925, %v3927
      %v3929 = vrot.slane %v3901, %v3928
      %v3930 = vcombine.high %v3908, %v3908
      %v3931 = vcombine.high %v3915, %v3915
      %v3932 = vcombine.high %v3922, %v3922
      %v3933 = vcombine.high %v3929, %v3929
      %v3934 = vcombine.high %v3633, %v3633
      %v3936 = vunpack.c.l.s4 1966171168
      %v3937 = vunpack.c.0.s8 %v3936
      %v3938 = vlaneseq
      %v3939 = vshrl.u32 %v3938, 7
      %v3940 = vsub.s32 %v3937, %v3939
      %v3941 = vrot.slane %v3633, %v3940
      %v3943 = vunpack.c.l.s4 1966171168
      %v3944 = vunpack.c.0.s8 %v3943
      %v3945 = vlaneseq
      %v3946 = vshrl.u32 %v3945, 7
      %v3947 = vsub.s32 %v3944, %v3946
      %v3948 = vrot.slane %v3934, %v3947
      %v3949 = vcombine.high %v3941, %v3941
      %v3950 = vcombine.high %v3948, %v3948
      %v3952 = vunpack.c.l.s4 1966171168
      %v3953 = vunpack.c.0.s8 %v3952
      %v3954 = vlaneseq
      %v3955 = vshrl.u32 %v3954, 7
      %v3956 = vsub.s32 %v3953, %v3955
      %v3957 = vrot.slane %v3941, %v3956
      %v3959 = vunpack.c.l.s4 1966171168
      %v3960 = vunpack.c.0.s8 %v3959
      %v3961 = vlaneseq
      %v3962 = vshrl.u32 %v3961, 7
      %v3963 = vsub.s32 %v3960, %v3962
      %v3964 = vrot.slane %v3948, %v3963
      %v3966 = vunpack.c.l.s4 1966171168
      %v3967 = vunpack.c.0.s8 %v3966
      %v3968 = vlaneseq
      %v3969 = vshrl.u32 %v3968, 7
      %v3970 = vsub.s32 %v3967, %v3969
      %v3971 = vrot.slane %v3949, %v3970
      %v3973 = vunpack.c.l.s4 1966171168
      %v3974 = vunpack.c.0.s8 %v3973
      %v3975 = vlaneseq
      %v3976 = vshrl.u32 %v3975, 7
      %v3977 = vsub.s32 %v3974, %v3976
      %v3978 = vrot.slane %v3950, %v3977
      %v3979 = vcombine.high %v3957, %v3957
      %v3980 = vcombine.high %v3964, %v3964
      %v3981 = vcombine.high %v3971, %v3971
      %v3982 = vcombine.high %v3978, %v3978
      %v3983 = vcombine.high %v3636, %v3636
      %v3985 = vunpack.c.l.s4 1966171168
      %v3986 = vunpack.c.0.s8 %v3985
      %v3987 = vlaneseq
      %v3988 = vshrl.u32 %v3987, 7
      %v3989 = vsub.s32 %v3986, %v3988
      %v3990 = vrot.slane %v3636, %v3989
      %v3992 = vunpack.c.l.s4 1966171168
      %v3993 = vunpack.c.0.s8 %v3992
      %v3994 = vlaneseq
      %v3995 = vshrl.u32 %v3994, 7
      %v3996 = vsub.s32 %v3993, %v3995
      %v3997 = vrot.slane %v3983, %v3996
      %v3998 = vcombine.high %v3990, %v3990
      %v3999 = vcombine.high %v3997, %v3997
      %v4001 = vunpack.c.l.s4 1966171168
      %v4002 = vunpack.c.0.s8 %v4001
      %v4003 = vlaneseq
      %v4004 = vshrl.u32 %v4003, 7
      %v4005 = vsub.s32 %v4002, %v4004
      %v4006 = vrot.slane %v3990, %v4005
      %v4008 = vunpack.c.l.s4 1966171168
      %v4009 = vunpack.c.0.s8 %v4008
      %v4010 = vlaneseq
      %v4011 = vshrl.u32 %v4010, 7
      %v4012 = vsub.s32 %v4009, %v4011
      %v4013 = vrot.slane %v3997, %v4012
      %v4015 = vunpack.c.l.s4 1966171168
      %v4016 = vunpack.c.0.s8 %v4015
      %v4017 = vlaneseq
      %v4018 = vshrl.u32 %v4017, 7
      %v4019 = vsub.s32 %v4016, %v4018
      %v4020 = vrot.slane %v3998, %v4019
      %v4022 = vunpack.c.l.s4 1966171168
      %v4023 = vunpack.c.0.s8 %v4022
      %v4024 = vlaneseq
      %v4025 = vshrl.u32 %v4024, 7
      %v4026 = vsub.s32 %v4023, %v4025
      %v4027 = vrot.slane %v3999, %v4026
      %v4028 = vcombine.high %v4006, %v4006
      %v4029 = vcombine.high %v4013, %v4013
      %v4030 = vcombine.high %v4020, %v4020
      %v4031 = vcombine.high %v4027, %v4027
      %v4032 = vcombine.high %v3641, %v3641
      %v4034 = vunpack.c.l.s4 1966171168
      %v4035 = vunpack.c.0.s8 %v4034
      %v4036 = vlaneseq
      %v4037 = vshrl.u32 %v4036, 7
      %v4038 = vsub.s32 %v4035, %v4037
      %v4039 = vrot.slane %v3641, %v4038
      %v4041 = vunpack.c.l.s4 1966171168
      %v4042 = vunpack.c.0.s8 %v4041
      %v4043 = vlaneseq
      %v4044 = vshrl.u32 %v4043, 7
      %v4045 = vsub.s32 %v4042, %v4044
      %v4046 = vrot.slane %v4032, %v4045
      %v4047 = vcombine.high %v4039, %v4039
      %v4048 = vcombine.high %v4046, %v4046
      %v4050 = vunpack.c.l.s4 1966171168
      %v4051 = vunpack.c.0.s8 %v4050
      %v4052 = vlaneseq
      %v4053 = vshrl.u32 %v4052, 7
      %v4054 = vsub.s32 %v4051, %v4053
      %v4055 = vrot.slane %v4039, %v4054
      %v4057 = vunpack.c.l.s4 1966171168
      %v4058 = vunpack.c.0.s8 %v4057
      %v4059 = vlaneseq
      %v4060 = vshrl.u32 %v4059, 7
      %v4061 = vsub.s32 %v4058, %v4060
      %v4062 = vrot.slane %v4046, %v4061
      %v4064 = vunpack.c.l.s4 1966171168
      %v4065 = vunpack.c.0.s8 %v4064
      %v4066 = vlaneseq
      %v4067 = vshrl.u32 %v4066, 7
      %v4068 = vsub.s32 %v4065, %v4067
      %v4069 = vrot.slane %v4047, %v4068
      %v4071 = vunpack.c.l.s4 1966171168
      %v4072 = vunpack.c.0.s8 %v4071
      %v4073 = vlaneseq
      %v4074 = vshrl.u32 %v4073, 7
      %v4075 = vsub.s32 %v4072, %v4074
      %v4076 = vrot.slane %v4048, %v4075
      %v4077 = vcombine.high %v4055, %v4055
      %v4078 = vcombine.high %v4062, %v4062
      %v4079 = vcombine.high %v4069, %v4069
      %v4080 = vcombine.high %v4076, %v4076
      %v4081 = vcombine.high %v3644, %v3644
      %v4083 = vunpack.c.l.s4 1966171168
      %v4084 = vunpack.c.0.s8 %v4083
      %v4085 = vlaneseq
      %v4086 = vshrl.u32 %v4085, 7
      %v4087 = vsub.s32 %v4084, %v4086
      %v4088 = vrot.slane %v3644, %v4087
      %v4090 = vunpack.c.l.s4 1966171168
      %v4091 = vunpack.c.0.s8 %v4090
      %v4092 = vlaneseq
      %v4093 = vshrl.u32 %v4092, 7
      %v4094 = vsub.s32 %v4091, %v4093
      %v4095 = vrot.slane %v4081, %v4094
      %v4096 = vcombine.high %v4088, %v4088
      %v4097 = vcombine.high %v4095, %v4095
      %v4099 = vunpack.c.l.s4 1966171168
      %v4100 = vunpack.c.0.s8 %v4099
      %v4101 = vlaneseq
      %v4102 = vshrl.u32 %v4101, 7
      %v4103 = vsub.s32 %v4100, %v4102
      %v4104 = vrot.slane %v4088, %v4103
      %v4106 = vunpack.c.l.s4 1966171168
      %v4107 = vunpack.c.0.s8 %v4106
      %v4108 = vlaneseq
      %v4109 = vshrl.u32 %v4108, 7
      %v4110 = vsub.s32 %v4107, %v4109
      %v4111 = vrot.slane %v4095, %v4110
      %v4113 = vunpack.c.l.s4 1966171168
      %v4114 = vunpack.c.0.s8 %v4113
      %v4115 = vlaneseq
      %v4116 = vshrl.u32 %v4115, 7
      %v4117 = vsub.s32 %v4114, %v4116
      %v4118 = vrot.slane %v4096, %v4117
      %v4120 = vunpack.c.l.s4 1966171168
      %v4121 = vunpack.c.0.s8 %v4120
      %v4122 = vlaneseq
      %v4123 = vshrl.u32 %v4122, 7
      %v4124 = vsub.s32 %v4121, %v4123
      %v4125 = vrot.slane %v4097, %v4124
      %v4126 = vcombine.high %v4104, %v4104
      %v4127 = vcombine.high %v4111, %v4111
      %v4128 = vcombine.high %v4118, %v4118
      %v4129 = vcombine.high %v4125, %v4125
      %v4130 = vcombine.high %v3649, %v3649
      %v4132 = vunpack.c.l.s4 1966171168
      %v4133 = vunpack.c.0.s8 %v4132
      %v4134 = vlaneseq
      %v4135 = vshrl.u32 %v4134, 7
      %v4136 = vsub.s32 %v4133, %v4135
      %v4137 = vrot.slane %v3649, %v4136
      %v4139 = vunpack.c.l.s4 1966171168
      %v4140 = vunpack.c.0.s8 %v4139
      %v4141 = vlaneseq
      %v4142 = vshrl.u32 %v4141, 7
      %v4143 = vsub.s32 %v4140, %v4142
      %v4144 = vrot.slane %v4130, %v4143
      %v4145 = vcombine.high %v4137, %v4137
      %v4146 = vcombine.high %v4144, %v4144
      %v4148 = vunpack.c.l.s4 1966171168
      %v4149 = vunpack.c.0.s8 %v4148
      %v4150 = vlaneseq
      %v4151 = vshrl.u32 %v4150, 7
      %v4152 = vsub.s32 %v4149, %v4151
      %v4153 = vrot.slane %v4137, %v4152
      %v4155 = vunpack.c.l.s4 1966171168
      %v4156 = vunpack.c.0.s8 %v4155
      %v4157 = vlaneseq
      %v4158 = vshrl.u32 %v4157, 7
      %v4159 = vsub.s32 %v4156, %v4158
      %v4160 = vrot.slane %v4144, %v4159
      %v4162 = vunpack.c.l.s4 1966171168
      %v4163 = vunpack.c.0.s8 %v4162
      %v4164 = vlaneseq
      %v4165 = vshrl.u32 %v4164, 7
      %v4166 = vsub.s32 %v4163, %v4165
      %v4167 = vrot.slane %v4145, %v4166
      %v4169 = vunpack.c.l.s4 1966171168
      %v4170 = vunpack.c.0.s8 %v4169
      %v4171 = vlaneseq
      %v4172 = vshrl.u32 %v4171, 7
      %v4173 = vsub.s32 %v4170, %v4172
      %v4174 = vrot.slane %v4146, %v4173
      %v4175 = vcombine.high %v4153, %v4153
      %v4176 = vcombine.high %v4160, %v4160
      %v4177 = vcombine.high %v4167, %v4167
      %v4178 = vcombine.high %v4174, %v4174
      %v4179 = vcombine.high %v3652, %v3652
      %v4181 = vunpack.c.l.s4 1966171168
      %v4182 = vunpack.c.0.s8 %v4181
      %v4183 = vlaneseq
      %v4184 = vshrl.u32 %v4183, 7
      %v4185 = vsub.s32 %v4182, %v4184
      %v4186 = vrot.slane %v3652, %v4185
      %v4188 = vunpack.c.l.s4 1966171168
      %v4189 = vunpack.c.0.s8 %v4188
      %v4190 = vlaneseq
      %v4191 = vshrl.u32 %v4190, 7
      %v4192 = vsub.s32 %v4189, %v4191
      %v4193 = vrot.slane %v4179, %v4192
      %v4194 = vcombine.high %v4186, %v4186
      %v4195 = vcombine.high %v4193, %v4193
      %v4197 = vunpack.c.l.s4 1966171168
      %v4198 = vunpack.c.0.s8 %v4197
      %v4199 = vlaneseq
      %v4200 = vshrl.u32 %v4199, 7
      %v4201 = vsub.s32 %v4198, %v4200
      %v4202 = vrot.slane %v4186, %v4201
      %v4204 = vunpack.c.l.s4 1966171168
      %v4205 = vunpack.c.0.s8 %v4204
      %v4206 = vlaneseq
      %v4207 = vshrl.u32 %v4206, 7
      %v4208 = vsub.s32 %v4205, %v4207
      %v4209 = vrot.slane %v4193, %v4208
      %v4211 = vunpack.c.l.s4 1966171168
      %v4212 = vunpack.c.0.s8 %v4211
      %v4213 = vlaneseq
      %v4214 = vshrl.u32 %v4213, 7
      %v4215 = vsub.s32 %v4212, %v4214
      %v4216 = vrot.slane %v4194, %v4215
      %v4218 = vunpack.c.l.s4 1966171168
      %v4219 = vunpack.c.0.s8 %v4218
      %v4220 = vlaneseq
      %v4221 = vshrl.u32 %v4220, 7
      %v4222 = vsub.s32 %v4219, %v4221
      %v4223 = vrot.slane %v4195, %v4222
      %v4224 = vcombine.high %v4202, %v4202
      %v4225 = vcombine.high %v4209, %v4209
      %v4226 = vcombine.high %v4216, %v4216
      %v4227 = vcombine.high %v4223, %v4223
      %v4228 = vcombine.high %v3657, %v3657
      %v4230 = vunpack.c.l.s4 1966171168
      %v4231 = vunpack.c.0.s8 %v4230
      %v4232 = vlaneseq
      %v4233 = vshrl.u32 %v4232, 7
      %v4234 = vsub.s32 %v4231, %v4233
      %v4235 = vrot.slane %v3657, %v4234
      %v4237 = vunpack.c.l.s4 1966171168
      %v4238 = vunpack.c.0.s8 %v4237
      %v4239 = vlaneseq
      %v4240 = vshrl.u32 %v4239, 7
      %v4241 = vsub.s32 %v4238, %v4240
      %v4242 = vrot.slane %v4228, %v4241
      %v4243 = vcombine.high %v4235, %v4235
      %v4244 = vcombine.high %v4242, %v4242
      %v4246 = vunpack.c.l.s4 1966171168
      %v4247 = vunpack.c.0.s8 %v4246
      %v4248 = vlaneseq
      %v4249 = vshrl.u32 %v4248, 7
      %v4250 = vsub.s32 %v4247, %v4249
      %v4251 = vrot.slane %v4235, %v4250
      %v4253 = vunpack.c.l.s4 1966171168
      %v4254 = vunpack.c.0.s8 %v4253
      %v4255 = vlaneseq
      %v4256 = vshrl.u32 %v4255, 7
      %v4257 = vsub.s32 %v4254, %v4256
      %v4258 = vrot.slane %v4242, %v4257
      %v4260 = vunpack.c.l.s4 1966171168
      %v4261 = vunpack.c.0.s8 %v4260
      %v4262 = vlaneseq
      %v4263 = vshrl.u32 %v4262, 7
      %v4264 = vsub.s32 %v4261, %v4263
      %v4265 = vrot.slane %v4243, %v4264
      %v4267 = vunpack.c.l.s4 1966171168
      %v4268 = vunpack.c.0.s8 %v4267
      %v4269 = vlaneseq
      %v4270 = vshrl.u32 %v4269, 7
      %v4271 = vsub.s32 %v4268, %v4270
      %v4272 = vrot.slane %v4244, %v4271
      %v4273 = vcombine.high %v4251, %v4251
      %v4274 = vcombine.high %v4258, %v4258
      %v4275 = vcombine.high %v4265, %v4265
      %v4276 = vcombine.high %v4272, %v4272
      %v4277 = vcombine.high %v3660, %v3660
      %v4279 = vunpack.c.l.s4 1966171168
      %v4280 = vunpack.c.0.s8 %v4279
      %v4281 = vlaneseq
      %v4282 = vshrl.u32 %v4281, 7
      %v4283 = vsub.s32 %v4280, %v4282
      %v4284 = vrot.slane %v3660, %v4283
      %v4286 = vunpack.c.l.s4 1966171168
      %v4287 = vunpack.c.0.s8 %v4286
      %v4288 = vlaneseq
      %v4289 = vshrl.u32 %v4288, 7
      %v4290 = vsub.s32 %v4287, %v4289
      %v4291 = vrot.slane %v4277, %v4290
      %v4292 = vcombine.high %v4284, %v4284
      %v4293 = vcombine.high %v4291, %v4291
      %v4295 = vunpack.c.l.s4 1966171168
      %v4296 = vunpack.c.0.s8 %v4295
      %v4297 = vlaneseq
      %v4298 = vshrl.u32 %v4297, 7
      %v4299 = vsub.s32 %v4296, %v4298
      %v4300 = vrot.slane %v4284, %v4299
      %v4302 = vunpack.c.l.s4 1966171168
      %v4303 = vunpack.c.0.s8 %v4302
      %v4304 = vlaneseq
      %v4305 = vshrl.u32 %v4304, 7
      %v4306 = vsub.s32 %v4303, %v4305
      %v4307 = vrot.slane %v4291, %v4306
      %v4309 = vunpack.c.l.s4 1966171168
      %v4310 = vunpack.c.0.s8 %v4309
      %v4311 = vlaneseq
      %v4312 = vshrl.u32 %v4311, 7
      %v4313 = vsub.s32 %v4310, %v4312
      %v4314 = vrot.slane %v4292, %v4313
      %v4316 = vunpack.c.l.s4 1966171168
      %v4317 = vunpack.c.0.s8 %v4316
      %v4318 = vlaneseq
      %v4319 = vshrl.u32 %v4318, 7
      %v4320 = vsub.s32 %v4317, %v4319
      %v4321 = vrot.slane %v4293, %v4320
      %v4322 = vcombine.high %v4300, %v4300
      %v4323 = vcombine.high %v4307, %v4307
      %v4324 = vcombine.high %v4314, %v4314
      %v4325 = vcombine.high %v4321, %v4321
      %v4326 = vcombine.high %v3665, %v3665
      %v4328 = vunpack.c.l.s4 1966171168
      %v4329 = vunpack.c.0.s8 %v4328
      %v4330 = vlaneseq
      %v4331 = vshrl.u32 %v4330, 7
      %v4332 = vsub.s32 %v4329, %v4331
      %v4333 = vrot.slane %v3665, %v4332
      %v4335 = vunpack.c.l.s4 1966171168
      %v4336 = vunpack.c.0.s8 %v4335
      %v4337 = vlaneseq
      %v4338 = vshrl.u32 %v4337, 7
      %v4339 = vsub.s32 %v4336, %v4338
      %v4340 = vrot.slane %v4326, %v4339
      %v4341 = vcombine.high %v4333, %v4333
      %v4342 = vcombine.high %v4340, %v4340
      %v4344 = vunpack.c.l.s4 1966171168
      %v4345 = vunpack.c.0.s8 %v4344
      %v4346 = vlaneseq
      %v4347 = vshrl.u32 %v4346, 7
      %v4348 = vsub.s32 %v4345, %v4347
      %v4349 = vrot.slane %v4333, %v4348
      %v4351 = vunpack.c.l.s4 1966171168
      %v4352 = vunpack.c.0.s8 %v4351
      %v4353 = vlaneseq
      %v4354 = vshrl.u32 %v4353, 7
      %v4355 = vsub.s32 %v4352, %v4354
      %v4356 = vrot.slane %v4340, %v4355
      %v4358 = vunpack.c.l.s4 1966171168
      %v4359 = vunpack.c.0.s8 %v4358
      %v4360 = vlaneseq
      %v4361 = vshrl.u32 %v4360, 7
      %v4362 = vsub.s32 %v4359, %v4361
      %v4363 = vrot.slane %v4341, %v4362
      %v4365 = vunpack.c.l.s4 1966171168
      %v4366 = vunpack.c.0.s8 %v4365
      %v4367 = vlaneseq
      %v4368 = vshrl.u32 %v4367, 7
      %v4369 = vsub.s32 %v4366, %v4368
      %v4370 = vrot.slane %v4342, %v4369
      %v4371 = vcombine.high %v4349, %v4349
      %v4372 = vcombine.high %v4356, %v4356
      %v4373 = vcombine.high %v4363, %v4363
      %v4374 = vcombine.high %v4370, %v4370
      %v4375 = vcombine.high %v3668, %v3668
      %v4377 = vunpack.c.l.s4 1966171168
      %v4378 = vunpack.c.0.s8 %v4377
      %v4379 = vlaneseq
      %v4380 = vshrl.u32 %v4379, 7
      %v4381 = vsub.s32 %v4378, %v4380
      %v4382 = vrot.slane %v3668, %v4381
      %v4384 = vunpack.c.l.s4 1966171168
      %v4385 = vunpack.c.0.s8 %v4384
      %v4386 = vlaneseq
      %v4387 = vshrl.u32 %v4386, 7
      %v4388 = vsub.s32 %v4385, %v4387
      %v4389 = vrot.slane %v4375, %v4388
      %v4390 = vcombine.high %v4382, %v4382
      %v4391 = vcombine.high %v4389, %v4389
      %v4393 = vunpack.c.l.s4 1966171168
      %v4394 = vunpack.c.0.s8 %v4393
      %v4395 = vlaneseq
      %v4396 = vshrl.u32 %v4395, 7
      %v4397 = vsub.s32 %v4394, %v4396
      %v4398 = vrot.slane %v4382, %v4397
      %v4400 = vunpack.c.l.s4 1966171168
      %v4401 = vunpack.c.0.s8 %v4400
      %v4402 = vlaneseq
      %v4403 = vshrl.u32 %v4402, 7
      %v4404 = vsub.s32 %v4401, %v4403
      %v4405 = vrot.slane %v4389, %v4404
      %v4407 = vunpack.c.l.s4 1966171168
      %v4408 = vunpack.c.0.s8 %v4407
      %v4409 = vlaneseq
      %v4410 = vshrl.u32 %v4409, 7
      %v4411 = vsub.s32 %v4408, %v4410
      %v4412 = vrot.slane %v4390, %v4411
      %v4414 = vunpack.c.l.s4 1966171168
      %v4415 = vunpack.c.0.s8 %v4414
      %v4416 = vlaneseq
      %v4417 = vshrl.u32 %v4416, 7
      %v4418 = vsub.s32 %v4415, %v4417
      %v4419 = vrot.slane %v4391, %v4418
      %v4420 = vcombine.high %v4398, %v4398
      %v4421 = vcombine.high %v4405, %v4405
      %v4422 = vcombine.high %v4412, %v4412
      %v4423 = vcombine.high %v4419, %v4419
      %v4424 = vcombine.high %v3673, %v3673
      %v4426 = vunpack.c.l.s4 1966171168
      %v4427 = vunpack.c.0.s8 %v4426
      %v4428 = vlaneseq
      %v4429 = vshrl.u32 %v4428, 7
      %v4430 = vsub.s32 %v4427, %v4429
      %v4431 = vrot.slane %v3673, %v4430
      %v4433 = vunpack.c.l.s4 1966171168
      %v4434 = vunpack.c.0.s8 %v4433
      %v4435 = vlaneseq
      %v4436 = vshrl.u32 %v4435, 7
      %v4437 = vsub.s32 %v4434, %v4436
      %v4438 = vrot.slane %v4424, %v4437
      %v4439 = vcombine.high %v4431, %v4431
      %v4440 = vcombine.high %v4438, %v4438
      %v4442 = vunpack.c.l.s4 1966171168
      %v4443 = vunpack.c.0.s8 %v4442
      %v4444 = vlaneseq
      %v4445 = vshrl.u32 %v4444, 7
      %v4446 = vsub.s32 %v4443, %v4445
      %v4447 = vrot.slane %v4431, %v4446
      %v4449 = vunpack.c.l.s4 1966171168
      %v4450 = vunpack.c.0.s8 %v4449
      %v4451 = vlaneseq
      %v4452 = vshrl.u32 %v4451, 7
      %v4453 = vsub.s32 %v4450, %v4452
      %v4454 = vrot.slane %v4438, %v4453
      %v4456 = vunpack.c.l.s4 1966171168
      %v4457 = vunpack.c.0.s8 %v4456
      %v4458 = vlaneseq
      %v4459 = vshrl.u32 %v4458, 7
      %v4460 = vsub.s32 %v4457, %v4459
      %v4461 = vrot.slane %v4439, %v4460
      %v4463 = vunpack.c.l.s4 1966171168
      %v4464 = vunpack.c.0.s8 %v4463
      %v4465 = vlaneseq
      %v4466 = vshrl.u32 %v4465, 7
      %v4467 = vsub.s32 %v4464, %v4466
      %v4468 = vrot.slane %v4440, %v4467
      %v4469 = vcombine.high %v4447, %v4447
      %v4470 = vcombine.high %v4454, %v4454
      %v4471 = vcombine.high %v4461, %v4461
      %v4472 = vcombine.high %v4468, %v4468
      %v4473 = vcombine.high %v3676, %v3676
      %v4475 = vunpack.c.l.s4 1966171168
      %v4476 = vunpack.c.0.s8 %v4475
      %v4477 = vlaneseq
      %v4478 = vshrl.u32 %v4477, 7
      %v4479 = vsub.s32 %v4476, %v4478
      %v4480 = vrot.slane %v3676, %v4479
      %v4482 = vunpack.c.l.s4 1966171168
      %v4483 = vunpack.c.0.s8 %v4482
      %v4484 = vlaneseq
      %v4485 = vshrl.u32 %v4484, 7
      %v4486 = vsub.s32 %v4483, %v4485
      %v4487 = vrot.slane %v4473, %v4486
      %v4488 = vcombine.high %v4480, %v4480
      %v4489 = vcombine.high %v4487, %v4487
      %v4491 = vunpack.c.l.s4 1966171168
      %v4492 = vunpack.c.0.s8 %v4491
      %v4493 = vlaneseq
      %v4494 = vshrl.u32 %v4493, 7
      %v4495 = vsub.s32 %v4492, %v4494
      %v4496 = vrot.slane %v4480, %v4495
      %v4498 = vunpack.c.l.s4 1966171168
      %v4499 = vunpack.c.0.s8 %v4498
      %v4500 = vlaneseq
      %v4501 = vshrl.u32 %v4500, 7
      %v4502 = vsub.s32 %v4499, %v4501
      %v4503 = vrot.slane %v4487, %v4502
      %v4505 = vunpack.c.l.s4 1966171168
      %v4506 = vunpack.c.0.s8 %v4505
      %v4507 = vlaneseq
      %v4508 = vshrl.u32 %v4507, 7
      %v4509 = vsub.s32 %v4506, %v4508
      %v4510 = vrot.slane %v4488, %v4509
      %v4512 = vunpack.c.l.s4 1966171168
      %v4513 = vunpack.c.0.s8 %v4512
      %v4514 = vlaneseq
      %v4515 = vshrl.u32 %v4514, 7
      %v4516 = vsub.s32 %v4513, %v4515
      %v4517 = vrot.slane %v4489, %v4516
      %v4518 = vcombine.high %v4496, %v4496
      %v4519 = vcombine.high %v4503, %v4503
      %v4520 = vcombine.high %v4510, %v4510
      %v4521 = vcombine.high %v4517, %v4517
      %v4522 = vcombine.high %v3681, %v3681
      %v4524 = vunpack.c.l.s4 1966171168
      %v4525 = vunpack.c.0.s8 %v4524
      %v4526 = vlaneseq
      %v4527 = vshrl.u32 %v4526, 7
      %v4528 = vsub.s32 %v4525, %v4527
      %v4529 = vrot.slane %v3681, %v4528
      %v4531 = vunpack.c.l.s4 1966171168
      %v4532 = vunpack.c.0.s8 %v4531
      %v4533 = vlaneseq
      %v4534 = vshrl.u32 %v4533, 7
      %v4535 = vsub.s32 %v4532, %v4534
      %v4536 = vrot.slane %v4522, %v4535
      %v4537 = vcombine.high %v4529, %v4529
      %v4538 = vcombine.high %v4536, %v4536
      %v4540 = vunpack.c.l.s4 1966171168
      %v4541 = vunpack.c.0.s8 %v4540
      %v4542 = vlaneseq
      %v4543 = vshrl.u32 %v4542, 7
      %v4544 = vsub.s32 %v4541, %v4543
      %v4545 = vrot.slane %v4529, %v4544
      %v4547 = vunpack.c.l.s4 1966171168
      %v4548 = vunpack.c.0.s8 %v4547
      %v4549 = vlaneseq
      %v4550 = vshrl.u32 %v4549, 7
      %v4551 = vsub.s32 %v4548, %v4550
      %v4552 = vrot.slane %v4536, %v4551
      %v4554 = vunpack.c.l.s4 1966171168
      %v4555 = vunpack.c.0.s8 %v4554
      %v4556 = vlaneseq
      %v4557 = vshrl.u32 %v4556, 7
      %v4558 = vsub.s32 %v4555, %v4557
      %v4559 = vrot.slane %v4537, %v4558
      %v4561 = vunpack.c.l.s4 1966171168
      %v4562 = vunpack.c.0.s8 %v4561
      %v4563 = vlaneseq
      %v4564 = vshrl.u32 %v4563, 7
      %v4565 = vsub.s32 %v4562, %v4564
      %v4566 = vrot.slane %v4538, %v4565
      %v4567 = vcombine.high %v4545, %v4545
      %v4568 = vcombine.high %v4552, %v4552
      %v4569 = vcombine.high %v4559, %v4559
      %v4570 = vcombine.high %v4566, %v4566
      %v4571 = vcombine.high %v3684, %v3684
      %v4573 = vunpack.c.l.s4 1966171168
      %v4574 = vunpack.c.0.s8 %v4573
      %v4575 = vlaneseq
      %v4576 = vshrl.u32 %v4575, 7
      %v4577 = vsub.s32 %v4574, %v4576
      %v4578 = vrot.slane %v3684, %v4577
      %v4580 = vunpack.c.l.s4 1966171168
      %v4581 = vunpack.c.0.s8 %v4580
      %v4582 = vlaneseq
      %v4583 = vshrl.u32 %v4582, 7
      %v4584 = vsub.s32 %v4581, %v4583
      %v4585 = vrot.slane %v4571, %v4584
      %v4586 = vcombine.high %v4578, %v4578
      %v4587 = vcombine.high %v4585, %v4585
      %v4589 = vunpack.c.l.s4 1966171168
      %v4590 = vunpack.c.0.s8 %v4589
      %v4591 = vlaneseq
      %v4592 = vshrl.u32 %v4591, 7
      %v4593 = vsub.s32 %v4590, %v4592
      %v4594 = vrot.slane %v4578, %v4593
      %v4596 = vunpack.c.l.s4 1966171168
      %v4597 = vunpack.c.0.s8 %v4596
      %v4598 = vlaneseq
      %v4599 = vshrl.u32 %v4598, 7
      %v4600 = vsub.s32 %v4597, %v4599
      %v4601 = vrot.slane %v4585, %v4600
      %v4603 = vunpack.c.l.s4 1966171168
      %v4604 = vunpack.c.0.s8 %v4603
      %v4605 = vlaneseq
      %v4606 = vshrl.u32 %v4605, 7
      %v4607 = vsub.s32 %v4604, %v4606
      %v4608 = vrot.slane %v4586, %v4607
      %v4610 = vunpack.c.l.s4 1966171168
      %v4611 = vunpack.c.0.s8 %v4610
      %v4612 = vlaneseq
      %v4613 = vshrl.u32 %v4612, 7
      %v4614 = vsub.s32 %v4611, %v4613
      %v4615 = vrot.slane %v4587, %v4614
      %v4616 = vcombine.high %v4594, %v4594
      %v4617 = vcombine.high %v4601, %v4601
      %v4618 = vcombine.high %v4608, %v4608
      %v4619 = vcombine.high %v4615, %v4615
      %v4764 = vcombine.high %v3758, %v3758
      %v4766 = vunpack.c.l.s4 1966171168
      %v4767 = vunpack.c.0.s8 %v4766
      %v4768 = vlaneseq
      %v4769 = vshrl.u32 %v4768, 7
      %v4770 = vsub.s32 %v4767, %v4769
      %v4771 = vrot.slane %v3758, %v4770
      %v4773 = vunpack.c.l.s4 1966171168
      %v4774 = vunpack.c.0.s8 %v4773
      %v4775 = vlaneseq
      %v4776 = vshrl.u32 %v4775, 7
      %v4777 = vsub.s32 %v4774, %v4776
      %v4778 = vrot.slane %v4764, %v4777
      %v4779 = vcombine.high %v4771, %v4771
      %v4780 = vcombine.high %v4778, %v4778
      %v4782 = vunpack.c.l.s4 1966171168
      %v4783 = vunpack.c.0.s8 %v4782
      %v4784 = vlaneseq
      %v4785 = vshrl.u32 %v4784, 7
      %v4786 = vsub.s32 %v4783, %v4785
      %v4787 = vrot.slane %v4771, %v4786
      %v4789 = vunpack.c.l.s4 1966171168
      %v4790 = vunpack.c.0.s8 %v4789
      %v4791 = vlaneseq
      %v4792 = vshrl.u32 %v4791, 7
      %v4793 = vsub.s32 %v4790, %v4792
      %v4794 = vrot.slane %v4778, %v4793
      %v4796 = vunpack.c.l.s4 1966171168
      %v4797 = vunpack.c.0.s8 %v4796
      %v4798 = vlaneseq
      %v4799 = vshrl.u32 %v4798, 7
      %v4800 = vsub.s32 %v4797, %v4799
      %v4801 = vrot.slane %v4779, %v4800
      %v4803 = vunpack.c.l.s4 1966171168
      %v4804 = vunpack.c.0.s8 %v4803
      %v4805 = vlaneseq
      %v4806 = vshrl.u32 %v4805, 7
      %v4807 = vsub.s32 %v4804, %v4806
      %v4808 = vrot.slane %v4780, %v4807
      %v4809 = vcombine.high %v4787, %v4787
      %v4810 = vcombine.high %v4794, %v4794
      %v4811 = vcombine.high %v4801, %v4801
      %v4812 = vcombine.high %v4808, %v4808
      %v4813 = vcombine.high %v3761, %v3761
      %v4815 = vunpack.c.l.s4 1966171168
      %v4816 = vunpack.c.0.s8 %v4815
      %v4817 = vlaneseq
      %v4818 = vshrl.u32 %v4817, 7
      %v4819 = vsub.s32 %v4816, %v4818
      %v4820 = vrot.slane %v3761, %v4819
      %v4822 = vunpack.c.l.s4 1966171168
      %v4823 = vunpack.c.0.s8 %v4822
      %v4824 = vlaneseq
      %v4825 = vshrl.u32 %v4824, 7
      %v4826 = vsub.s32 %v4823, %v4825
      %v4827 = vrot.slane %v4813, %v4826
      %v4828 = vcombine.high %v4820, %v4820
      %v4829 = vcombine.high %v4827, %v4827
      %v4831 = vunpack.c.l.s4 1966171168
      %v4832 = vunpack.c.0.s8 %v4831
      %v4833 = vlaneseq
      %v4834 = vshrl.u32 %v4833, 7
      %v4835 = vsub.s32 %v4832, %v4834
      %v4836 = vrot.slane %v4820, %v4835
      %v4838 = vunpack.c.l.s4 1966171168
      %v4839 = vunpack.c.0.s8 %v4838
      %v4840 = vlaneseq
      %v4841 = vshrl.u32 %v4840, 7
      %v4842 = vsub.s32 %v4839, %v4841
      %v4843 = vrot.slane %v4827, %v4842
      %v4845 = vunpack.c.l.s4 1966171168
      %v4846 = vunpack.c.0.s8 %v4845
      %v4847 = vlaneseq
      %v4848 = vshrl.u32 %v4847, 7
      %v4849 = vsub.s32 %v4846, %v4848
      %v4850 = vrot.slane %v4828, %v4849
      %v4852 = vunpack.c.l.s4 1966171168
      %v4853 = vunpack.c.0.s8 %v4852
      %v4854 = vlaneseq
      %v4855 = vshrl.u32 %v4854, 7
      %v4856 = vsub.s32 %v4853, %v4855
      %v4857 = vrot.slane %v4829, %v4856
      %v4858 = vcombine.high %v4836, %v4836
      %v4859 = vcombine.high %v4843, %v4843
      %v4860 = vcombine.high %v4850, %v4850
      %v4861 = vcombine.high %v4857, %v4857
      %v4862 = vcombine.high %v3766, %v3766
      %v4864 = vunpack.c.l.s4 1966171168
      %v4865 = vunpack.c.0.s8 %v4864
      %v4866 = vlaneseq
      %v4867 = vshrl.u32 %v4866, 7
      %v4868 = vsub.s32 %v4865, %v4867
      %v4869 = vrot.slane %v3766, %v4868
      %v4871 = vunpack.c.l.s4 1966171168
      %v4872 = vunpack.c.0.s8 %v4871
      %v4873 = vlaneseq
      %v4874 = vshrl.u32 %v4873, 7
      %v4875 = vsub.s32 %v4872, %v4874
      %v4876 = vrot.slane %v4862, %v4875
      %v4877 = vcombine.high %v4869, %v4869
      %v4878 = vcombine.high %v4876, %v4876
      %v4880 = vunpack.c.l.s4 1966171168
      %v4881 = vunpack.c.0.s8 %v4880
      %v4882 = vlaneseq
      %v4883 = vshrl.u32 %v4882, 7
      %v4884 = vsub.s32 %v4881, %v4883
      %v4885 = vrot.slane %v4869, %v4884
      %v4887 = vunpack.c.l.s4 1966171168
      %v4888 = vunpack.c.0.s8 %v4887
      %v4889 = vlaneseq
      %v4890 = vshrl.u32 %v4889, 7
      %v4891 = vsub.s32 %v4888, %v4890
      %v4892 = vrot.slane %v4876, %v4891
      %v4894 = vunpack.c.l.s4 1966171168
      %v4895 = vunpack.c.0.s8 %v4894
      %v4896 = vlaneseq
      %v4897 = vshrl.u32 %v4896, 7
      %v4898 = vsub.s32 %v4895, %v4897
      %v4899 = vrot.slane %v4877, %v4898
      %v4901 = vunpack.c.l.s4 1966171168
      %v4902 = vunpack.c.0.s8 %v4901
      %v4903 = vlaneseq
      %v4904 = vshrl.u32 %v4903, 7
      %v4905 = vsub.s32 %v4902, %v4904
      %v4906 = vrot.slane %v4878, %v4905
      %v4907 = vcombine.high %v4885, %v4885
      %v4908 = vcombine.high %v4892, %v4892
      %v4909 = vcombine.high %v4899, %v4899
      %v4910 = vcombine.high %v4906, %v4906
      %v4911 = vcombine.high %v3769, %v3769
      %v4913 = vunpack.c.l.s4 1966171168
      %v4914 = vunpack.c.0.s8 %v4913
      %v4915 = vlaneseq
      %v4916 = vshrl.u32 %v4915, 7
      %v4917 = vsub.s32 %v4914, %v4916
      %v4918 = vrot.slane %v3769, %v4917
      %v4920 = vunpack.c.l.s4 1966171168
      %v4921 = vunpack.c.0.s8 %v4920
      %v4922 = vlaneseq
      %v4923 = vshrl.u32 %v4922, 7
      %v4924 = vsub.s32 %v4921, %v4923
      %v4925 = vrot.slane %v4911, %v4924
      %v4926 = vcombine.high %v4918, %v4918
      %v4927 = vcombine.high %v4925, %v4925
      %v4929 = vunpack.c.l.s4 1966171168
      %v4930 = vunpack.c.0.s8 %v4929
      %v4931 = vlaneseq
      %v4932 = vshrl.u32 %v4931, 7
      %v4933 = vsub.s32 %v4930, %v4932
      %v4934 = vrot.slane %v4918, %v4933
      %v4936 = vunpack.c.l.s4 1966171168
      %v4937 = vunpack.c.0.s8 %v4936
      %v4938 = vlaneseq
      %v4939 = vshrl.u32 %v4938, 7
      %v4940 = vsub.s32 %v4937, %v4939
      %v4941 = vrot.slane %v4925, %v4940
      %v4943 = vunpack.c.l.s4 1966171168
      %v4944 = vunpack.c.0.s8 %v4943
      %v4945 = vlaneseq
      %v4946 = vshrl.u32 %v4945, 7
      %v4947 = vsub.s32 %v4944, %v4946
      %v4948 = vrot.slane %v4926, %v4947
      %v4950 = vunpack.c.l.s4 1966171168
      %v4951 = vunpack.c.0.s8 %v4950
      %v4952 = vlaneseq
      %v4953 = vshrl.u32 %v4952, 7
      %v4954 = vsub.s32 %v4951, %v4953
      %v4955 = vrot.slane %v4927, %v4954
      %v4956 = vcombine.high %v4934, %v4934
      %v4957 = vcombine.high %v4941, %v4941
      %v4958 = vcombine.high %v4948, %v4948
      %v4959 = vcombine.high %v4955, %v4955
      %v4960 = vcombine.high %v3774, %v3774
      %v4962 = vunpack.c.l.s4 1966171168
      %v4963 = vunpack.c.0.s8 %v4962
      %v4964 = vlaneseq
      %v4965 = vshrl.u32 %v4964, 7
      %v4966 = vsub.s32 %v4963, %v4965
      %v4967 = vrot.slane %v3774, %v4966
      %v4969 = vunpack.c.l.s4 1966171168
      %v4970 = vunpack.c.0.s8 %v4969
      %v4971 = vlaneseq
      %v4972 = vshrl.u32 %v4971, 7
      %v4973 = vsub.s32 %v4970, %v4972
      %v4974 = vrot.slane %v4960, %v4973
      %v4975 = vcombine.high %v4967, %v4967
      %v4976 = vcombine.high %v4974, %v4974
      %v4978 = vunpack.c.l.s4 1966171168
      %v4979 = vunpack.c.0.s8 %v4978
      %v4980 = vlaneseq
      %v4981 = vshrl.u32 %v4980, 7
      %v4982 = vsub.s32 %v4979, %v4981
      %v4983 = vrot.slane %v4967, %v4982
      %v4985 = vunpack.c.l.s4 1966171168
      %v4986 = vunpack.c.0.s8 %v4985
      %v4987 = vlaneseq
      %v4988 = vshrl.u32 %v4987, 7
      %v4989 = vsub.s32 %v4986, %v4988
      %v4990 = vrot.slane %v4974, %v4989
      %v4992 = vunpack.c.l.s4 1966171168
      %v4993 = vunpack.c.0.s8 %v4992
      %v4994 = vlaneseq
      %v4995 = vshrl.u32 %v4994, 7
      %v4996 = vsub.s32 %v4993, %v4995
      %v4997 = vrot.slane %v4975, %v4996
      %v4999 = vunpack.c.l.s4 1966171168
      %v5000 = vunpack.c.0.s8 %v4999
      %v5001 = vlaneseq
      %v5002 = vshrl.u32 %v5001, 7
      %v5003 = vsub.s32 %v5000, %v5002
      %v5004 = vrot.slane %v4976, %v5003
      %v5005 = vcombine.high %v4983, %v4983
      %v5006 = vcombine.high %v4990, %v4990
      %v5007 = vcombine.high %v4997, %v4997
      %v5008 = vcombine.high %v5004, %v5004
      %v5009 = vcombine.high %v3777, %v3777
      %v5011 = vunpack.c.l.s4 1966171168
      %v5012 = vunpack.c.0.s8 %v5011
      %v5013 = vlaneseq
      %v5014 = vshrl.u32 %v5013, 7
      %v5015 = vsub.s32 %v5012, %v5014
      %v5016 = vrot.slane %v3777, %v5015
      %v5018 = vunpack.c.l.s4 1966171168
      %v5019 = vunpack.c.0.s8 %v5018
      %v5020 = vlaneseq
      %v5021 = vshrl.u32 %v5020, 7
      %v5022 = vsub.s32 %v5019, %v5021
      %v5023 = vrot.slane %v5009, %v5022
      %v5024 = vcombine.high %v5016, %v5016
      %v5025 = vcombine.high %v5023, %v5023
      %v5027 = vunpack.c.l.s4 1966171168
      %v5028 = vunpack.c.0.s8 %v5027
      %v5029 = vlaneseq
      %v5030 = vshrl.u32 %v5029, 7
      %v5031 = vsub.s32 %v5028, %v5030
      %v5032 = vrot.slane %v5016, %v5031
      %v5034 = vunpack.c.l.s4 1966171168
      %v5035 = vunpack.c.0.s8 %v5034
      %v5036 = vlaneseq
      %v5037 = vshrl.u32 %v5036, 7
      %v5038 = vsub.s32 %v5035, %v5037
      %v5039 = vrot.slane %v5023, %v5038
      %v5041 = vunpack.c.l.s4 1966171168
      %v5042 = vunpack.c.0.s8 %v5041
      %v5043 = vlaneseq
      %v5044 = vshrl.u32 %v5043, 7
      %v5045 = vsub.s32 %v5042, %v5044
      %v5046 = vrot.slane %v5024, %v5045
      %v5048 = vunpack.c.l.s4 1966171168
      %v5049 = vunpack.c.0.s8 %v5048
      %v5050 = vlaneseq
      %v5051 = vshrl.u32 %v5050, 7
      %v5052 = vsub.s32 %v5049, %v5051
      %v5053 = vrot.slane %v5025, %v5052
      %v5054 = vcombine.high %v5032, %v5032
      %v5055 = vcombine.high %v5039, %v5039
      %v5056 = vcombine.high %v5046, %v5046
      %v5057 = vcombine.high %v5053, %v5053
      %v5058 = vcombine.high %v3782, %v3782
      %v5060 = vunpack.c.l.s4 1966171168
      %v5061 = vunpack.c.0.s8 %v5060
      %v5062 = vlaneseq
      %v5063 = vshrl.u32 %v5062, 7
      %v5064 = vsub.s32 %v5061, %v5063
      %v5065 = vrot.slane %v3782, %v5064
      %v5067 = vunpack.c.l.s4 1966171168
      %v5068 = vunpack.c.0.s8 %v5067
      %v5069 = vlaneseq
      %v5070 = vshrl.u32 %v5069, 7
      %v5071 = vsub.s32 %v5068, %v5070
      %v5072 = vrot.slane %v5058, %v5071
      %v5073 = vcombine.high %v5065, %v5065
      %v5074 = vcombine.high %v5072, %v5072
      %v5076 = vunpack.c.l.s4 1966171168
      %v5077 = vunpack.c.0.s8 %v5076
      %v5078 = vlaneseq
      %v5079 = vshrl.u32 %v5078, 7
      %v5080 = vsub.s32 %v5077, %v5079
      %v5081 = vrot.slane %v5065, %v5080
      %v5083 = vunpack.c.l.s4 1966171168
      %v5084 = vunpack.c.0.s8 %v5083
      %v5085 = vlaneseq
      %v5086 = vshrl.u32 %v5085, 7
      %v5087 = vsub.s32 %v5084, %v5086
      %v5088 = vrot.slane %v5072, %v5087
      %v5090 = vunpack.c.l.s4 1966171168
      %v5091 = vunpack.c.0.s8 %v5090
      %v5092 = vlaneseq
      %v5093 = vshrl.u32 %v5092, 7
      %v5094 = vsub.s32 %v5091, %v5093
      %v5095 = vrot.slane %v5073, %v5094
      %v5097 = vunpack.c.l.s4 1966171168
      %v5098 = vunpack.c.0.s8 %v5097
      %v5099 = vlaneseq
      %v5100 = vshrl.u32 %v5099, 7
      %v5101 = vsub.s32 %v5098, %v5100
      %v5102 = vrot.slane %v5074, %v5101
      %v5103 = vcombine.high %v5081, %v5081
      %v5104 = vcombine.high %v5088, %v5088
      %v5105 = vcombine.high %v5095, %v5095
      %v5106 = vcombine.high %v5102, %v5102
      %v5107 = vcombine.high %v3785, %v3785
      %v5109 = vunpack.c.l.s4 1966171168
      %v5110 = vunpack.c.0.s8 %v5109
      %v5111 = vlaneseq
      %v5112 = vshrl.u32 %v5111, 7
      %v5113 = vsub.s32 %v5110, %v5112
      %v5114 = vrot.slane %v3785, %v5113
      %v5116 = vunpack.c.l.s4 1966171168
      %v5117 = vunpack.c.0.s8 %v5116
      %v5118 = vlaneseq
      %v5119 = vshrl.u32 %v5118, 7
      %v5120 = vsub.s32 %v5117, %v5119
      %v5121 = vrot.slane %v5107, %v5120
      %v5122 = vcombine.high %v5114, %v5114
      %v5123 = vcombine.high %v5121, %v5121
      %v5125 = vunpack.c.l.s4 1966171168
      %v5126 = vunpack.c.0.s8 %v5125
      %v5127 = vlaneseq
      %v5128 = vshrl.u32 %v5127, 7
      %v5129 = vsub.s32 %v5126, %v5128
      %v5130 = vrot.slane %v5114, %v5129
      %v5132 = vunpack.c.l.s4 1966171168
      %v5133 = vunpack.c.0.s8 %v5132
      %v5134 = vlaneseq
      %v5135 = vshrl.u32 %v5134, 7
      %v5136 = vsub.s32 %v5133, %v5135
      %v5137 = vrot.slane %v5121, %v5136
      %v5139 = vunpack.c.l.s4 1966171168
      %v5140 = vunpack.c.0.s8 %v5139
      %v5141 = vlaneseq
      %v5142 = vshrl.u32 %v5141, 7
      %v5143 = vsub.s32 %v5140, %v5142
      %v5144 = vrot.slane %v5122, %v5143
      %v5146 = vunpack.c.l.s4 1966171168
      %v5147 = vunpack.c.0.s8 %v5146
      %v5148 = vlaneseq
      %v5149 = vshrl.u32 %v5148, 7
      %v5150 = vsub.s32 %v5147, %v5149
      %v5151 = vrot.slane %v5123, %v5150
      %v5152 = vcombine.high %v5130, %v5130
      %v5153 = vcombine.high %v5137, %v5137
      %v5154 = vcombine.high %v5144, %v5144
      %v5155 = vcombine.high %v5151, %v5151
      %v5156 = vcombine.high %v3790, %v3790
      %v5158 = vunpack.c.l.s4 1966171168
      %v5159 = vunpack.c.0.s8 %v5158
      %v5160 = vlaneseq
      %v5161 = vshrl.u32 %v5160, 7
      %v5162 = vsub.s32 %v5159, %v5161
      %v5163 = vrot.slane %v3790, %v5162
      %v5165 = vunpack.c.l.s4 1966171168
      %v5166 = vunpack.c.0.s8 %v5165
      %v5167 = vlaneseq
      %v5168 = vshrl.u32 %v5167, 7
      %v5169 = vsub.s32 %v5166, %v5168
      %v5170 = vrot.slane %v5156, %v5169
      %v5171 = vcombine.high %v5163, %v5163
      %v5172 = vcombine.high %v5170, %v5170
      %v5174 = vunpack.c.l.s4 1966171168
      %v5175 = vunpack.c.0.s8 %v5174
      %v5176 = vlaneseq
      %v5177 = vshrl.u32 %v5176, 7
      %v5178 = vsub.s32 %v5175, %v5177
      %v5179 = vrot.slane %v5163, %v5178
      %v5181 = vunpack.c.l.s4 1966171168
      %v5182 = vunpack.c.0.s8 %v5181
      %v5183 = vlaneseq
      %v5184 = vshrl.u32 %v5183, 7
      %v5185 = vsub.s32 %v5182, %v5184
      %v5186 = vrot.slane %v5170, %v5185
      %v5188 = vunpack.c.l.s4 1966171168
      %v5189 = vunpack.c.0.s8 %v5188
      %v5190 = vlaneseq
      %v5191 = vshrl.u32 %v5190, 7
      %v5192 = vsub.s32 %v5189, %v5191
      %v5193 = vrot.slane %v5171, %v5192
      %v5195 = vunpack.c.l.s4 1966171168
      %v5196 = vunpack.c.0.s8 %v5195
      %v5197 = vlaneseq
      %v5198 = vshrl.u32 %v5197, 7
      %v5199 = vsub.s32 %v5196, %v5198
      %v5200 = vrot.slane %v5172, %v5199
      %v5201 = vcombine.high %v5179, %v5179
      %v5202 = vcombine.high %v5186, %v5186
      %v5203 = vcombine.high %v5193, %v5193
      %v5204 = vcombine.high %v5200, %v5200
      %v5205 = vcombine.high %v3793, %v3793
      %v5207 = vunpack.c.l.s4 1966171168
      %v5208 = vunpack.c.0.s8 %v5207
      %v5209 = vlaneseq
      %v5210 = vshrl.u32 %v5209, 7
      %v5211 = vsub.s32 %v5208, %v5210
      %v5212 = vrot.slane %v3793, %v5211
      %v5214 = vunpack.c.l.s4 1966171168
      %v5215 = vunpack.c.0.s8 %v5214
      %v5216 = vlaneseq
      %v5217 = vshrl.u32 %v5216, 7
      %v5218 = vsub.s32 %v5215, %v5217
      %v5219 = vrot.slane %v5205, %v5218
      %v5220 = vcombine.high %v5212, %v5212
      %v5221 = vcombine.high %v5219, %v5219
      %v5223 = vunpack.c.l.s4 1966171168
      %v5224 = vunpack.c.0.s8 %v5223
      %v5225 = vlaneseq
      %v5226 = vshrl.u32 %v5225, 7
      %v5227 = vsub.s32 %v5224, %v5226
      %v5228 = vrot.slane %v5212, %v5227
      %v5230 = vunpack.c.l.s4 1966171168
      %v5231 = vunpack.c.0.s8 %v5230
      %v5232 = vlaneseq
      %v5233 = vshrl.u32 %v5232, 7
      %v5234 = vsub.s32 %v5231, %v5233
      %v5235 = vrot.slane %v5219, %v5234
      %v5237 = vunpack.c.l.s4 1966171168
      %v5238 = vunpack.c.0.s8 %v5237
      %v5239 = vlaneseq
      %v5240 = vshrl.u32 %v5239, 7
      %v5241 = vsub.s32 %v5238, %v5240
      %v5242 = vrot.slane %v5220, %v5241
      %v5244 = vunpack.c.l.s4 1966171168
      %v5245 = vunpack.c.0.s8 %v5244
      %v5246 = vlaneseq
      %v5247 = vshrl.u32 %v5246, 7
      %v5248 = vsub.s32 %v5245, %v5247
      %v5249 = vrot.slane %v5221, %v5248
      %v5250 = vcombine.high %v5228, %v5228
      %v5251 = vcombine.high %v5235, %v5235
      %v5252 = vcombine.high %v5242, %v5242
      %v5253 = vcombine.high %v5249, %v5249
      %v5254 = vcombine.high %v3798, %v3798
      %v5256 = vunpack.c.l.s4 1966171168
      %v5257 = vunpack.c.0.s8 %v5256
      %v5258 = vlaneseq
      %v5259 = vshrl.u32 %v5258, 7
      %v5260 = vsub.s32 %v5257, %v5259
      %v5261 = vrot.slane %v3798, %v5260
      %v5263 = vunpack.c.l.s4 1966171168
      %v5264 = vunpack.c.0.s8 %v5263
      %v5265 = vlaneseq
      %v5266 = vshrl.u32 %v5265, 7
      %v5267 = vsub.s32 %v5264, %v5266
      %v5268 = vrot.slane %v5254, %v5267
      %v5269 = vcombine.high %v5261, %v5261
      %v5270 = vcombine.high %v5268, %v5268
      %v5272 = vunpack.c.l.s4 1966171168
      %v5273 = vunpack.c.0.s8 %v5272
      %v5274 = vlaneseq
      %v5275 = vshrl.u32 %v5274, 7
      %v5276 = vsub.s32 %v5273, %v5275
      %v5277 = vrot.slane %v5261, %v5276
      %v5279 = vunpack.c.l.s4 1966171168
      %v5280 = vunpack.c.0.s8 %v5279
      %v5281 = vlaneseq
      %v5282 = vshrl.u32 %v5281, 7
      %v5283 = vsub.s32 %v5280, %v5282
      %v5284 = vrot.slane %v5268, %v5283
      %v5286 = vunpack.c.l.s4 1966171168
      %v5287 = vunpack.c.0.s8 %v5286
      %v5288 = vlaneseq
      %v5289 = vshrl.u32 %v5288, 7
      %v5290 = vsub.s32 %v5287, %v5289
      %v5291 = vrot.slane %v5269, %v5290
      %v5293 = vunpack.c.l.s4 1966171168
      %v5294 = vunpack.c.0.s8 %v5293
      %v5295 = vlaneseq
      %v5296 = vshrl.u32 %v5295, 7
      %v5297 = vsub.s32 %v5294, %v5296
      %v5298 = vrot.slane %v5270, %v5297
      %v5299 = vcombine.high %v5277, %v5277
      %v5300 = vcombine.high %v5284, %v5284
      %v5301 = vcombine.high %v5291, %v5291
      %v5302 = vcombine.high %v5298, %v5298
      %v5303 = vcombine.high %v3801, %v3801
      %v5305 = vunpack.c.l.s4 1966171168
      %v5306 = vunpack.c.0.s8 %v5305
      %v5307 = vlaneseq
      %v5308 = vshrl.u32 %v5307, 7
      %v5309 = vsub.s32 %v5306, %v5308
      %v5310 = vrot.slane %v3801, %v5309
      %v5312 = vunpack.c.l.s4 1966171168
      %v5313 = vunpack.c.0.s8 %v5312
      %v5314 = vlaneseq
      %v5315 = vshrl.u32 %v5314, 7
      %v5316 = vsub.s32 %v5313, %v5315
      %v5317 = vrot.slane %v5303, %v5316
      %v5318 = vcombine.high %v5310, %v5310
      %v5319 = vcombine.high %v5317, %v5317
      %v5321 = vunpack.c.l.s4 1966171168
      %v5322 = vunpack.c.0.s8 %v5321
      %v5323 = vlaneseq
      %v5324 = vshrl.u32 %v5323, 7
      %v5325 = vsub.s32 %v5322, %v5324
      %v5326 = vrot.slane %v5310, %v5325
      %v5328 = vunpack.c.l.s4 1966171168
      %v5329 = vunpack.c.0.s8 %v5328
      %v5330 = vlaneseq
      %v5331 = vshrl.u32 %v5330, 7
      %v5332 = vsub.s32 %v5329, %v5331
      %v5333 = vrot.slane %v5317, %v5332
      %v5335 = vunpack.c.l.s4 1966171168
      %v5336 = vunpack.c.0.s8 %v5335
      %v5337 = vlaneseq
      %v5338 = vshrl.u32 %v5337, 7
      %v5339 = vsub.s32 %v5336, %v5338
      %v5340 = vrot.slane %v5318, %v5339
      %v5342 = vunpack.c.l.s4 1966171168
      %v5343 = vunpack.c.0.s8 %v5342
      %v5344 = vlaneseq
      %v5345 = vshrl.u32 %v5344, 7
      %v5346 = vsub.s32 %v5343, %v5345
      %v5347 = vrot.slane %v5319, %v5346
      %v5348 = vcombine.high %v5326, %v5326
      %v5349 = vcombine.high %v5333, %v5333
      %v5350 = vcombine.high %v5340, %v5340
      %v5351 = vcombine.high %v5347, %v5347
      %v5352 = vcombine.high %v3806, %v3806
      %v5354 = vunpack.c.l.s4 1966171168
      %v5355 = vunpack.c.0.s8 %v5354
      %v5356 = vlaneseq
      %v5357 = vshrl.u32 %v5356, 7
      %v5358 = vsub.s32 %v5355, %v5357
      %v5359 = vrot.slane %v3806, %v5358
      %v5361 = vunpack.c.l.s4 1966171168
      %v5362 = vunpack.c.0.s8 %v5361
      %v5363 = vlaneseq
      %v5364 = vshrl.u32 %v5363, 7
      %v5365 = vsub.s32 %v5362, %v5364
      %v5366 = vrot.slane %v5352, %v5365
      %v5367 = vcombine.high %v5359, %v5359
      %v5368 = vcombine.high %v5366, %v5366
      %v5370 = vunpack.c.l.s4 1966171168
      %v5371 = vunpack.c.0.s8 %v5370
      %v5372 = vlaneseq
      %v5373 = vshrl.u32 %v5372, 7
      %v5374 = vsub.s32 %v5371, %v5373
      %v5375 = vrot.slane %v5359, %v5374
      %v5377 = vunpack.c.l.s4 1966171168
      %v5378 = vunpack.c.0.s8 %v5377
      %v5379 = vlaneseq
      %v5380 = vshrl.u32 %v5379, 7
      %v5381 = vsub.s32 %v5378, %v5380
      %v5382 = vrot.slane %v5366, %v5381
      %v5384 = vunpack.c.l.s4 1966171168
      %v5385 = vunpack.c.0.s8 %v5384
      %v5386 = vlaneseq
      %v5387 = vshrl.u32 %v5386, 7
      %v5388 = vsub.s32 %v5385, %v5387
      %v5389 = vrot.slane %v5367, %v5388
      %v5391 = vunpack.c.l.s4 1966171168
      %v5392 = vunpack.c.0.s8 %v5391
      %v5393 = vlaneseq
      %v5394 = vshrl.u32 %v5393, 7
      %v5395 = vsub.s32 %v5392, %v5394
      %v5396 = vrot.slane %v5368, %v5395
      %v5397 = vcombine.high %v5375, %v5375
      %v5398 = vcombine.high %v5382, %v5382
      %v5399 = vcombine.high %v5389, %v5389
      %v5400 = vcombine.high %v5396, %v5396
      %v5401 = vcombine.high %v3809, %v3809
      %v5403 = vunpack.c.l.s4 1966171168
      %v5404 = vunpack.c.0.s8 %v5403
      %v5405 = vlaneseq
      %v5406 = vshrl.u32 %v5405, 7
      %v5407 = vsub.s32 %v5404, %v5406
      %v5408 = vrot.slane %v3809, %v5407
      %v5410 = vunpack.c.l.s4 1966171168
      %v5411 = vunpack.c.0.s8 %v5410
      %v5412 = vlaneseq
      %v5413 = vshrl.u32 %v5412, 7
      %v5414 = vsub.s32 %v5411, %v5413
      %v5415 = vrot.slane %v5401, %v5414
      %v5416 = vcombine.high %v5408, %v5408
      %v5417 = vcombine.high %v5415, %v5415
      %v5419 = vunpack.c.l.s4 1966171168
      %v5420 = vunpack.c.0.s8 %v5419
      %v5421 = vlaneseq
      %v5422 = vshrl.u32 %v5421, 7
      %v5423 = vsub.s32 %v5420, %v5422
      %v5424 = vrot.slane %v5408, %v5423
      %v5426 = vunpack.c.l.s4 1966171168
      %v5427 = vunpack.c.0.s8 %v5426
      %v5428 = vlaneseq
      %v5429 = vshrl.u32 %v5428, 7
      %v5430 = vsub.s32 %v5427, %v5429
      %v5431 = vrot.slane %v5415, %v5430
      %v5433 = vunpack.c.l.s4 1966171168
      %v5434 = vunpack.c.0.s8 %v5433
      %v5435 = vlaneseq
      %v5436 = vshrl.u32 %v5435, 7
      %v5437 = vsub.s32 %v5434, %v5436
      %v5438 = vrot.slane %v5416, %v5437
      %v5440 = vunpack.c.l.s4 1966171168
      %v5441 = vunpack.c.0.s8 %v5440
      %v5442 = vlaneseq
      %v5443 = vshrl.u32 %v5442, 7
      %v5444 = vsub.s32 %v5441, %v5443
      %v5445 = vrot.slane %v5417, %v5444
      %v5446 = vcombine.high %v5424, %v5424
      %v5447 = vcombine.high %v5431, %v5431
      %v5448 = vcombine.high %v5438, %v5438
      %v5449 = vcombine.high %v5445, %v5445
      %v5450 = vcombine.high %v3814, %v3814
      %v5452 = vunpack.c.l.s4 1966171168
      %v5453 = vunpack.c.0.s8 %v5452
      %v5454 = vlaneseq
      %v5455 = vshrl.u32 %v5454, 7
      %v5456 = vsub.s32 %v5453, %v5455
      %v5457 = vrot.slane %v3814, %v5456
      %v5459 = vunpack.c.l.s4 1966171168
      %v5460 = vunpack.c.0.s8 %v5459
      %v5461 = vlaneseq
      %v5462 = vshrl.u32 %v5461, 7
      %v5463 = vsub.s32 %v5460, %v5462
      %v5464 = vrot.slane %v5450, %v5463
      %v5465 = vcombine.high %v5457, %v5457
      %v5466 = vcombine.high %v5464, %v5464
      %v5468 = vunpack.c.l.s4 1966171168
      %v5469 = vunpack.c.0.s8 %v5468
      %v5470 = vlaneseq
      %v5471 = vshrl.u32 %v5470, 7
      %v5472 = vsub.s32 %v5469, %v5471
      %v5473 = vrot.slane %v5457, %v5472
      %v5475 = vunpack.c.l.s4 1966171168
      %v5476 = vunpack.c.0.s8 %v5475
      %v5477 = vlaneseq
      %v5478 = vshrl.u32 %v5477, 7
      %v5479 = vsub.s32 %v5476, %v5478
      %v5480 = vrot.slane %v5464, %v5479
      %v5482 = vunpack.c.l.s4 1966171168
      %v5483 = vunpack.c.0.s8 %v5482
      %v5484 = vlaneseq
      %v5485 = vshrl.u32 %v5484, 7
      %v5486 = vsub.s32 %v5483, %v5485
      %v5487 = vrot.slane %v5465, %v5486
      %v5489 = vunpack.c.l.s4 1966171168
      %v5490 = vunpack.c.0.s8 %v5489
      %v5491 = vlaneseq
      %v5492 = vshrl.u32 %v5491, 7
      %v5493 = vsub.s32 %v5490, %v5492
      %v5494 = vrot.slane %v5466, %v5493
      %v5495 = vcombine.high %v5473, %v5473
      %v5496 = vcombine.high %v5480, %v5480
      %v5497 = vcombine.high %v5487, %v5487
      %v5498 = vcombine.high %v5494, %v5494
      %v5499 = vcombine.high %v3817, %v3817
      %v5501 = vunpack.c.l.s4 1966171168
      %v5502 = vunpack.c.0.s8 %v5501
      %v5503 = vlaneseq
      %v5504 = vshrl.u32 %v5503, 7
      %v5505 = vsub.s32 %v5502, %v5504
      %v5506 = vrot.slane %v3817, %v5505
      %v5508 = vunpack.c.l.s4 1966171168
      %v5509 = vunpack.c.0.s8 %v5508
      %v5510 = vlaneseq
      %v5511 = vshrl.u32 %v5510, 7
      %v5512 = vsub.s32 %v5509, %v5511
      %v5513 = vrot.slane %v5499, %v5512
      %v5514 = vcombine.high %v5506, %v5506
      %v5515 = vcombine.high %v5513, %v5513
      %v5517 = vunpack.c.l.s4 1966171168
      %v5518 = vunpack.c.0.s8 %v5517
      %v5519 = vlaneseq
      %v5520 = vshrl.u32 %v5519, 7
      %v5521 = vsub.s32 %v5518, %v5520
      %v5522 = vrot.slane %v5506, %v5521
      %v5524 = vunpack.c.l.s4 1966171168
      %v5525 = vunpack.c.0.s8 %v5524
      %v5526 = vlaneseq
      %v5527 = vshrl.u32 %v5526, 7
      %v5528 = vsub.s32 %v5525, %v5527
      %v5529 = vrot.slane %v5513, %v5528
      %v5531 = vunpack.c.l.s4 1966171168
      %v5532 = vunpack.c.0.s8 %v5531
      %v5533 = vlaneseq
      %v5534 = vshrl.u32 %v5533, 7
      %v5535 = vsub.s32 %v5532, %v5534
      %v5536 = vrot.slane %v5514, %v5535
      %v5538 = vunpack.c.l.s4 1966171168
      %v5539 = vunpack.c.0.s8 %v5538
      %v5540 = vlaneseq
      %v5541 = vshrl.u32 %v5540, 7
      %v5542 = vsub.s32 %v5539, %v5541
      %v5543 = vrot.slane %v5515, %v5542
      %v5544 = vcombine.high %v5522, %v5522
      %v5545 = vcombine.high %v5529, %v5529
      %v5546 = vcombine.high %v5536, %v5536
      %v5547 = vcombine.high %v5543, %v5543
      %v5548 = vlaneseq
      %v5549 = vshrl.u32 %v5548, 7
      %v5550 = vsub.s32 0, %v5549
      %v5551 = vrot.slane %v4787, %v5550
      %v5552 = vlaneseq
      %v5553 = vshrl.u32 %v5552, 7
      %v5554 = vsub.s32 0, %v5553
      %v5555 = vrot.slane %v4801, %v5554
      %v5556 = vlaneseq
      %v5557 = vshrl.u32 %v5556, 7
      %v5558 = vsub.s32 0, %v5557
      %v5559 = vrot.slane %v4809, %v5558
      %v5560 = vlaneseq
      %v5561 = vshrl.u32 %v5560, 7
      %v5562 = vsub.s32 0, %v5561
      %v5563 = vrot.slane %v4811, %v5562
      %v5564 = vlaneseq
      %v5565 = vshrl.u32 %v5564, 7
      %v5566 = vsub.s32 0, %v5565
      %v5567 = vrot.slane %v4794, %v5566
      %v5568 = vlaneseq
      %v5569 = vshrl.u32 %v5568, 7
      %v5570 = vsub.s32 0, %v5569
      %v5571 = vrot.slane %v4808, %v5570
      %v5572 = vlaneseq
      %v5573 = vshrl.u32 %v5572, 7
      %v5574 = vsub.s32 0, %v5573
      %v5575 = vrot.slane %v4810, %v5574
      %v5576 = vlaneseq
      %v5577 = vshrl.u32 %v5576, 7
      %v5578 = vsub.s32 0, %v5577
      %v5579 = vrot.slane %v4812, %v5578
      %v5580 = vlaneseq
      %v5581 = vshrl.u32 %v5580, 7
      %v5582 = vsub.s32 0, %v5581
      %v5583 = vrot.slane %v4836, %v5582
      %v5584 = vlaneseq
      %v5585 = vshrl.u32 %v5584, 7
      %v5586 = vsub.s32 0, %v5585
      %v5587 = vrot.slane %v4850, %v5586
      %v5588 = vlaneseq
      %v5589 = vshrl.u32 %v5588, 7
      %v5590 = vsub.s32 0, %v5589
      %v5591 = vrot.slane %v4858, %v5590
      %v5592 = vlaneseq
      %v5593 = vshrl.u32 %v5592, 7
      %v5594 = vsub.s32 0, %v5593
      %v5595 = vrot.slane %v4860, %v5594
      %v5596 = vlaneseq
      %v5597 = vshrl.u32 %v5596, 7
      %v5598 = vsub.s32 0, %v5597
      %v5599 = vrot.slane %v4843, %v5598
      %v5600 = vlaneseq
      %v5601 = vshrl.u32 %v5600, 7
      %v5602 = vsub.s32 0, %v5601
      %v5603 = vrot.slane %v4857, %v5602
      %v5604 = vlaneseq
      %v5605 = vshrl.u32 %v5604, 7
      %v5606 = vsub.s32 0, %v5605
      %v5607 = vrot.slane %v4859, %v5606
      %v5608 = vlaneseq
      %v5609 = vshrl.u32 %v5608, 7
      %v5610 = vsub.s32 0, %v5609
      %v5611 = vrot.slane %v4861, %v5610
      %v5612 = vlaneseq
      %v5613 = vshrl.u32 %v5612, 7
      %v5614 = vsub.s32 0, %v5613
      %v5615 = vrot.slane %v4885, %v5614
      %v5616 = vlaneseq
      %v5617 = vshrl.u32 %v5616, 7
      %v5618 = vsub.s32 0, %v5617
      %v5619 = vrot.slane %v4899, %v5618
      %v5620 = vlaneseq
      %v5621 = vshrl.u32 %v5620, 7
      %v5622 = vsub.s32 0, %v5621
      %v5623 = vrot.slane %v4907, %v5622
      %v5624 = vlaneseq
      %v5625 = vshrl.u32 %v5624, 7
      %v5626 = vsub.s32 0, %v5625
      %v5627 = vrot.slane %v4909, %v5626
      %v5628 = vlaneseq
      %v5629 = vshrl.u32 %v5628, 7
      %v5630 = vsub.s32 0, %v5629
      %v5631 = vrot.slane %v4892, %v5630
      %v5632 = vlaneseq
      %v5633 = vshrl.u32 %v5632, 7
      %v5634 = vsub.s32 0, %v5633
      %v5635 = vrot.slane %v4906, %v5634
      %v5636 = vlaneseq
      %v5637 = vshrl.u32 %v5636, 7
      %v5638 = vsub.s32 0, %v5637
      %v5639 = vrot.slane %v4908, %v5638
      %v5640 = vlaneseq
      %v5641 = vshrl.u32 %v5640, 7
      %v5642 = vsub.s32 0, %v5641
      %v5643 = vrot.slane %v4910, %v5642
      %v5644 = vlaneseq
      %v5645 = vshrl.u32 %v5644, 7
      %v5646 = vsub.s32 0, %v5645
      %v5647 = vrot.slane %v4934, %v5646
      %v5648 = vlaneseq
      %v5649 = vshrl.u32 %v5648, 7
      %v5650 = vsub.s32 0, %v5649
      %v5651 = vrot.slane %v4948, %v5650
      %v5652 = vlaneseq
      %v5653 = vshrl.u32 %v5652, 7
      %v5654 = vsub.s32 0, %v5653
      %v5655 = vrot.slane %v4956, %v5654
      %v5656 = vlaneseq
      %v5657 = vshrl.u32 %v5656, 7
      %v5658 = vsub.s32 0, %v5657
      %v5659 = vrot.slane %v4958, %v5658
      %v5660 = vlaneseq
      %v5661 = vshrl.u32 %v5660, 7
      %v5662 = vsub.s32 0, %v5661
      %v5663 = vrot.slane %v4941, %v5662
      %v5664 = vlaneseq
      %v5665 = vshrl.u32 %v5664, 7
      %v5666 = vsub.s32 0, %v5665
      %v5667 = vrot.slane %v4955, %v5666
      %v5668 = vlaneseq
      %v5669 = vshrl.u32 %v5668, 7
      %v5670 = vsub.s32 0, %v5669
      %v5671 = vrot.slane %v4957, %v5670
      %v5672 = vlaneseq
      %v5673 = vshrl.u32 %v5672, 7
      %v5674 = vsub.s32 0, %v5673
      %v5675 = vrot.slane %v4959, %v5674
      %v5676 = vlaneseq
      %v5677 = vshrl.u32 %v5676, 7
      %v5678 = vsub.s32 0, %v5677
      %v5679 = vrot.slane %v4983, %v5678
      %v5680 = vlaneseq
      %v5681 = vshrl.u32 %v5680, 7
      %v5682 = vsub.s32 0, %v5681
      %v5683 = vrot.slane %v4997, %v5682
      %v5684 = vlaneseq
      %v5685 = vshrl.u32 %v5684, 7
      %v5686 = vsub.s32 0, %v5685
      %v5687 = vrot.slane %v5005, %v5686
      %v5688 = vlaneseq
      %v5689 = vshrl.u32 %v5688, 7
      %v5690 = vsub.s32 0, %v5689
      %v5691 = vrot.slane %v5007, %v5690
      %v5692 = vlaneseq
      %v5693 = vshrl.u32 %v5692, 7
      %v5694 = vsub.s32 0, %v5693
      %v5695 = vrot.slane %v4990, %v5694
      %v5696 = vlaneseq
      %v5697 = vshrl.u32 %v5696, 7
      %v5698 = vsub.s32 0, %v5697
      %v5699 = vrot.slane %v5004, %v5698
      %v5700 = vlaneseq
      %v5701 = vshrl.u32 %v5700, 7
      %v5702 = vsub.s32 0, %v5701
      %v5703 = vrot.slane %v5006, %v5702
      %v5704 = vlaneseq
      %v5705 = vshrl.u32 %v5704, 7
      %v5706 = vsub.s32 0, %v5705
      %v5707 = vrot.slane %v5008, %v5706
      %v5708 = vlaneseq
      %v5709 = vshrl.u32 %v5708, 7
      %v5710 = vsub.s32 0, %v5709
      %v5711 = vrot.slane %v5032, %v5710
      %v5712 = vlaneseq
      %v5713 = vshrl.u32 %v5712, 7
      %v5714 = vsub.s32 0, %v5713
      %v5715 = vrot.slane %v5046, %v5714
      %v5716 = vlaneseq
      %v5717 = vshrl.u32 %v5716, 7
      %v5718 = vsub.s32 0, %v5717
      %v5719 = vrot.slane %v5054, %v5718
      %v5720 = vlaneseq
      %v5721 = vshrl.u32 %v5720, 7
      %v5722 = vsub.s32 0, %v5721
      %v5723 = vrot.slane %v5056, %v5722
      %v5724 = vlaneseq
      %v5725 = vshrl.u32 %v5724, 7
      %v5726 = vsub.s32 0, %v5725
      %v5727 = vrot.slane %v5039, %v5726
      %v5728 = vlaneseq
      %v5729 = vshrl.u32 %v5728, 7
      %v5730 = vsub.s32 0, %v5729
      %v5731 = vrot.slane %v5053, %v5730
      %v5732 = vlaneseq
      %v5733 = vshrl.u32 %v5732, 7
      %v5734 = vsub.s32 0, %v5733
      %v5735 = vrot.slane %v5055, %v5734
      %v5736 = vlaneseq
      %v5737 = vshrl.u32 %v5736, 7
      %v5738 = vsub.s32 0, %v5737
      %v5739 = vrot.slane %v5057, %v5738
      %v5740 = vlaneseq
      %v5741 = vshrl.u32 %v5740, 7
      %v5742 = vsub.s32 0, %v5741
      %v5743 = vrot.slane %v5081, %v5742
      %v5744 = vlaneseq
      %v5745 = vshrl.u32 %v5744, 7
      %v5746 = vsub.s32 0, %v5745
      %v5747 = vrot.slane %v5095, %v5746
      %v5748 = vlaneseq
      %v5749 = vshrl.u32 %v5748, 7
      %v5750 = vsub.s32 0, %v5749
      %v5751 = vrot.slane %v5103, %v5750
      %v5752 = vlaneseq
      %v5753 = vshrl.u32 %v5752, 7
      %v5754 = vsub.s32 0, %v5753
      %v5755 = vrot.slane %v5105, %v5754
      %v5756 = vlaneseq
      %v5757 = vshrl.u32 %v5756, 7
      %v5758 = vsub.s32 0, %v5757
      %v5759 = vrot.slane %v5088, %v5758
      %v5760 = vlaneseq
      %v5761 = vshrl.u32 %v5760, 7
      %v5762 = vsub.s32 0, %v5761
      %v5763 = vrot.slane %v5102, %v5762
      %v5764 = vlaneseq
      %v5765 = vshrl.u32 %v5764, 7
      %v5766 = vsub.s32 0, %v5765
      %v5767 = vrot.slane %v5104, %v5766
      %v5768 = vlaneseq
      %v5769 = vshrl.u32 %v5768, 7
      %v5770 = vsub.s32 0, %v5769
      %v5771 = vrot.slane %v5106, %v5770
      %v5772 = vlaneseq
      %v5773 = vshrl.u32 %v5772, 7
      %v5774 = vsub.s32 0, %v5773
      %v5775 = vrot.slane %v5130, %v5774
      %v5776 = vlaneseq
      %v5777 = vshrl.u32 %v5776, 7
      %v5778 = vsub.s32 0, %v5777
      %v5779 = vrot.slane %v5144, %v5778
      %v5780 = vlaneseq
      %v5781 = vshrl.u32 %v5780, 7
      %v5782 = vsub.s32 0, %v5781
      %v5783 = vrot.slane %v5152, %v5782
      %v5784 = vlaneseq
      %v5785 = vshrl.u32 %v5784, 7
      %v5786 = vsub.s32 0, %v5785
      %v5787 = vrot.slane %v5154, %v5786
      %v5788 = vlaneseq
      %v5789 = vshrl.u32 %v5788, 7
      %v5790 = vsub.s32 0, %v5789
      %v5791 = vrot.slane %v5137, %v5790
      %v5792 = vlaneseq
      %v5793 = vshrl.u32 %v5792, 7
      %v5794 = vsub.s32 0, %v5793
      %v5795 = vrot.slane %v5151, %v5794
      %v5796 = vlaneseq
      %v5797 = vshrl.u32 %v5796, 7
      %v5798 = vsub.s32 0, %v5797
      %v5799 = vrot.slane %v5153, %v5798
      %v5800 = vlaneseq
      %v5801 = vshrl.u32 %v5800, 7
      %v5802 = vsub.s32 0, %v5801
      %v5803 = vrot.slane %v5155, %v5802
      %v5804 = vlaneseq
      %v5805 = vshrl.u32 %v5804, 7
      %v5806 = vsub.s32 0, %v5805
      %v5807 = vrot.slane %v5179, %v5806
      %v5808 = vlaneseq
      %v5809 = vshrl.u32 %v5808, 7
      %v5810 = vsub.s32 0, %v5809
      %v5811 = vrot.slane %v5193, %v5810
      %v5812 = vlaneseq
      %v5813 = vshrl.u32 %v5812, 7
      %v5814 = vsub.s32 0, %v5813
      %v5815 = vrot.slane %v5201, %v5814
      %v5816 = vlaneseq
      %v5817 = vshrl.u32 %v5816, 7
      %v5818 = vsub.s32 0, %v5817
      %v5819 = vrot.slane %v5203, %v5818
      %v5820 = vlaneseq
      %v5821 = vshrl.u32 %v5820, 7
      %v5822 = vsub.s32 0, %v5821
      %v5823 = vrot.slane %v5186, %v5822
      %v5824 = vlaneseq
      %v5825 = vshrl.u32 %v5824, 7
      %v5826 = vsub.s32 0, %v5825
      %v5827 = vrot.slane %v5200, %v5826
      %v5828 = vlaneseq
      %v5829 = vshrl.u32 %v5828, 7
      %v5830 = vsub.s32 0, %v5829
      %v5831 = vrot.slane %v5202, %v5830
      %v5832 = vlaneseq
      %v5833 = vshrl.u32 %v5832, 7
      %v5834 = vsub.s32 0, %v5833
      %v5835 = vrot.slane %v5204, %v5834
      %v5836 = vlaneseq
      %v5837 = vshrl.u32 %v5836, 7
      %v5838 = vsub.s32 0, %v5837
      %v5839 = vrot.slane %v5228, %v5838
      %v5840 = vlaneseq
      %v5841 = vshrl.u32 %v5840, 7
      %v5842 = vsub.s32 0, %v5841
      %v5843 = vrot.slane %v5242, %v5842
      %v5844 = vlaneseq
      %v5845 = vshrl.u32 %v5844, 7
      %v5846 = vsub.s32 0, %v5845
      %v5847 = vrot.slane %v5250, %v5846
      %v5848 = vlaneseq
      %v5849 = vshrl.u32 %v5848, 7
      %v5850 = vsub.s32 0, %v5849
      %v5851 = vrot.slane %v5252, %v5850
      %v5852 = vlaneseq
      %v5853 = vshrl.u32 %v5852, 7
      %v5854 = vsub.s32 0, %v5853
      %v5855 = vrot.slane %v5235, %v5854
      %v5856 = vlaneseq
      %v5857 = vshrl.u32 %v5856, 7
      %v5858 = vsub.s32 0, %v5857
      %v5859 = vrot.slane %v5249, %v5858
      %v5860 = vlaneseq
      %v5861 = vshrl.u32 %v5860, 7
      %v5862 = vsub.s32 0, %v5861
      %v5863 = vrot.slane %v5251, %v5862
      %v5864 = vlaneseq
      %v5865 = vshrl.u32 %v5864, 7
      %v5866 = vsub.s32 0, %v5865
      %v5867 = vrot.slane %v5253, %v5866
      %v5868 = vlaneseq
      %v5869 = vshrl.u32 %v5868, 7
      %v5870 = vsub.s32 0, %v5869
      %v5871 = vrot.slane %v5277, %v5870
      %v5872 = vlaneseq
      %v5873 = vshrl.u32 %v5872, 7
      %v5874 = vsub.s32 0, %v5873
      %v5875 = vrot.slane %v5291, %v5874
      %v5876 = vlaneseq
      %v5877 = vshrl.u32 %v5876, 7
      %v5878 = vsub.s32 0, %v5877
      %v5879 = vrot.slane %v5299, %v5878
      %v5880 = vlaneseq
      %v5881 = vshrl.u32 %v5880, 7
      %v5882 = vsub.s32 0, %v5881
      %v5883 = vrot.slane %v5301, %v5882
      %v5884 = vlaneseq
      %v5885 = vshrl.u32 %v5884, 7
      %v5886 = vsub.s32 0, %v5885
      %v5887 = vrot.slane %v5284, %v5886
      %v5888 = vlaneseq
      %v5889 = vshrl.u32 %v5888, 7
      %v5890 = vsub.s32 0, %v5889
      %v5891 = vrot.slane %v5298, %v5890
      %v5892 = vlaneseq
      %v5893 = vshrl.u32 %v5892, 7
      %v5894 = vsub.s32 0, %v5893
      %v5895 = vrot.slane %v5300, %v5894
      %v5896 = vlaneseq
      %v5897 = vshrl.u32 %v5896, 7
      %v5898 = vsub.s32 0, %v5897
      %v5899 = vrot.slane %v5302, %v5898
      %v5900 = vlaneseq
      %v5901 = vshrl.u32 %v5900, 7
      %v5902 = vsub.s32 0, %v5901
      %v5903 = vrot.slane %v5326, %v5902
      %v5904 = vlaneseq
      %v5905 = vshrl.u32 %v5904, 7
      %v5906 = vsub.s32 0, %v5905
      %v5907 = vrot.slane %v5340, %v5906
      %v5908 = vlaneseq
      %v5909 = vshrl.u32 %v5908, 7
      %v5910 = vsub.s32 0, %v5909
      %v5911 = vrot.slane %v5348, %v5910
      %v5912 = vlaneseq
      %v5913 = vshrl.u32 %v5912, 7
      %v5914 = vsub.s32 0, %v5913
      %v5915 = vrot.slane %v5350, %v5914
      %v5916 = vlaneseq
      %v5917 = vshrl.u32 %v5916, 7
      %v5918 = vsub.s32 0, %v5917
      %v5919 = vrot.slane %v5333, %v5918
      %v5920 = vlaneseq
      %v5921 = vshrl.u32 %v5920, 7
      %v5922 = vsub.s32 0, %v5921
      %v5923 = vrot.slane %v5347, %v5922
      %v5924 = vlaneseq
      %v5925 = vshrl.u32 %v5924, 7
      %v5926 = vsub.s32 0, %v5925
      %v5927 = vrot.slane %v5349, %v5926
      %v5928 = vlaneseq
      %v5929 = vshrl.u32 %v5928, 7
      %v5930 = vsub.s32 0, %v5929
      %v5931 = vrot.slane %v5351, %v5930
      %v5932 = vlaneseq
      %v5933 = vshrl.u32 %v5932, 7
      %v5934 = vsub.s32 0, %v5933
      %v5935 = vrot.slane %v5375, %v5934
      %v5936 = vlaneseq
      %v5937 = vshrl.u32 %v5936, 7
      %v5938 = vsub.s32 0, %v5937
      %v5939 = vrot.slane %v5389, %v5938
      %v5940 = vlaneseq
      %v5941 = vshrl.u32 %v5940, 7
      %v5942 = vsub.s32 0, %v5941
      %v5943 = vrot.slane %v5397, %v5942
      %v5944 = vlaneseq
      %v5945 = vshrl.u32 %v5944, 7
      %v5946 = vsub.s32 0, %v5945
      %v5947 = vrot.slane %v5399, %v5946
      %v5948 = vlaneseq
      %v5949 = vshrl.u32 %v5948, 7
      %v5950 = vsub.s32 0, %v5949
      %v5951 = vrot.slane %v5382, %v5950
      %v5952 = vlaneseq
      %v5953 = vshrl.u32 %v5952, 7
      %v5954 = vsub.s32 0, %v5953
      %v5955 = vrot.slane %v5396, %v5954
      %v5956 = vlaneseq
      %v5957 = vshrl.u32 %v5956, 7
      %v5958 = vsub.s32 0, %v5957
      %v5959 = vrot.slane %v5398, %v5958
      %v5960 = vlaneseq
      %v5961 = vshrl.u32 %v5960, 7
      %v5962 = vsub.s32 0, %v5961
      %v5963 = vrot.slane %v5400, %v5962
      %v5964 = vlaneseq
      %v5965 = vshrl.u32 %v5964, 7
      %v5966 = vsub.s32 0, %v5965
      %v5967 = vrot.slane %v5424, %v5966
      %v5968 = vlaneseq
      %v5969 = vshrl.u32 %v5968, 7
      %v5970 = vsub.s32 0, %v5969
      %v5971 = vrot.slane %v5438, %v5970
      %v5972 = vlaneseq
      %v5973 = vshrl.u32 %v5972, 7
      %v5974 = vsub.s32 0, %v5973
      %v5975 = vrot.slane %v5446, %v5974
      %v5976 = vlaneseq
      %v5977 = vshrl.u32 %v5976, 7
      %v5978 = vsub.s32 0, %v5977
      %v5979 = vrot.slane %v5448, %v5978
      %v5980 = vlaneseq
      %v5981 = vshrl.u32 %v5980, 7
      %v5982 = vsub.s32 0, %v5981
      %v5983 = vrot.slane %v5431, %v5982
      %v5984 = vlaneseq
      %v5985 = vshrl.u32 %v5984, 7
      %v5986 = vsub.s32 0, %v5985
      %v5987 = vrot.slane %v5445, %v5986
      %v5988 = vlaneseq
      %v5989 = vshrl.u32 %v5988, 7
      %v5990 = vsub.s32 0, %v5989
      %v5991 = vrot.slane %v5447, %v5990
      %v5992 = vlaneseq
      %v5993 = vshrl.u32 %v5992, 7
      %v5994 = vsub.s32 0, %v5993
      %v5995 = vrot.slane %v5449, %v5994
      %v5996 = vlaneseq
      %v5997 = vshrl.u32 %v5996, 7
      %v5998 = vsub.s32 0, %v5997
      %v5999 = vrot.slane %v5473, %v5998
      %v6000 = vlaneseq
      %v6001 = vshrl.u32 %v6000, 7
      %v6002 = vsub.s32 0, %v6001
      %v6003 = vrot.slane %v5487, %v6002
      %v6004 = vlaneseq
      %v6005 = vshrl.u32 %v6004, 7
      %v6006 = vsub.s32 0, %v6005
      %v6007 = vrot.slane %v5495, %v6006
      %v6008 = vlaneseq
      %v6009 = vshrl.u32 %v6008, 7
      %v6010 = vsub.s32 0, %v6009
      %v6011 = vrot.slane %v5497, %v6010
      %v6012 = vlaneseq
      %v6013 = vshrl.u32 %v6012, 7
      %v6014 = vsub.s32 0, %v6013
      %v6015 = vrot.slane %v5480, %v6014
      %v6016 = vlaneseq
      %v6017 = vshrl.u32 %v6016, 7
      %v6018 = vsub.s32 0, %v6017
      %v6019 = vrot.slane %v5494, %v6018
      %v6020 = vlaneseq
      %v6021 = vshrl.u32 %v6020, 7
      %v6022 = vsub.s32 0, %v6021
      %v6023 = vrot.slane %v5496, %v6022
      %v6024 = vlaneseq
      %v6025 = vshrl.u32 %v6024, 7
      %v6026 = vsub.s32 0, %v6025
      %v6027 = vrot.slane %v5498, %v6026
      %v6028 = vlaneseq
      %v6029 = vshrl.u32 %v6028, 7
      %v6030 = vsub.s32 0, %v6029
      %v6031 = vrot.slane %v5522, %v6030
      %v6032 = vlaneseq
      %v6033 = vshrl.u32 %v6032, 7
      %v6034 = vsub.s32 0, %v6033
      %v6035 = vrot.slane %v5536, %v6034
      %v6036 = vlaneseq
      %v6037 = vshrl.u32 %v6036, 7
      %v6038 = vsub.s32 0, %v6037
      %v6039 = vrot.slane %v5544, %v6038
      %v6040 = vlaneseq
      %v6041 = vshrl.u32 %v6040, 7
      %v6042 = vsub.s32 0, %v6041
      %v6043 = vrot.slane %v5546, %v6042
      %v6044 = vlaneseq
      %v6045 = vshrl.u32 %v6044, 7
      %v6046 = vsub.s32 0, %v6045
      %v6047 = vrot.slane %v5529, %v6046
      %v6048 = vlaneseq
      %v6049 = vshrl.u32 %v6048, 7
      %v6050 = vsub.s32 0, %v6049
      %v6051 = vrot.slane %v5543, %v6050
      %v6052 = vlaneseq
      %v6053 = vshrl.u32 %v6052, 7
      %v6054 = vsub.s32 0, %v6053
      %v6055 = vrot.slane %v5545, %v6054
      %v6056 = vlaneseq
      %v6057 = vshrl.u32 %v6056, 7
      %v6058 = vsub.s32 0, %v6057
      %v6059 = vrot.slane %v5547, %v6058
      %v6188 = vsel %vm3418, %v3859, %v5551
      %v6189 = vsel %vm3418, %v3873, %v5555
      %v6190 = vsel %vm3418, %v3881, %v5559
      %v6191 = vsel %vm3418, %v3883, %v5563
      %v6192 = vsel %vm3418, %v3866, %v5567
      %v6193 = vsel %vm3418, %v3880, %v5571
      %v6194 = vsel %vm3418, %v3882, %v5575
      %v6195 = vsel %vm3418, %v3884, %v5579
      %v6196 = vsel %vm3418, %v3908, %v5583
      %v6197 = vsel %vm3418, %v3922, %v5587
      %v6198 = vsel %vm3418, %v3930, %v5591
      %v6199 = vsel %vm3418, %v3932, %v5595
      %v6200 = vsel %vm3418, %v3915, %v5599
      %v6201 = vsel %vm3418, %v3929, %v5603
      %v6202 = vsel %vm3418, %v3931, %v5607
      %v6203 = vsel %vm3418, %v3933, %v5611
      %v6204 = vsel %vm3418, %v3957, %v5615
      %v6205 = vsel %vm3418, %v3971, %v5619
      %v6206 = vsel %vm3418, %v3979, %v5623
      %v6207 = vsel %vm3418, %v3981, %v5627
      %v6208 = vsel %vm3418, %v3964, %v5631
      %v6209 = vsel %vm3418, %v3978, %v5635
      %v6210 = vsel %vm3418, %v3980, %v5639
      %v6211 = vsel %vm3418, %v3982, %v5643
      %v6212 = vsel %vm3418, %v4006, %v5647
      %v6213 = vsel %vm3418, %v4020, %v5651
      %v6214 = vsel %vm3418, %v4028, %v5655
      %v6215 = vsel %vm3418, %v4030, %v5659
      %v6216 = vsel %vm3418, %v4013, %v5663
      %v6217 = vsel %vm3418, %v4027, %v5667
      %v6218 = vsel %vm3418, %v4029, %v5671
      %v6219 = vsel %vm3418, %v4031, %v5675
      %v6220 = vsel %vm3418, %v4055, %v5679
      %v6221 = vsel %vm3418, %v4069, %v5683
      %v6222 = vsel %vm3418, %v4077, %v5687
      %v6223 = vsel %vm3418, %v4079, %v5691
      %v6224 = vsel %vm3418, %v4062, %v5695
      %v6225 = vsel %vm3418, %v4076, %v5699
      %v6226 = vsel %vm3418, %v4078, %v5703
      %v6227 = vsel %vm3418, %v4080, %v5707
      %v6228 = vsel %vm3418, %v4104, %v5711
      %v6229 = vsel %vm3418, %v4118, %v5715
      %v6230 = vsel %vm3418, %v4126, %v5719
      %v6231 = vsel %vm3418, %v4128, %v5723
      %v6232 = vsel %vm3418, %v4111, %v5727
      %v6233 = vsel %vm3418, %v4125, %v5731
      %v6234 = vsel %vm3418, %v4127, %v5735
      %v6235 = vsel %vm3418, %v4129, %v5739
      %v6236 = vsel %vm3418, %v4153, %v5743
      %v6237 = vsel %vm3418, %v4167, %v5747
      %v6238 = vsel %vm3418, %v4175, %v5751
      %v6239 = vsel %vm3418, %v4177, %v5755
      %v6240 = vsel %vm3418, %v4160, %v5759
      %v6241 = vsel %vm3418, %v4174, %v5763
      %v6242 = vsel %vm3418, %v4176, %v5767
      %v6243 = vsel %vm3418, %v4178, %v5771
      %v6244 = vsel %vm3418, %v4202, %v5775
      %v6245 = vsel %vm3418, %v4216, %v5779
      %v6246 = vsel %vm3418, %v4224, %v5783
      %v6247 = vsel %vm3418, %v4226, %v5787
      %v6248 = vsel %vm3418, %v4209, %v5791
      %v6249 = vsel %vm3418, %v4223, %v5795
      %v6250 = vsel %vm3418, %v4225, %v5799
      %v6251 = vsel %vm3418, %v4227, %v5803
      %v6252 = vsel %vm3418, %v4251, %v5807
      %v6253 = vsel %vm3418, %v4265, %v5811
      %v6254 = vsel %vm3418, %v4273, %v5815
      %v6255 = vsel %vm3418, %v4275, %v5819
      %v6256 = vsel %vm3418, %v4258, %v5823
      %v6257 = vsel %vm3418, %v4272, %v5827
      %v6258 = vsel %vm3418, %v4274, %v5831
      %v6259 = vsel %vm3418, %v4276, %v5835
      %v6260 = vsel %vm3418, %v4300, %v5839
      %v6261 = vsel %vm3418, %v4314, %v5843
      %v6262 = vsel %vm3418, %v4322, %v5847
      %v6263 = vsel %vm3418, %v4324, %v5851
      %v6264 = vsel %vm3418, %v4307, %v5855
      %v6265 = vsel %vm3418, %v4321, %v5859
      %v6266 = vsel %vm3418, %v4323, %v5863
      %v6267 = vsel %vm3418, %v4325, %v5867
      %v6268 = vsel %vm3418, %v4349, %v5871
      %v6269 = vsel %vm3418, %v4363, %v5875
      %v6270 = vsel %vm3418, %v4371, %v5879
      %v6271 = vsel %vm3418, %v4373, %v5883
      %v6272 = vsel %vm3418, %v4356, %v5887
      %v6273 = vsel %vm3418, %v4370, %v5891
      %v6274 = vsel %vm3418, %v4372, %v5895
      %v6275 = vsel %vm3418, %v4374, %v5899
      %v6276 = vsel %vm3418, %v4398, %v5903
      %v6277 = vsel %vm3418, %v4412, %v5907
      %v6278 = vsel %vm3418, %v4420, %v5911
      %v6279 = vsel %vm3418, %v4422, %v5915
      %v6280 = vsel %vm3418, %v4405, %v5919
      %v6281 = vsel %vm3418, %v4419, %v5923
      %v6282 = vsel %vm3418, %v4421, %v5927
      %v6283 = vsel %vm3418, %v4423, %v5931
      %v6284 = vsel %vm3418, %v4447, %v5935
      %v6285 = vsel %vm3418, %v4461, %v5939
      %v6286 = vsel %vm3418, %v4469, %v5943
      %v6287 = vsel %vm3418, %v4471, %v5947
      %v6288 = vsel %vm3418, %v4454, %v5951
      %v6289 = vsel %vm3418, %v4468, %v5955
      %v6290 = vsel %vm3418, %v4470, %v5959
      %v6291 = vsel %vm3418, %v4472, %v5963
      %v6292 = vsel %vm3418, %v4496, %v5967
      %v6293 = vsel %vm3418, %v4510, %v5971
      %v6294 = vsel %vm3418, %v4518, %v5975
      %v6295 = vsel %vm3418, %v4520, %v5979
      %v6296 = vsel %vm3418, %v4503, %v5983
      %v6297 = vsel %vm3418, %v4517, %v5987
      %v6298 = vsel %vm3418, %v4519, %v5991
      %v6299 = vsel %vm3418, %v4521, %v5995
      %v6300 = vsel %vm3418, %v4545, %v5999
      %v6301 = vsel %vm3418, %v4559, %v6003
      %v6302 = vsel %vm3418, %v4567, %v6007
      %v6303 = vsel %vm3418, %v4569, %v6011
      %v6304 = vsel %vm3418, %v4552, %v6015
      %v6305 = vsel %vm3418, %v4566, %v6019
      %v6306 = vsel %vm3418, %v4568, %v6023
      %v6307 = vsel %vm3418, %v4570, %v6027
      %v6308 = vsel %vm3418, %v4594, %v6031
      %v6309 = vsel %vm3418, %v4608, %v6035
      %v6310 = vsel %vm3418, %v4616, %v6039
      %v6311 = vsel %vm3418, %v4618, %v6043
      %v6312 = vsel %vm3418, %v4601, %v6047
      %v6313 = vsel %vm3418, %v4615, %v6051
      %v6314 = vsel %vm3418, %v4617, %v6055
      %v6315 = vsel %vm3418, %v4619, %v6059
      %v6572 = vcombine.low %v3419, %v3420
      %v6573 = vcombine.low %v3421, %v3422
      %v6575 = vunpack.c.l.s4 1983009808
      %v6576 = vunpack.c.0.s8 %v6575
      %v6577 = vlaneseq
      %v6578 = vshrl.u32 %v6577, 7
      %v6579 = vsub.s32 %v6576, %v6578
      %v6580 = vrot.slane %v6572, %v6579
      %v6582 = vunpack.c.l.s4 1983009808
      %v6583 = vunpack.c.0.s8 %v6582
      %v6584 = vlaneseq
      %v6585 = vshrl.u32 %v6584, 7
      %v6586 = vsub.s32 %v6583, %v6585
      %v6587 = vrot.slane %v6573, %v6586
      %v6588 = vcombine.low %v6580, %v6587
      %v6589 = vcombine.low %v3423, %v3424
      %v6590 = vcombine.low %v3425, %v3426
      %v6592 = vunpack.c.l.s4 1983009808
      %v6593 = vunpack.c.0.s8 %v6592
      %v6594 = vlaneseq
      %v6595 = vshrl.u32 %v6594, 7
      %v6596 = vsub.s32 %v6593, %v6595
      %v6597 = vrot.slane %v6589, %v6596
      %v6599 = vunpack.c.l.s4 1983009808
      %v6600 = vunpack.c.0.s8 %v6599
      %v6601 = vlaneseq
      %v6602 = vshrl.u32 %v6601, 7
      %v6603 = vsub.s32 %v6600, %v6602
      %v6604 = vrot.slane %v6590, %v6603
      %v6605 = vcombine.low %v6597, %v6604
      %v6606 = vcombine.low %v3427, %v3428
      %v6607 = vcombine.low %v3429, %v3430
      %v6609 = vunpack.c.l.s4 1983009808
      %v6610 = vunpack.c.0.s8 %v6609
      %v6611 = vlaneseq
      %v6612 = vshrl.u32 %v6611, 7
      %v6613 = vsub.s32 %v6610, %v6612
      %v6614 = vrot.slane %v6606, %v6613
      %v6616 = vunpack.c.l.s4 1983009808
      %v6617 = vunpack.c.0.s8 %v6616
      %v6618 = vlaneseq
      %v6619 = vshrl.u32 %v6618, 7
      %v6620 = vsub.s32 %v6617, %v6619
      %v6621 = vrot.slane %v6607, %v6620
      %v6622 = vcombine.low %v6614, %v6621
      %v6623 = vcombine.low %v3431, %v3432
      %v6624 = vcombine.low %v3433, %v3434
      %v6626 = vunpack.c.l.s4 1983009808
      %v6627 = vunpack.c.0.s8 %v6626
      %v6628 = vlaneseq
      %v6629 = vshrl.u32 %v6628, 7
      %v6630 = vsub.s32 %v6627, %v6629
      %v6631 = vrot.slane %v6623, %v6630
      %v6633 = vunpack.c.l.s4 1983009808
      %v6634 = vunpack.c.0.s8 %v6633
      %v6635 = vlaneseq
      %v6636 = vshrl.u32 %v6635, 7
      %v6637 = vsub.s32 %v6634, %v6636
      %v6638 = vrot.slane %v6624, %v6637
      %v6639 = vcombine.low %v6631, %v6638
      %v6640 = vcombine.low %v6188, %v6189
      %v6641 = vcombine.low %v6190, %v6191
      %v6643 = vunpack.c.l.s4 1983009808
      %v6644 = vunpack.c.0.s8 %v6643
      %v6645 = vlaneseq
      %v6646 = vshrl.u32 %v6645, 7
      %v6647 = vsub.s32 %v6644, %v6646
      %v6648 = vrot.slane %v6640, %v6647
      %v6650 = vunpack.c.l.s4 1983009808
      %v6651 = vunpack.c.0.s8 %v6650
      %v6652 = vlaneseq
      %v6653 = vshrl.u32 %v6652, 7
      %v6654 = vsub.s32 %v6651, %v6653
      %v6655 = vrot.slane %v6641, %v6654
      %v6656 = vcombine.low %v6648, %v6655
      %v6657 = vcombine.low %v6192, %v6193
      %v6658 = vcombine.low %v6194, %v6195
      %v6660 = vunpack.c.l.s4 1983009808
      %v6661 = vunpack.c.0.s8 %v6660
      %v6662 = vlaneseq
      %v6663 = vshrl.u32 %v6662, 7
      %v6664 = vsub.s32 %v6661, %v6663
      %v6665 = vrot.slane %v6657, %v6664
      %v6667 = vunpack.c.l.s4 1983009808
      %v6668 = vunpack.c.0.s8 %v6667
      %v6669 = vlaneseq
      %v6670 = vshrl.u32 %v6669, 7
      %v6671 = vsub.s32 %v6668, %v6670
      %v6672 = vrot.slane %v6658, %v6671
      %v6673 = vcombine.low %v6665, %v6672
      %v6674 = vcombine.low %v6196, %v6197
      %v6675 = vcombine.low %v6198, %v6199
      %v6677 = vunpack.c.l.s4 1983009808
      %v6678 = vunpack.c.0.s8 %v6677
      %v6679 = vlaneseq
      %v6680 = vshrl.u32 %v6679, 7
      %v6681 = vsub.s32 %v6678, %v6680
      %v6682 = vrot.slane %v6674, %v6681
      %v6684 = vunpack.c.l.s4 1983009808
      %v6685 = vunpack.c.0.s8 %v6684
      %v6686 = vlaneseq
      %v6687 = vshrl.u32 %v6686, 7
      %v6688 = vsub.s32 %v6685, %v6687
      %v6689 = vrot.slane %v6675, %v6688
      %v6690 = vcombine.low %v6682, %v6689
      %v6691 = vcombine.low %v6200, %v6201
      %v6692 = vcombine.low %v6202, %v6203
      %v6694 = vunpack.c.l.s4 1983009808
      %v6695 = vunpack.c.0.s8 %v6694
      %v6696 = vlaneseq
      %v6697 = vshrl.u32 %v6696, 7
      %v6698 = vsub.s32 %v6695, %v6697
      %v6699 = vrot.slane %v6691, %v6698
      %v6701 = vunpack.c.l.s4 1983009808
      %v6702 = vunpack.c.0.s8 %v6701
      %v6703 = vlaneseq
      %v6704 = vshrl.u32 %v6703, 7
      %v6705 = vsub.s32 %v6702, %v6704
      %v6706 = vrot.slane %v6692, %v6705
      %v6707 = vcombine.low %v6699, %v6706
      %v6708 = vcombine.low %v3435, %v3436
      %v6709 = vcombine.low %v3437, %v3438
      %v6711 = vunpack.c.l.s4 1983009808
      %v6712 = vunpack.c.0.s8 %v6711
      %v6713 = vlaneseq
      %v6714 = vshrl.u32 %v6713, 7
      %v6715 = vsub.s32 %v6712, %v6714
      %v6716 = vrot.slane %v6708, %v6715
      %v6718 = vunpack.c.l.s4 1983009808
      %v6719 = vunpack.c.0.s8 %v6718
      %v6720 = vlaneseq
      %v6721 = vshrl.u32 %v6720, 7
      %v6722 = vsub.s32 %v6719, %v6721
      %v6723 = vrot.slane %v6709, %v6722
      %v6724 = vcombine.low %v6716, %v6723
      %v6725 = vcombine.low %v3439, %v3440
      %v6726 = vcombine.low %v3441, %v3442
      %v6728 = vunpack.c.l.s4 1983009808
      %v6729 = vunpack.c.0.s8 %v6728
      %v6730 = vlaneseq
      %v6731 = vshrl.u32 %v6730, 7
      %v6732 = vsub.s32 %v6729, %v6731
      %v6733 = vrot.slane %v6725, %v6732
      %v6735 = vunpack.c.l.s4 1983009808
      %v6736 = vunpack.c.0.s8 %v6735
      %v6737 = vlaneseq
      %v6738 = vshrl.u32 %v6737, 7
      %v6739 = vsub.s32 %v6736, %v6738
      %v6740 = vrot.slane %v6726, %v6739
      %v6741 = vcombine.low %v6733, %v6740
      %v6742 = vcombine.low %v3443, %v3444
      %v6743 = vcombine.low %v3445, %v3446
      %v6745 = vunpack.c.l.s4 1983009808
      %v6746 = vunpack.c.0.s8 %v6745
      %v6747 = vlaneseq
      %v6748 = vshrl.u32 %v6747, 7
      %v6749 = vsub.s32 %v6746, %v6748
      %v6750 = vrot.slane %v6742, %v6749
      %v6752 = vunpack.c.l.s4 1983009808
      %v6753 = vunpack.c.0.s8 %v6752
      %v6754 = vlaneseq
      %v6755 = vshrl.u32 %v6754, 7
      %v6756 = vsub.s32 %v6753, %v6755
      %v6757 = vrot.slane %v6743, %v6756
      %v6758 = vcombine.low %v6750, %v6757
      %v6759 = vcombine.low %v3447, %v3448
      %v6760 = vcombine.low %v3449, %v3450
      %v6762 = vunpack.c.l.s4 1983009808
      %v6763 = vunpack.c.0.s8 %v6762
      %v6764 = vlaneseq
      %v6765 = vshrl.u32 %v6764, 7
      %v6766 = vsub.s32 %v6763, %v6765
      %v6767 = vrot.slane %v6759, %v6766
      %v6769 = vunpack.c.l.s4 1983009808
      %v6770 = vunpack.c.0.s8 %v6769
      %v6771 = vlaneseq
      %v6772 = vshrl.u32 %v6771, 7
      %v6773 = vsub.s32 %v6770, %v6772
      %v6774 = vrot.slane %v6760, %v6773
      %v6775 = vcombine.low %v6767, %v6774
      %v6776 = vcombine.low %v6204, %v6205
      %v6777 = vcombine.low %v6206, %v6207
      %v6779 = vunpack.c.l.s4 1983009808
      %v6780 = vunpack.c.0.s8 %v6779
      %v6781 = vlaneseq
      %v6782 = vshrl.u32 %v6781, 7
      %v6783 = vsub.s32 %v6780, %v6782
      %v6784 = vrot.slane %v6776, %v6783
      %v6786 = vunpack.c.l.s4 1983009808
      %v6787 = vunpack.c.0.s8 %v6786
      %v6788 = vlaneseq
      %v6789 = vshrl.u32 %v6788, 7
      %v6790 = vsub.s32 %v6787, %v6789
      %v6791 = vrot.slane %v6777, %v6790
      %v6792 = vcombine.low %v6784, %v6791
      %v6793 = vcombine.low %v6208, %v6209
      %v6794 = vcombine.low %v6210, %v6211
      %v6796 = vunpack.c.l.s4 1983009808
      %v6797 = vunpack.c.0.s8 %v6796
      %v6798 = vlaneseq
      %v6799 = vshrl.u32 %v6798, 7
      %v6800 = vsub.s32 %v6797, %v6799
      %v6801 = vrot.slane %v6793, %v6800
      %v6803 = vunpack.c.l.s4 1983009808
      %v6804 = vunpack.c.0.s8 %v6803
      %v6805 = vlaneseq
      %v6806 = vshrl.u32 %v6805, 7
      %v6807 = vsub.s32 %v6804, %v6806
      %v6808 = vrot.slane %v6794, %v6807
      %v6809 = vcombine.low %v6801, %v6808
      %v6810 = vcombine.low %v6212, %v6213
      %v6811 = vcombine.low %v6214, %v6215
      %v6813 = vunpack.c.l.s4 1983009808
      %v6814 = vunpack.c.0.s8 %v6813
      %v6815 = vlaneseq
      %v6816 = vshrl.u32 %v6815, 7
      %v6817 = vsub.s32 %v6814, %v6816
      %v6818 = vrot.slane %v6810, %v6817
      %v6820 = vunpack.c.l.s4 1983009808
      %v6821 = vunpack.c.0.s8 %v6820
      %v6822 = vlaneseq
      %v6823 = vshrl.u32 %v6822, 7
      %v6824 = vsub.s32 %v6821, %v6823
      %v6825 = vrot.slane %v6811, %v6824
      %v6826 = vcombine.low %v6818, %v6825
      %v6827 = vcombine.low %v6216, %v6217
      %v6828 = vcombine.low %v6218, %v6219
      %v6830 = vunpack.c.l.s4 1983009808
      %v6831 = vunpack.c.0.s8 %v6830
      %v6832 = vlaneseq
      %v6833 = vshrl.u32 %v6832, 7
      %v6834 = vsub.s32 %v6831, %v6833
      %v6835 = vrot.slane %v6827, %v6834
      %v6837 = vunpack.c.l.s4 1983009808
      %v6838 = vunpack.c.0.s8 %v6837
      %v6839 = vlaneseq
      %v6840 = vshrl.u32 %v6839, 7
      %v6841 = vsub.s32 %v6838, %v6840
      %v6842 = vrot.slane %v6828, %v6841
      %v6843 = vcombine.low %v6835, %v6842
      %v6844 = vcombine.low %v3451, %v3452
      %v6845 = vcombine.low %v3453, %v3454
      %v6847 = vunpack.c.l.s4 1983009808
      %v6848 = vunpack.c.0.s8 %v6847
      %v6849 = vlaneseq
      %v6850 = vshrl.u32 %v6849, 7
      %v6851 = vsub.s32 %v6848, %v6850
      %v6852 = vrot.slane %v6844, %v6851
      %v6854 = vunpack.c.l.s4 1983009808
      %v6855 = vunpack.c.0.s8 %v6854
      %v6856 = vlaneseq
      %v6857 = vshrl.u32 %v6856, 7
      %v6858 = vsub.s32 %v6855, %v6857
      %v6859 = vrot.slane %v6845, %v6858
      %v6860 = vcombine.low %v6852, %v6859
      %v6861 = vcombine.low %v3455, %v3456
      %v6862 = vcombine.low %v3457, %v3458
      %v6864 = vunpack.c.l.s4 1983009808
      %v6865 = vunpack.c.0.s8 %v6864
      %v6866 = vlaneseq
      %v6867 = vshrl.u32 %v6866, 7
      %v6868 = vsub.s32 %v6865, %v6867
      %v6869 = vrot.slane %v6861, %v6868
      %v6871 = vunpack.c.l.s4 1983009808
      %v6872 = vunpack.c.0.s8 %v6871
      %v6873 = vlaneseq
      %v6874 = vshrl.u32 %v6873, 7
      %v6875 = vsub.s32 %v6872, %v6874
      %v6876 = vrot.slane %v6862, %v6875
      %v6877 = vcombine.low %v6869, %v6876
      %v6878 = vcombine.low %v3459, %v3460
      %v6879 = vcombine.low %v3461, %v3462
      %v6881 = vunpack.c.l.s4 1983009808
      %v6882 = vunpack.c.0.s8 %v6881
      %v6883 = vlaneseq
      %v6884 = vshrl.u32 %v6883, 7
      %v6885 = vsub.s32 %v6882, %v6884
      %v6886 = vrot.slane %v6878, %v6885
      %v6888 = vunpack.c.l.s4 1983009808
      %v6889 = vunpack.c.0.s8 %v6888
      %v6890 = vlaneseq
      %v6891 = vshrl.u32 %v6890, 7
      %v6892 = vsub.s32 %v6889, %v6891
      %v6893 = vrot.slane %v6879, %v6892
      %v6894 = vcombine.low %v6886, %v6893
      %v6895 = vcombine.low %v3463, %v3464
      %v6896 = vcombine.low %v3465, %v3466
      %v6898 = vunpack.c.l.s4 1983009808
      %v6899 = vunpack.c.0.s8 %v6898
      %v6900 = vlaneseq
      %v6901 = vshrl.u32 %v6900, 7
      %v6902 = vsub.s32 %v6899, %v6901
      %v6903 = vrot.slane %v6895, %v6902
      %v6905 = vunpack.c.l.s4 1983009808
      %v6906 = vunpack.c.0.s8 %v6905
      %v6907 = vlaneseq
      %v6908 = vshrl.u32 %v6907, 7
      %v6909 = vsub.s32 %v6906, %v6908
      %v6910 = vrot.slane %v6896, %v6909
      %v6911 = vcombine.low %v6903, %v6910
      %v6912 = vcombine.low %v6220, %v6221
      %v6913 = vcombine.low %v6222, %v6223
      %v6915 = vunpack.c.l.s4 1983009808
      %v6916 = vunpack.c.0.s8 %v6915
      %v6917 = vlaneseq
      %v6918 = vshrl.u32 %v6917, 7
      %v6919 = vsub.s32 %v6916, %v6918
      %v6920 = vrot.slane %v6912, %v6919
      %v6922 = vunpack.c.l.s4 1983009808
      %v6923 = vunpack.c.0.s8 %v6922
      %v6924 = vlaneseq
      %v6925 = vshrl.u32 %v6924, 7
      %v6926 = vsub.s32 %v6923, %v6925
      %v6927 = vrot.slane %v6913, %v6926
      %v6928 = vcombine.low %v6920, %v6927
      %v6929 = vcombine.low %v6224, %v6225
      %v6930 = vcombine.low %v6226, %v6227
      %v6932 = vunpack.c.l.s4 1983009808
      %v6933 = vunpack.c.0.s8 %v6932
      %v6934 = vlaneseq
      %v6935 = vshrl.u32 %v6934, 7
      %v6936 = vsub.s32 %v6933, %v6935
      %v6937 = vrot.slane %v6929, %v6936
      %v6939 = vunpack.c.l.s4 1983009808
      %v6940 = vunpack.c.0.s8 %v6939
      %v6941 = vlaneseq
      %v6942 = vshrl.u32 %v6941, 7
      %v6943 = vsub.s32 %v6940, %v6942
      %v6944 = vrot.slane %v6930, %v6943
      %v6945 = vcombine.low %v6937, %v6944
      %v6946 = vcombine.low %v6228, %v6229
      %v6947 = vcombine.low %v6230, %v6231
      %v6949 = vunpack.c.l.s4 1983009808
      %v6950 = vunpack.c.0.s8 %v6949
      %v6951 = vlaneseq
      %v6952 = vshrl.u32 %v6951, 7
      %v6953 = vsub.s32 %v6950, %v6952
      %v6954 = vrot.slane %v6946, %v6953
      %v6956 = vunpack.c.l.s4 1983009808
      %v6957 = vunpack.c.0.s8 %v6956
      %v6958 = vlaneseq
      %v6959 = vshrl.u32 %v6958, 7
      %v6960 = vsub.s32 %v6957, %v6959
      %v6961 = vrot.slane %v6947, %v6960
      %v6962 = vcombine.low %v6954, %v6961
      %v6963 = vcombine.low %v6232, %v6233
      %v6964 = vcombine.low %v6234, %v6235
      %v6966 = vunpack.c.l.s4 1983009808
      %v6967 = vunpack.c.0.s8 %v6966
      %v6968 = vlaneseq
      %v6969 = vshrl.u32 %v6968, 7
      %v6970 = vsub.s32 %v6967, %v6969
      %v6971 = vrot.slane %v6963, %v6970
      %v6973 = vunpack.c.l.s4 1983009808
      %v6974 = vunpack.c.0.s8 %v6973
      %v6975 = vlaneseq
      %v6976 = vshrl.u32 %v6975, 7
      %v6977 = vsub.s32 %v6974, %v6976
      %v6978 = vrot.slane %v6964, %v6977
      %v6979 = vcombine.low %v6971, %v6978
      %v6980 = vcombine.low %v3467, %v3468
      %v6981 = vcombine.low %v3469, %v3470
      %v6983 = vunpack.c.l.s4 1983009808
      %v6984 = vunpack.c.0.s8 %v6983
      %v6985 = vlaneseq
      %v6986 = vshrl.u32 %v6985, 7
      %v6987 = vsub.s32 %v6984, %v6986
      %v6988 = vrot.slane %v6980, %v6987
      %v6990 = vunpack.c.l.s4 1983009808
      %v6991 = vunpack.c.0.s8 %v6990
      %v6992 = vlaneseq
      %v6993 = vshrl.u32 %v6992, 7
      %v6994 = vsub.s32 %v6991, %v6993
      %v6995 = vrot.slane %v6981, %v6994
      %v6996 = vcombine.low %v6988, %v6995
      %v6997 = vcombine.low %v3471, %v3472
      %v6998 = vcombine.low %v3473, %v3474
      %v7000 = vunpack.c.l.s4 1983009808
      %v7001 = vunpack.c.0.s8 %v7000
      %v7002 = vlaneseq
      %v7003 = vshrl.u32 %v7002, 7
      %v7004 = vsub.s32 %v7001, %v7003
      %v7005 = vrot.slane %v6997, %v7004
      %v7007 = vunpack.c.l.s4 1983009808
      %v7008 = vunpack.c.0.s8 %v7007
      %v7009 = vlaneseq
      %v7010 = vshrl.u32 %v7009, 7
      %v7011 = vsub.s32 %v7008, %v7010
      %v7012 = vrot.slane %v6998, %v7011
      %v7013 = vcombine.low %v7005, %v7012
      %v7014 = vcombine.low %v3475, %v3476
      %v7015 = vcombine.low %v3477, %v3478
      %v7017 = vunpack.c.l.s4 1983009808
      %v7018 = vunpack.c.0.s8 %v7017
      %v7019 = vlaneseq
      %v7020 = vshrl.u32 %v7019, 7
      %v7021 = vsub.s32 %v7018, %v7020
      %v7022 = vrot.slane %v7014, %v7021
      %v7024 = vunpack.c.l.s4 1983009808
      %v7025 = vunpack.c.0.s8 %v7024
      %v7026 = vlaneseq
      %v7027 = vshrl.u32 %v7026, 7
      %v7028 = vsub.s32 %v7025, %v7027
      %v7029 = vrot.slane %v7015, %v7028
      %v7030 = vcombine.low %v7022, %v7029
      %v7031 = vcombine.low %v3479, %v3480
      %v7032 = vcombine.low %v3481, %v3482
      %v7034 = vunpack.c.l.s4 1983009808
      %v7035 = vunpack.c.0.s8 %v7034
      %v7036 = vlaneseq
      %v7037 = vshrl.u32 %v7036, 7
      %v7038 = vsub.s32 %v7035, %v7037
      %v7039 = vrot.slane %v7031, %v7038
      %v7041 = vunpack.c.l.s4 1983009808
      %v7042 = vunpack.c.0.s8 %v7041
      %v7043 = vlaneseq
      %v7044 = vshrl.u32 %v7043, 7
      %v7045 = vsub.s32 %v7042, %v7044
      %v7046 = vrot.slane %v7032, %v7045
      %v7047 = vcombine.low %v7039, %v7046
      %v7048 = vcombine.low %v6236, %v6237
      %v7049 = vcombine.low %v6238, %v6239
      %v7051 = vunpack.c.l.s4 1983009808
      %v7052 = vunpack.c.0.s8 %v7051
      %v7053 = vlaneseq
      %v7054 = vshrl.u32 %v7053, 7
      %v7055 = vsub.s32 %v7052, %v7054
      %v7056 = vrot.slane %v7048, %v7055
      %v7058 = vunpack.c.l.s4 1983009808
      %v7059 = vunpack.c.0.s8 %v7058
      %v7060 = vlaneseq
      %v7061 = vshrl.u32 %v7060, 7
      %v7062 = vsub.s32 %v7059, %v7061
      %v7063 = vrot.slane %v7049, %v7062
      %v7064 = vcombine.low %v7056, %v7063
      %v7065 = vcombine.low %v6240, %v6241
      %v7066 = vcombine.low %v6242, %v6243
      %v7068 = vunpack.c.l.s4 1983009808
      %v7069 = vunpack.c.0.s8 %v7068
      %v7070 = vlaneseq
      %v7071 = vshrl.u32 %v7070, 7
      %v7072 = vsub.s32 %v7069, %v7071
      %v7073 = vrot.slane %v7065, %v7072
      %v7075 = vunpack.c.l.s4 1983009808
      %v7076 = vunpack.c.0.s8 %v7075
      %v7077 = vlaneseq
      %v7078 = vshrl.u32 %v7077, 7
      %v7079 = vsub.s32 %v7076, %v7078
      %v7080 = vrot.slane %v7066, %v7079
      %v7081 = vcombine.low %v7073, %v7080
      %v7082 = vcombine.low %v6244, %v6245
      %v7083 = vcombine.low %v6246, %v6247
      %v7085 = vunpack.c.l.s4 1983009808
      %v7086 = vunpack.c.0.s8 %v7085
      %v7087 = vlaneseq
      %v7088 = vshrl.u32 %v7087, 7
      %v7089 = vsub.s32 %v7086, %v7088
      %v7090 = vrot.slane %v7082, %v7089
      %v7092 = vunpack.c.l.s4 1983009808
      %v7093 = vunpack.c.0.s8 %v7092
      %v7094 = vlaneseq
      %v7095 = vshrl.u32 %v7094, 7
      %v7096 = vsub.s32 %v7093, %v7095
      %v7097 = vrot.slane %v7083, %v7096
      %v7098 = vcombine.low %v7090, %v7097
      %v7099 = vcombine.low %v6248, %v6249
      %v7100 = vcombine.low %v6250, %v6251
      %v7102 = vunpack.c.l.s4 1983009808
      %v7103 = vunpack.c.0.s8 %v7102
      %v7104 = vlaneseq
      %v7105 = vshrl.u32 %v7104, 7
      %v7106 = vsub.s32 %v7103, %v7105
      %v7107 = vrot.slane %v7099, %v7106
      %v7109 = vunpack.c.l.s4 1983009808
      %v7110 = vunpack.c.0.s8 %v7109
      %v7111 = vlaneseq
      %v7112 = vshrl.u32 %v7111, 7
      %v7113 = vsub.s32 %v7110, %v7112
      %v7114 = vrot.slane %v7100, %v7113
      %v7115 = vcombine.low %v7107, %v7114
      %v7116 = vcombine.low %v3483, %v3484
      %v7117 = vcombine.low %v3485, %v3486
      %v7119 = vunpack.c.l.s4 1983009808
      %v7120 = vunpack.c.0.s8 %v7119
      %v7121 = vlaneseq
      %v7122 = vshrl.u32 %v7121, 7
      %v7123 = vsub.s32 %v7120, %v7122
      %v7124 = vrot.slane %v7116, %v7123
      %v7126 = vunpack.c.l.s4 1983009808
      %v7127 = vunpack.c.0.s8 %v7126
      %v7128 = vlaneseq
      %v7129 = vshrl.u32 %v7128, 7
      %v7130 = vsub.s32 %v7127, %v7129
      %v7131 = vrot.slane %v7117, %v7130
      %v7132 = vcombine.low %v7124, %v7131
      %v7133 = vcombine.low %v3487, %v3488
      %v7134 = vcombine.low %v3489, %v3490
      %v7136 = vunpack.c.l.s4 1983009808
      %v7137 = vunpack.c.0.s8 %v7136
      %v7138 = vlaneseq
      %v7139 = vshrl.u32 %v7138, 7
      %v7140 = vsub.s32 %v7137, %v7139
      %v7141 = vrot.slane %v7133, %v7140
      %v7143 = vunpack.c.l.s4 1983009808
      %v7144 = vunpack.c.0.s8 %v7143
      %v7145 = vlaneseq
      %v7146 = vshrl.u32 %v7145, 7
      %v7147 = vsub.s32 %v7144, %v7146
      %v7148 = vrot.slane %v7134, %v7147
      %v7149 = vcombine.low %v7141, %v7148
      %v7150 = vcombine.low %v3491, %v3492
      %v7151 = vcombine.low %v3493, %v3494
      %v7153 = vunpack.c.l.s4 1983009808
      %v7154 = vunpack.c.0.s8 %v7153
      %v7155 = vlaneseq
      %v7156 = vshrl.u32 %v7155, 7
      %v7157 = vsub.s32 %v7154, %v7156
      %v7158 = vrot.slane %v7150, %v7157
      %v7160 = vunpack.c.l.s4 1983009808
      %v7161 = vunpack.c.0.s8 %v7160
      %v7162 = vlaneseq
      %v7163 = vshrl.u32 %v7162, 7
      %v7164 = vsub.s32 %v7161, %v7163
      %v7165 = vrot.slane %v7151, %v7164
      %v7166 = vcombine.low %v7158, %v7165
      %v7167 = vcombine.low %v3495, %v3496
      %v7168 = vcombine.low %v3497, %v3498
      %v7170 = vunpack.c.l.s4 1983009808
      %v7171 = vunpack.c.0.s8 %v7170
      %v7172 = vlaneseq
      %v7173 = vshrl.u32 %v7172, 7
      %v7174 = vsub.s32 %v7171, %v7173
      %v7175 = vrot.slane %v7167, %v7174
      %v7177 = vunpack.c.l.s4 1983009808
      %v7178 = vunpack.c.0.s8 %v7177
      %v7179 = vlaneseq
      %v7180 = vshrl.u32 %v7179, 7
      %v7181 = vsub.s32 %v7178, %v7180
      %v7182 = vrot.slane %v7168, %v7181
      %v7183 = vcombine.low %v7175, %v7182
      %v7184 = vcombine.low %v6252, %v6253
      %v7185 = vcombine.low %v6254, %v6255
      %v7187 = vunpack.c.l.s4 1983009808
      %v7188 = vunpack.c.0.s8 %v7187
      %v7189 = vlaneseq
      %v7190 = vshrl.u32 %v7189, 7
      %v7191 = vsub.s32 %v7188, %v7190
      %v7192 = vrot.slane %v7184, %v7191
      %v7194 = vunpack.c.l.s4 1983009808
      %v7195 = vunpack.c.0.s8 %v7194
      %v7196 = vlaneseq
      %v7197 = vshrl.u32 %v7196, 7
      %v7198 = vsub.s32 %v7195, %v7197
      %v7199 = vrot.slane %v7185, %v7198
      %v7200 = vcombine.low %v7192, %v7199
      %v7201 = vcombine.low %v6256, %v6257
      %v7202 = vcombine.low %v6258, %v6259
      %v7204 = vunpack.c.l.s4 1983009808
      %v7205 = vunpack.c.0.s8 %v7204
      %v7206 = vlaneseq
      %v7207 = vshrl.u32 %v7206, 7
      %v7208 = vsub.s32 %v7205, %v7207
      %v7209 = vrot.slane %v7201, %v7208
      %v7211 = vunpack.c.l.s4 1983009808
      %v7212 = vunpack.c.0.s8 %v7211
      %v7213 = vlaneseq
      %v7214 = vshrl.u32 %v7213, 7
      %v7215 = vsub.s32 %v7212, %v7214
      %v7216 = vrot.slane %v7202, %v7215
      %v7217 = vcombine.low %v7209, %v7216
      %v7218 = vcombine.low %v6260, %v6261
      %v7219 = vcombine.low %v6262, %v6263
      %v7221 = vunpack.c.l.s4 1983009808
      %v7222 = vunpack.c.0.s8 %v7221
      %v7223 = vlaneseq
      %v7224 = vshrl.u32 %v7223, 7
      %v7225 = vsub.s32 %v7222, %v7224
      %v7226 = vrot.slane %v7218, %v7225
      %v7228 = vunpack.c.l.s4 1983009808
      %v7229 = vunpack.c.0.s8 %v7228
      %v7230 = vlaneseq
      %v7231 = vshrl.u32 %v7230, 7
      %v7232 = vsub.s32 %v7229, %v7231
      %v7233 = vrot.slane %v7219, %v7232
      %v7234 = vcombine.low %v7226, %v7233
      %v7235 = vcombine.low %v6264, %v6265
      %v7236 = vcombine.low %v6266, %v6267
      %v7238 = vunpack.c.l.s4 1983009808
      %v7239 = vunpack.c.0.s8 %v7238
      %v7240 = vlaneseq
      %v7241 = vshrl.u32 %v7240, 7
      %v7242 = vsub.s32 %v7239, %v7241
      %v7243 = vrot.slane %v7235, %v7242
      %v7245 = vunpack.c.l.s4 1983009808
      %v7246 = vunpack.c.0.s8 %v7245
      %v7247 = vlaneseq
      %v7248 = vshrl.u32 %v7247, 7
      %v7249 = vsub.s32 %v7246, %v7248
      %v7250 = vrot.slane %v7236, %v7249
      %v7251 = vcombine.low %v7243, %v7250
      %v7252 = vcombine.low %v3499, %v3500
      %v7253 = vcombine.low %v3501, %v3502
      %v7255 = vunpack.c.l.s4 1983009808
      %v7256 = vunpack.c.0.s8 %v7255
      %v7257 = vlaneseq
      %v7258 = vshrl.u32 %v7257, 7
      %v7259 = vsub.s32 %v7256, %v7258
      %v7260 = vrot.slane %v7252, %v7259
      %v7262 = vunpack.c.l.s4 1983009808
      %v7263 = vunpack.c.0.s8 %v7262
      %v7264 = vlaneseq
      %v7265 = vshrl.u32 %v7264, 7
      %v7266 = vsub.s32 %v7263, %v7265
      %v7267 = vrot.slane %v7253, %v7266
      %v7268 = vcombine.low %v7260, %v7267
      %v7269 = vcombine.low %v3503, %v3504
      %v7270 = vcombine.low %v3505, %v3506
      %v7272 = vunpack.c.l.s4 1983009808
      %v7273 = vunpack.c.0.s8 %v7272
      %v7274 = vlaneseq
      %v7275 = vshrl.u32 %v7274, 7
      %v7276 = vsub.s32 %v7273, %v7275
      %v7277 = vrot.slane %v7269, %v7276
      %v7279 = vunpack.c.l.s4 1983009808
      %v7280 = vunpack.c.0.s8 %v7279
      %v7281 = vlaneseq
      %v7282 = vshrl.u32 %v7281, 7
      %v7283 = vsub.s32 %v7280, %v7282
      %v7284 = vrot.slane %v7270, %v7283
      %v7285 = vcombine.low %v7277, %v7284
      %v7286 = vcombine.low %v3507, %v3508
      %v7287 = vcombine.low %v3509, %v3510
      %v7289 = vunpack.c.l.s4 1983009808
      %v7290 = vunpack.c.0.s8 %v7289
      %v7291 = vlaneseq
      %v7292 = vshrl.u32 %v7291, 7
      %v7293 = vsub.s32 %v7290, %v7292
      %v7294 = vrot.slane %v7286, %v7293
      %v7296 = vunpack.c.l.s4 1983009808
      %v7297 = vunpack.c.0.s8 %v7296
      %v7298 = vlaneseq
      %v7299 = vshrl.u32 %v7298, 7
      %v7300 = vsub.s32 %v7297, %v7299
      %v7301 = vrot.slane %v7287, %v7300
      %v7302 = vcombine.low %v7294, %v7301
      %v7303 = vcombine.low %v3511, %v3512
      %v7304 = vcombine.low %v3513, %v3514
      %v7306 = vunpack.c.l.s4 1983009808
      %v7307 = vunpack.c.0.s8 %v7306
      %v7308 = vlaneseq
      %v7309 = vshrl.u32 %v7308, 7
      %v7310 = vsub.s32 %v7307, %v7309
      %v7311 = vrot.slane %v7303, %v7310
      %v7313 = vunpack.c.l.s4 1983009808
      %v7314 = vunpack.c.0.s8 %v7313
      %v7315 = vlaneseq
      %v7316 = vshrl.u32 %v7315, 7
      %v7317 = vsub.s32 %v7314, %v7316
      %v7318 = vrot.slane %v7304, %v7317
      %v7319 = vcombine.low %v7311, %v7318
      %v7320 = vcombine.low %v6268, %v6269
      %v7321 = vcombine.low %v6270, %v6271
      %v7323 = vunpack.c.l.s4 1983009808
      %v7324 = vunpack.c.0.s8 %v7323
      %v7325 = vlaneseq
      %v7326 = vshrl.u32 %v7325, 7
      %v7327 = vsub.s32 %v7324, %v7326
      %v7328 = vrot.slane %v7320, %v7327
      %v7330 = vunpack.c.l.s4 1983009808
      %v7331 = vunpack.c.0.s8 %v7330
      %v7332 = vlaneseq
      %v7333 = vshrl.u32 %v7332, 7
      %v7334 = vsub.s32 %v7331, %v7333
      %v7335 = vrot.slane %v7321, %v7334
      %v7336 = vcombine.low %v7328, %v7335
      %v7337 = vcombine.low %v6272, %v6273
      %v7338 = vcombine.low %v6274, %v6275
      %v7340 = vunpack.c.l.s4 1983009808
      %v7341 = vunpack.c.0.s8 %v7340
      %v7342 = vlaneseq
      %v7343 = vshrl.u32 %v7342, 7
      %v7344 = vsub.s32 %v7341, %v7343
      %v7345 = vrot.slane %v7337, %v7344
      %v7347 = vunpack.c.l.s4 1983009808
      %v7348 = vunpack.c.0.s8 %v7347
      %v7349 = vlaneseq
      %v7350 = vshrl.u32 %v7349, 7
      %v7351 = vsub.s32 %v7348, %v7350
      %v7352 = vrot.slane %v7338, %v7351
      %v7353 = vcombine.low %v7345, %v7352
      %v7354 = vcombine.low %v6276, %v6277
      %v7355 = vcombine.low %v6278, %v6279
      %v7357 = vunpack.c.l.s4 1983009808
      %v7358 = vunpack.c.0.s8 %v7357
      %v7359 = vlaneseq
      %v7360 = vshrl.u32 %v7359, 7
      %v7361 = vsub.s32 %v7358, %v7360
      %v7362 = vrot.slane %v7354, %v7361
      %v7364 = vunpack.c.l.s4 1983009808
      %v7365 = vunpack.c.0.s8 %v7364
      %v7366 = vlaneseq
      %v7367 = vshrl.u32 %v7366, 7
      %v7368 = vsub.s32 %v7365, %v7367
      %v7369 = vrot.slane %v7355, %v7368
      %v7370 = vcombine.low %v7362, %v7369
      %v7371 = vcombine.low %v6280, %v6281
      %v7372 = vcombine.low %v6282, %v6283
      %v7374 = vunpack.c.l.s4 1983009808
      %v7375 = vunpack.c.0.s8 %v7374
      %v7376 = vlaneseq
      %v7377 = vshrl.u32 %v7376, 7
      %v7378 = vsub.s32 %v7375, %v7377
      %v7379 = vrot.slane %v7371, %v7378
      %v7381 = vunpack.c.l.s4 1983009808
      %v7382 = vunpack.c.0.s8 %v7381
      %v7383 = vlaneseq
      %v7384 = vshrl.u32 %v7383, 7
      %v7385 = vsub.s32 %v7382, %v7384
      %v7386 = vrot.slane %v7372, %v7385
      %v7387 = vcombine.low %v7379, %v7386
      %v7388 = vcombine.low %v3515, %v3516
      %v7389 = vcombine.low %v3517, %v3518
      %v7391 = vunpack.c.l.s4 1983009808
      %v7392 = vunpack.c.0.s8 %v7391
      %v7393 = vlaneseq
      %v7394 = vshrl.u32 %v7393, 7
      %v7395 = vsub.s32 %v7392, %v7394
      %v7396 = vrot.slane %v7388, %v7395
      %v7398 = vunpack.c.l.s4 1983009808
      %v7399 = vunpack.c.0.s8 %v7398
      %v7400 = vlaneseq
      %v7401 = vshrl.u32 %v7400, 7
      %v7402 = vsub.s32 %v7399, %v7401
      %v7403 = vrot.slane %v7389, %v7402
      %v7404 = vcombine.low %v7396, %v7403
      %v7405 = vcombine.low %v3519, %v3520
      %v7406 = vcombine.low %v3521, %v3522
      %v7408 = vunpack.c.l.s4 1983009808
      %v7409 = vunpack.c.0.s8 %v7408
      %v7410 = vlaneseq
      %v7411 = vshrl.u32 %v7410, 7
      %v7412 = vsub.s32 %v7409, %v7411
      %v7413 = vrot.slane %v7405, %v7412
      %v7415 = vunpack.c.l.s4 1983009808
      %v7416 = vunpack.c.0.s8 %v7415
      %v7417 = vlaneseq
      %v7418 = vshrl.u32 %v7417, 7
      %v7419 = vsub.s32 %v7416, %v7418
      %v7420 = vrot.slane %v7406, %v7419
      %v7421 = vcombine.low %v7413, %v7420
      %v7422 = vcombine.low %v3523, %v3524
      %v7423 = vcombine.low %v3525, %v3526
      %v7425 = vunpack.c.l.s4 1983009808
      %v7426 = vunpack.c.0.s8 %v7425
      %v7427 = vlaneseq
      %v7428 = vshrl.u32 %v7427, 7
      %v7429 = vsub.s32 %v7426, %v7428
      %v7430 = vrot.slane %v7422, %v7429
      %v7432 = vunpack.c.l.s4 1983009808
      %v7433 = vunpack.c.0.s8 %v7432
      %v7434 = vlaneseq
      %v7435 = vshrl.u32 %v7434, 7
      %v7436 = vsub.s32 %v7433, %v7435
      %v7437 = vrot.slane %v7423, %v7436
      %v7438 = vcombine.low %v7430, %v7437
      %v7439 = vcombine.low %v3527, %v3528
      %v7440 = vcombine.low %v3529, %v3530
      %v7442 = vunpack.c.l.s4 1983009808
      %v7443 = vunpack.c.0.s8 %v7442
      %v7444 = vlaneseq
      %v7445 = vshrl.u32 %v7444, 7
      %v7446 = vsub.s32 %v7443, %v7445
      %v7447 = vrot.slane %v7439, %v7446
      %v7449 = vunpack.c.l.s4 1983009808
      %v7450 = vunpack.c.0.s8 %v7449
      %v7451 = vlaneseq
      %v7452 = vshrl.u32 %v7451, 7
      %v7453 = vsub.s32 %v7450, %v7452
      %v7454 = vrot.slane %v7440, %v7453
      %v7455 = vcombine.low %v7447, %v7454
      %v7456 = vcombine.low %v6284, %v6285
      %v7457 = vcombine.low %v6286, %v6287
      %v7459 = vunpack.c.l.s4 1983009808
      %v7460 = vunpack.c.0.s8 %v7459
      %v7461 = vlaneseq
      %v7462 = vshrl.u32 %v7461, 7
      %v7463 = vsub.s32 %v7460, %v7462
      %v7464 = vrot.slane %v7456, %v7463
      %v7466 = vunpack.c.l.s4 1983009808
      %v7467 = vunpack.c.0.s8 %v7466
      %v7468 = vlaneseq
      %v7469 = vshrl.u32 %v7468, 7
      %v7470 = vsub.s32 %v7467, %v7469
      %v7471 = vrot.slane %v7457, %v7470
      %v7472 = vcombine.low %v7464, %v7471
      %v7473 = vcombine.low %v6288, %v6289
      %v7474 = vcombine.low %v6290, %v6291
      %v7476 = vunpack.c.l.s4 1983009808
      %v7477 = vunpack.c.0.s8 %v7476
      %v7478 = vlaneseq
      %v7479 = vshrl.u32 %v7478, 7
      %v7480 = vsub.s32 %v7477, %v7479
      %v7481 = vrot.slane %v7473, %v7480
      %v7483 = vunpack.c.l.s4 1983009808
      %v7484 = vunpack.c.0.s8 %v7483
      %v7485 = vlaneseq
      %v7486 = vshrl.u32 %v7485, 7
      %v7487 = vsub.s32 %v7484, %v7486
      %v7488 = vrot.slane %v7474, %v7487
      %v7489 = vcombine.low %v7481, %v7488
      %v7490 = vcombine.low %v6292, %v6293
      %v7491 = vcombine.low %v6294, %v6295
      %v7493 = vunpack.c.l.s4 1983009808
      %v7494 = vunpack.c.0.s8 %v7493
      %v7495 = vlaneseq
      %v7496 = vshrl.u32 %v7495, 7
      %v7497 = vsub.s32 %v7494, %v7496
      %v7498 = vrot.slane %v7490, %v7497
      %v7500 = vunpack.c.l.s4 1983009808
      %v7501 = vunpack.c.0.s8 %v7500
      %v7502 = vlaneseq
      %v7503 = vshrl.u32 %v7502, 7
      %v7504 = vsub.s32 %v7501, %v7503
      %v7505 = vrot.slane %v7491, %v7504
      %v7506 = vcombine.low %v7498, %v7505
      %v7507 = vcombine.low %v6296, %v6297
      %v7508 = vcombine.low %v6298, %v6299
      %v7510 = vunpack.c.l.s4 1983009808
      %v7511 = vunpack.c.0.s8 %v7510
      %v7512 = vlaneseq
      %v7513 = vshrl.u32 %v7512, 7
      %v7514 = vsub.s32 %v7511, %v7513
      %v7515 = vrot.slane %v7507, %v7514
      %v7517 = vunpack.c.l.s4 1983009808
      %v7518 = vunpack.c.0.s8 %v7517
      %v7519 = vlaneseq
      %v7520 = vshrl.u32 %v7519, 7
      %v7521 = vsub.s32 %v7518, %v7520
      %v7522 = vrot.slane %v7508, %v7521
      %v7523 = vcombine.low %v7515, %v7522
      %v7524 = vcombine.low %v3531, %v3532
      %v7525 = vcombine.low %v3533, %v3534
      %v7527 = vunpack.c.l.s4 1983009808
      %v7528 = vunpack.c.0.s8 %v7527
      %v7529 = vlaneseq
      %v7530 = vshrl.u32 %v7529, 7
      %v7531 = vsub.s32 %v7528, %v7530
      %v7532 = vrot.slane %v7524, %v7531
      %v7534 = vunpack.c.l.s4 1983009808
      %v7535 = vunpack.c.0.s8 %v7534
      %v7536 = vlaneseq
      %v7537 = vshrl.u32 %v7536, 7
      %v7538 = vsub.s32 %v7535, %v7537
      %v7539 = vrot.slane %v7525, %v7538
      %v7540 = vcombine.low %v7532, %v7539
      %v7541 = vcombine.low %v3535, %v3536
      %v7542 = vcombine.low %v3537, %v3538
      %v7544 = vunpack.c.l.s4 1983009808
      %v7545 = vunpack.c.0.s8 %v7544
      %v7546 = vlaneseq
      %v7547 = vshrl.u32 %v7546, 7
      %v7548 = vsub.s32 %v7545, %v7547
      %v7549 = vrot.slane %v7541, %v7548
      %v7551 = vunpack.c.l.s4 1983009808
      %v7552 = vunpack.c.0.s8 %v7551
      %v7553 = vlaneseq
      %v7554 = vshrl.u32 %v7553, 7
      %v7555 = vsub.s32 %v7552, %v7554
      %v7556 = vrot.slane %v7542, %v7555
      %v7557 = vcombine.low %v7549, %v7556
      %v7558 = vcombine.low %v3539, %v3540
      %v7559 = vcombine.low %v3541, %v3542
      %v7561 = vunpack.c.l.s4 1983009808
      %v7562 = vunpack.c.0.s8 %v7561
      %v7563 = vlaneseq
      %v7564 = vshrl.u32 %v7563, 7
      %v7565 = vsub.s32 %v7562, %v7564
      %v7566 = vrot.slane %v7558, %v7565
      %v7568 = vunpack.c.l.s4 1983009808
      %v7569 = vunpack.c.0.s8 %v7568
      %v7570 = vlaneseq
      %v7571 = vshrl.u32 %v7570, 7
      %v7572 = vsub.s32 %v7569, %v7571
      %v7573 = vrot.slane %v7559, %v7572
      %v7574 = vcombine.low %v7566, %v7573
      %v7575 = vcombine.low %v3543, %v3544
      %v7576 = vcombine.low %v3545, %v3546
      %v7578 = vunpack.c.l.s4 1983009808
      %v7579 = vunpack.c.0.s8 %v7578
      %v7580 = vlaneseq
      %v7581 = vshrl.u32 %v7580, 7
      %v7582 = vsub.s32 %v7579, %v7581
      %v7583 = vrot.slane %v7575, %v7582
      %v7585 = vunpack.c.l.s4 1983009808
      %v7586 = vunpack.c.0.s8 %v7585
      %v7587 = vlaneseq
      %v7588 = vshrl.u32 %v7587, 7
      %v7589 = vsub.s32 %v7586, %v7588
      %v7590 = vrot.slane %v7576, %v7589
      %v7591 = vcombine.low %v7583, %v7590
      %v7592 = vcombine.low %v6300, %v6301
      %v7593 = vcombine.low %v6302, %v6303
      %v7595 = vunpack.c.l.s4 1983009808
      %v7596 = vunpack.c.0.s8 %v7595
      %v7597 = vlaneseq
      %v7598 = vshrl.u32 %v7597, 7
      %v7599 = vsub.s32 %v7596, %v7598
      %v7600 = vrot.slane %v7592, %v7599
      %v7602 = vunpack.c.l.s4 1983009808
      %v7603 = vunpack.c.0.s8 %v7602
      %v7604 = vlaneseq
      %v7605 = vshrl.u32 %v7604, 7
      %v7606 = vsub.s32 %v7603, %v7605
      %v7607 = vrot.slane %v7593, %v7606
      %v7608 = vcombine.low %v7600, %v7607
      %v7609 = vcombine.low %v6304, %v6305
      %v7610 = vcombine.low %v6306, %v6307
      %v7612 = vunpack.c.l.s4 1983009808
      %v7613 = vunpack.c.0.s8 %v7612
      %v7614 = vlaneseq
      %v7615 = vshrl.u32 %v7614, 7
      %v7616 = vsub.s32 %v7613, %v7615
      %v7617 = vrot.slane %v7609, %v7616
      %v7619 = vunpack.c.l.s4 1983009808
      %v7620 = vunpack.c.0.s8 %v7619
      %v7621 = vlaneseq
      %v7622 = vshrl.u32 %v7621, 7
      %v7623 = vsub.s32 %v7620, %v7622
      %v7624 = vrot.slane %v7610, %v7623
      %v7625 = vcombine.low %v7617, %v7624
      %v7626 = vcombine.low %v6308, %v6309
      %v7627 = vcombine.low %v6310, %v6311
      %v7629 = vunpack.c.l.s4 1983009808
      %v7630 = vunpack.c.0.s8 %v7629
      %v7631 = vlaneseq
      %v7632 = vshrl.u32 %v7631, 7
      %v7633 = vsub.s32 %v7630, %v7632
      %v7634 = vrot.slane %v7626, %v7633
      %v7636 = vunpack.c.l.s4 1983009808
      %v7637 = vunpack.c.0.s8 %v7636
      %v7638 = vlaneseq
      %v7639 = vshrl.u32 %v7638, 7
      %v7640 = vsub.s32 %v7637, %v7639
      %v7641 = vrot.slane %v7627, %v7640
      %v7642 = vcombine.low %v7634, %v7641
      %v7643 = vcombine.low %v6312, %v6313
      %v7644 = vcombine.low %v6314, %v6315
      %v7646 = vunpack.c.l.s4 1983009808
      %v7647 = vunpack.c.0.s8 %v7646
      %v7648 = vlaneseq
      %v7649 = vshrl.u32 %v7648, 7
      %v7650 = vsub.s32 %v7647, %v7649
      %v7651 = vrot.slane %v7643, %v7650
      %v7653 = vunpack.c.l.s4 1983009808
      %v7654 = vunpack.c.0.s8 %v7653
      %v7655 = vlaneseq
      %v7656 = vshrl.u32 %v7655, 7
      %v7657 = vsub.s32 %v7654, %v7656
      %v7658 = vrot.slane %v7644, %v7657
      %v7659 = vcombine.low %v7651, %v7658
      %7724 = vxpose.xlu0.b32.start [1/16] %v6588, 128
      %7725 = vxpose.xlu0.b32.cont [2/16] %v6605, 128
      %7726 = vxpose.xlu0.b32.cont [3/16] %v6622, 128
      %7727 = vxpose.xlu0.b32.cont [4/16] %v6639, 128
      %7728 = vxpose.xlu0.b32.cont [5/16] %v6656, 128
      %7729 = vxpose.xlu0.b32.cont [6/16] %v6673, 128
      %7730 = vxpose.xlu0.b32.cont [7/16] %v6690, 128
      %7731 = vxpose.xlu0.b32.cont [8/16] %v6707, 128
      %7732 = vxpose.xlu0.b32.cont [9/16] %v6724, 128
      %7733 = vxpose.xlu0.b32.cont [10/16] %v6741, 128
      %7734 = vxpose.xlu0.b32.cont [11/16] %v6758, 128
      %7735 = vxpose.xlu0.b32.cont [12/16] %v6775, 128
      %7736 = vxpose.xlu0.b32.cont [13/16] %v6792, 128
      %7737 = vxpose.xlu0.b32.cont [14/16] %v6809, 128
      %7738 = vxpose.xlu0.b32.cont [15/16] %v6826, 128
      %7739 = vxpose.xlu0.b32.end [16/16] %v6843, 128
      %v7740 = vpop.trf.xlu0
      %v7741 = vpop.trf.xlu0
      %v7742 = vpop.trf.xlu0
      %v7743 = vpop.trf.xlu0
      %v7744 = vpop.trf.xlu0
      %v7745 = vpop.trf.xlu0
      %v7746 = vpop.trf.xlu0
      %v7747 = vpop.trf.xlu0
      %v7748 = vpop.trf.xlu0
      %v7749 = vpop.trf.xlu0
      %v7750 = vpop.trf.xlu0
      %v7751 = vpop.trf.xlu0
      %v7752 = vpop.trf.xlu0
      %v7753 = vpop.trf.xlu0
      %v7754 = vpop.trf.xlu0
      %v7755 = vpop.trf.xlu0
      %7756 = vxpose.xlu0.b32.start [1/16] %v6860, 128
      %7757 = vxpose.xlu0.b32.cont [2/16] %v6877, 128
      %7758 = vxpose.xlu0.b32.cont [3/16] %v6894, 128
      %7759 = vxpose.xlu0.b32.cont [4/16] %v6911, 128
      %7760 = vxpose.xlu0.b32.cont [5/16] %v6928, 128
      %7761 = vxpose.xlu0.b32.cont [6/16] %v6945, 128
      %7762 = vxpose.xlu0.b32.cont [7/16] %v6962, 128
      %7763 = vxpose.xlu0.b32.cont [8/16] %v6979, 128
      %7764 = vxpose.xlu0.b32.cont [9/16] %v6996, 128
      %7765 = vxpose.xlu0.b32.cont [10/16] %v7013, 128
      %7766 = vxpose.xlu0.b32.cont [11/16] %v7030, 128
      %7767 = vxpose.xlu0.b32.cont [12/16] %v7047, 128
      %7768 = vxpose.xlu0.b32.cont [13/16] %v7064, 128
      %7769 = vxpose.xlu0.b32.cont [14/16] %v7081, 128
      %7770 = vxpose.xlu0.b32.cont [15/16] %v7098, 128
      %7771 = vxpose.xlu0.b32.end [16/16] %v7115, 128
      %v7772 = vpop.trf.xlu0
      %v7773 = vpop.trf.xlu0
      %v7774 = vpop.trf.xlu0
      %v7775 = vpop.trf.xlu0
      %v7776 = vpop.trf.xlu0
      %v7777 = vpop.trf.xlu0
      %v7778 = vpop.trf.xlu0
      %v7779 = vpop.trf.xlu0
      %v7780 = vpop.trf.xlu0
      %v7781 = vpop.trf.xlu0
      %v7782 = vpop.trf.xlu0
      %v7783 = vpop.trf.xlu0
      %v7784 = vpop.trf.xlu0
      %v7785 = vpop.trf.xlu0
      %v7786 = vpop.trf.xlu0
      %v7787 = vpop.trf.xlu0
      %7788 = vxpose.xlu0.b32.start [1/16] %v7132, 128
      %7789 = vxpose.xlu0.b32.cont [2/16] %v7149, 128
      %7790 = vxpose.xlu0.b32.cont [3/16] %v7166, 128
      %7791 = vxpose.xlu0.b32.cont [4/16] %v7183, 128
      %7792 = vxpose.xlu0.b32.cont [5/16] %v7200, 128
      %7793 = vxpose.xlu0.b32.cont [6/16] %v7217, 128
      %7794 = vxpose.xlu0.b32.cont [7/16] %v7234, 128
      %7795 = vxpose.xlu0.b32.cont [8/16] %v7251, 128
      %7796 = vxpose.xlu0.b32.cont [9/16] %v7268, 128
      %7797 = vxpose.xlu0.b32.cont [10/16] %v7285, 128
      %7798 = vxpose.xlu0.b32.cont [11/16] %v7302, 128
      %7799 = vxpose.xlu0.b32.cont [12/16] %v7319, 128
      %7800 = vxpose.xlu0.b32.cont [13/16] %v7336, 128
      %7801 = vxpose.xlu0.b32.cont [14/16] %v7353, 128
      %7802 = vxpose.xlu0.b32.cont [15/16] %v7370, 128
      %7803 = vxpose.xlu0.b32.end [16/16] %v7387, 128
      %v7804 = vpop.trf.xlu0
      %v7805 = vpop.trf.xlu0
      %v7806 = vpop.trf.xlu0
      %v7807 = vpop.trf.xlu0
      %v7808 = vpop.trf.xlu0
      %v7809 = vpop.trf.xlu0
      %v7810 = vpop.trf.xlu0
      %v7811 = vpop.trf.xlu0
      %v7812 = vpop.trf.xlu0
      %v7813 = vpop.trf.xlu0
      %v7814 = vpop.trf.xlu0
      %v7815 = vpop.trf.xlu0
      %v7816 = vpop.trf.xlu0
      %v7817 = vpop.trf.xlu0
      %v7818 = vpop.trf.xlu0
      %v7819 = vpop.trf.xlu0
      %7820 = vxpose.xlu0.b32.start [1/16] %v7404, 128
      %7821 = vxpose.xlu0.b32.cont [2/16] %v7421, 128
      %7822 = vxpose.xlu0.b32.cont [3/16] %v7438, 128
      %7823 = vxpose.xlu0.b32.cont [4/16] %v7455, 128
      %7824 = vxpose.xlu0.b32.cont [5/16] %v7472, 128
      %7825 = vxpose.xlu0.b32.cont [6/16] %v7489, 128
      %7826 = vxpose.xlu0.b32.cont [7/16] %v7506, 128
      %7827 = vxpose.xlu0.b32.cont [8/16] %v7523, 128
      %7828 = vxpose.xlu0.b32.cont [9/16] %v7540, 128
      %7829 = vxpose.xlu0.b32.cont [10/16] %v7557, 128
      %7830 = vxpose.xlu0.b32.cont [11/16] %v7574, 128
      %7831 = vxpose.xlu0.b32.cont [12/16] %v7591, 128
      %7832 = vxpose.xlu0.b32.cont [13/16] %v7608, 128
      %7833 = vxpose.xlu0.b32.cont [14/16] %v7625, 128
      %7834 = vxpose.xlu0.b32.cont [15/16] %v7642, 128
      %7835 = vxpose.xlu0.b32.end [16/16] %v7659, 128
      %v7836 = vpop.trf.xlu0
      %v7837 = vpop.trf.xlu0
      %v7838 = vpop.trf.xlu0
      %v7839 = vpop.trf.xlu0
      %v7840 = vpop.trf.xlu0
      %v7841 = vpop.trf.xlu0
      %v7842 = vpop.trf.xlu0
      %v7843 = vpop.trf.xlu0
      %v7844 = vpop.trf.xlu0
      %v7845 = vpop.trf.xlu0
      %v7846 = vpop.trf.xlu0
      %v7847 = vpop.trf.xlu0
      %v7848 = vpop.trf.xlu0
      %v7849 = vpop.trf.xlu0
      %v7850 = vpop.trf.xlu0
      %v7851 = vpop.trf.xlu0
      %v7852 = vld [vmem:[%s3] sm:$0xff]
      %7854 = vset.pattern.permute.xlu0 0
      %7855 = vperm.xlu0 %7854, %v7852
      %v7856 = vpop.permute.xlu0 %7855
      %v7858 = vadd.f32 %v7740, %v7856
      %v7859 = vadd.f32 %v7772, %v7856
      %v7860 = vadd.f32 %v7804, %v7856
      %v7861 = vadd.f32 %v7836, %v7856
      %v7862 = vmax.f32 %v7858, 0.0
      %v7863 = vmax.f32 %v7859, 0.0
      %v7864 = vmax.f32 %v7860, 0.0
      %v7865 = vmax.f32 %v7861, 0.0
      %7866 = vst [vmem:[%s291] sm:$0xff] %v7862
      %7867 = vst [vmem:[%s291 + $0x8] sm:$0xff] %v7863
      %7868 = vst [vmem:[%s291 + $0x10] sm:$0xff] %v7864
      %7869 = vst [vmem:[%s291 + $0x18] sm:$0xff] %v7865
      %s7870 = smul.u32 4, %s20
      %p7871 = scmp.lt.s32.totalorder %s19, 1
      %s7872 = scalar_select %p7871, %s19, 1
      %p7873 = scmp.lt.s32.totalorder %s7870, 7
      %s7874 = scalar_select %p7873, %s7870, 7
      %s7875 = smul.addr %s7872, 8
      %s7876 = sadd.s32 %s7874, %s7875
      %s7877 = smul.addr %s7876, 8
      %s7878 = scalar_lea.vmem %s4, %s7877
      // Predicated region
      $region37: #{up_conv_forward.1} parent=35 // pred_check
        %p7879 = pneg %p149
      $region38: #{up_conv_forward.1} parent=35 // pred_check_branch
        %7881 = sbr.rel (%p7879) target = $region40
      $region39: #{up_conv_forward.1} parent=35 // pred_region
        %s7882 = smul.u32 4, %s20
      $region40: #{up_conv_forward.1} parent=35 // pred_fallthru
        _
    $region36: #{up_conv_forward.1} parent=5 // pred_fallthru
      _
    %p7883 = scmp.le.s32.totalorder 2, %s10
    // Predicated region
    $region41: #{up_conv_forward.1} parent=5 // pred_check
      %p7884 = pneg %p7883
    $region42: #{up_conv_forward.1} parent=5 // pred_check_branch
      %7886 = sbr.rel (%p7884) target = $region44
    $region43: #{up_conv_forward.1} parent=5 // pred_region
      %s7887 = ssub.s32 %s10, 2
      // Predicated region
      $region45: #{up_conv_forward.1} parent=43 // pred_check
        %p7888 = pneg %p155
      $region46: #{up_conv_forward.1} parent=43 // pred_check_branch
        %7890 = sbr.rel (%p7888) target = $region48
      $region47: #{up_conv_forward.1} parent=43 // pred_region
        %s7891 = smul.u32 4, %s22
        %p7892 = scmp.lt.s32.totalorder %s21, 1
        %s7893 = scalar_select %p7892, %s21, 1
        %p7894 = scmp.lt.s32.totalorder %s7891, 7
        %s7895 = scalar_select %p7894, %s7891, 7
        %s7896 = smul.addr %s7893, 8
        %s7897 = sadd.s32 %s7895, %s7896
        %s7898 = smul.addr %s7897, 8
        %s7899 = scalar_lea.vmem %s4, %s7898
      $region48: #{up_conv_forward.1} parent=43 // pred_fallthru
        _
    $region44: #{up_conv_forward.1} parent=5 // pred_fallthru
      _
  $region6: #{up_conv_forward.1} parent=0 // loop_footer
    %s14 = sadd.s32 1, %s10
  $region7: #{up_conv_forward.1} parent=0 // loop_footer_branch
    %9 = sbr.rel target = $region3
  $region8: #{up_conv_forward.1} parent=0 // loop_exit
    _

</llo_original>
